<compile_context>
chip_gen: v7x
topology: tpu7x:2x2x1
jax: 0.10.0
libtpu: 0.0.40
codegen_flags: <defaults>
</compile_context>

<pallas_src>
import jax
import jax.numpy as jnp
from jax.experimental import pallas as pl

# ----------------------------- model dimensions -----------------------------
B = 2            # batch of "sentences"
L = 8            # padded ('longest') sequence length (<= max_length=128)
H = 32           # synthetic BERT hidden size (real bert-base: 768)
NH = 4           # attention heads
HD = H // NH     # head dim
I = 4 * H        # FFN intermediate size
NLAYERS = 2      # synthetic BERT depth (real bert-base: 12)
VOCAB = 64       # synthetic vocab
MAX_POS = 128    # TextEncoder.max_length
SEQ_DIM = 16     # fc_seq out_features (== seq_dim of TextEncoder)
EPS = 1e-12      # BERT LayerNorm eps
WDT = jnp.bfloat16    # MXU weight / matmul-input dtype

QKV_TILE = 128   # each of Q/K/V padded to its own 128-lane tile in wqkv
OUT_TILE = 128   # fc_seq output padded to a lane-dense 128-wide block
QOFF, KOFF, VOFF = 0 * QKV_TILE, 1 * QKV_TILE, 2 * QKV_TILE


# ------------------------------ kernel helpers -------------------------------
def _layernorm(x2, g, b):
    # x2: [N, D] f32, g/b: [1, D] f32
    mu = jnp.mean(x2, axis=-1, keepdims=True)
    var = jnp.mean((x2 - mu) ** 2, axis=-1, keepdims=True)
    return (x2 - mu) * jax.lax.rsqrt(var + EPS) * g + b


# ------------------------------ fused Pallas kernel ---------------------------
def text_encoder_kernel(emb_ref, mask_ref, eg_ref, eb_ref,
                        wqkv_ref, bqkv_ref, wo_ref, bo_ref,
                        ln1g_ref, ln1b_ref, w1_ref, b1_ref, w2_ref, b2_ref,
                        ln2g_ref, ln2b_ref, fcw_ref, fcb_ref, out_ref):
    """Embedding LayerNorm + NLAYERS BertLayers + fc_seq, in one grid step."""
    # ---- embedding LayerNorm -------------------------------------------------
    x = _layernorm(emb_ref[...], eg_ref[...], eb_ref[...])            # [B*L, H] f32

    # ---- attention-mask bias, broadcast once for the whole kernel ------------
    bias = jnp.broadcast_to(mask_ref[...].reshape(B, 1, L), (B, L, L))

    # ---- static layer loop (weights are tiny; no per-layer grid step) --------
    for li in range(NLAYERS):
        xb = x.astype(WDT)

        # fused QKV projection; Q/K/V each live in their own 128-lane tile so
        # the split below is 128-aligned (no lane rotates).  Scale 1/sqrt(HD)
        # is folded into the Q weight at init.
        qkv = jnp.dot(xb, wqkv_ref[li],
                      preferred_element_type=jnp.float32) + bqkv_ref[li]  # [B*L, 384]

        # TODO(synk): heads remain a short static loop — Mosaic does not reliably
        # lower the (L, NH)-swapping 4-D transpose / multi-batch-dim dot_general
        # needed to batch all heads in one einsum at these sub-tile shapes.
        ctx_heads = []
        for h in range(NH):
            qh = qkv[:, QOFF + h * HD:QOFF + (h + 1) * HD].reshape(B, L, HD).astype(WDT)
            kh = qkv[:, KOFF + h * HD:KOFF + (h + 1) * HD].reshape(B, L, HD).astype(WDT)
            vh = qkv[:, VOFF + h * HD:VOFF + (h + 1) * HD].reshape(B, L, HD).astype(WDT)
            s = jnp.einsum('bqd,bkd->bqk', qh, kh,
                           preferred_element_type=jnp.float32) + bias    # [B, L, L]
            s = s - jnp.max(s, axis=-1, keepdims=True)
            p = jnp.exp(s)
            p = p * pl.reciprocal(jnp.sum(p, axis=-1, keepdims=True), approx=True)
            ctx = jnp.einsum('bqk,bkd->bqd', p.astype(WDT), vh,
                             preferred_element_type=jnp.float32)         # [B, L, HD]
            ctx_heads.append(ctx.reshape(B * L, HD))
        ctx = jnp.concatenate(ctx_heads, axis=-1)                        # [B*L, H]

        # single output projection (K = H)
        attn = jnp.dot(ctx.astype(WDT), wo_ref[li],
                       preferred_element_type=jnp.float32) + bo_ref[li]  # [B*L, H]
        h1 = _layernorm(x + attn, ln1g_ref[li], ln1b_ref[li])            # add & norm

        # FFN
        f = jnp.dot(h1.astype(WDT), w1_ref[li],
                    preferred_element_type=jnp.float32) + b1_ref[li]     # [B*L, I]
        # TODO(synk): HF BERT uses exact (erf) GELU; tanh approximation used for
        # guaranteed Mosaic lowering of the transcendental.
        f = jax.nn.gelu(f, approximate=True)
        f = jnp.dot(f.astype(WDT), w2_ref[li],
                    preferred_element_type=jnp.float32) + b2_ref[li]     # [B*L, H]
        x = _layernorm(h1 + f, ln2g_ref[li], ln2b_ref[li])               # add & norm

    # ---- fc_seq projection; output block is 128 lanes wide (lane-dense store)
    y = jnp.dot(x.astype(WDT), fcw_ref[...],
                preferred_element_type=jnp.float32) + fcb_ref[...]       # [B*L, 128]
    out_ref[...] = y


# ------------------------------ pallas_call wrapper ----------------------------
def fused_encoder_p(emb2, mask_bias, p):
    args = (emb2, mask_bias, p["emb_ln_g"], p["emb_ln_b"],
            p["wqkv"], p["bqkv"], p["wo"], p["bo"],
            p["ln1g"], p["ln1b"], p["w1"], p["b1"], p["w2"], p["b2"],
            p["ln2g"], p["ln2b"], p["fc_w"], p["fc_b"])
    # No grid: everything fits in VMEM whole; one kernel invocation does
    # embedding LN + all BERT layers + fc_seq.
    return pl.pallas_call(
        text_encoder_kernel,
        out_shape=jax.ShapeDtypeStruct((B * L, OUT_TILE), jnp.float32),
    )(*args)


# ------------------------------ parameter init ---------------------------------
def init_params(key):
    def nrm(k, shape):
        return 0.02 * jax.random.normal(k, shape, dtype=jnp.float32)

    keys = jax.random.split(key, 4 + NLAYERS)
    p = {}
    p["word_emb"] = nrm(keys[0], (VOCAB, H))
    p["pos_emb"] = nrm(keys[1], (MAX_POS, H))
    p["type_emb"] = nrm(keys[2], (2, H))
    p["emb_ln_g"] = jnp.ones((1, H), jnp.float32)
    p["emb_ln_b"] = jnp.zeros((1, H), jnp.float32)

    scale = 1.0 / (HD ** 0.5)
    wqkv = jnp.zeros((NLAYERS, H, 3 * QKV_TILE), jnp.float32)
    bqkv = jnp.zeros((NLAYERS, 1, 3 * QKV_TILE), jnp.float32)   # q-bias scale folded (zeros)
    wo, w1, w2 = [], [], []
    for li in range(NLAYERS):
        lk = jax.random.split(keys[4 + li], 6)
        wq = nrm(lk[0], (H, H)) * scale          # 1/sqrt(HD) folded into Q weight
        wk = nrm(lk[1], (H, H))
        wv = nrm(lk[2], (H, H))
        wqkv = wqkv.at[li, :, QOFF:QOFF + H].set(wq)
        wqkv = wqkv.at[li, :, KOFF:KOFF + H].set(wk)
        wqkv = wqkv.at[li, :, VOFF:VOFF + H].set(wv)
        wo.append(nrm(lk[3], (H, H)))
        w1.append(nrm(lk[4], (H, I)))
        w2.append(nrm(lk[5], (I, H)))

    # matmul weights stored in bf16 (MXU-native input path, half the DMA/VMEM);
    # biases / LN params stay f32 for the pointwise path.
    p["wqkv"] = wqkv.astype(WDT)                         # [NL, H, 3*128]
    p["bqkv"] = bqkv                                     # [NL, 1, 3*128]
    p["wo"]   = jnp.stack(wo).astype(WDT)                # [NL, H, H]
    p["bo"]   = jnp.zeros((NLAYERS, 1, H), jnp.float32)
    p["ln1g"] = jnp.ones((NLAYERS, 1, H), jnp.float32)
    p["ln1b"] = jnp.zeros((NLAYERS, 1, H), jnp.float32)
    p["w1"]   = jnp.stack(w1).astype(WDT)                # [NL, H, I]
    p["b1"]   = jnp.zeros((NLAYERS, 1, I), jnp.float32)
    p["w2"]   = jnp.stack(w2).astype(WDT)                # [NL, I, H]
    p["b2"]   = jnp.zeros((NLAYERS, 1, H), jnp.float32)
    p["ln2g"] = jnp.ones((NLAYERS, 1, H), jnp.float32)
    p["ln2b"] = jnp.zeros((NLAYERS, 1, H), jnp.float32)

    # fc_seq: xavier_uniform weight, zero bias (matches the module's init),
    # zero-padded to 128 output lanes for a lane-dense store.
    fcw = jax.nn.initializers.glorot_uniform()(keys[3], (H, SEQ_DIM), jnp.float32)
    p["fc_w"] = jnp.zeros((H, OUT_TILE), jnp.float32).at[:, :SEQ_DIM].set(fcw).astype(WDT)
    p["fc_b"] = jnp.zeros((1, OUT_TILE), jnp.float32)
    return p


# ------------------------------ forward -----------------------------------------
def text_encoder_forward(params, input_ids, attention_mask):
    """Mirrors TextEncoder.forward: returns (None, seq_emb)."""
    # TODO(synk): BertTokenizer / pretrained-checkpoint load are not expressible
    # in Pallas; inputs are pre-tokenized ids + attention mask.
    if input_ids.shape[0] == 0:
        return None, jnp.zeros((0, 0, SEQ_DIM), jnp.float32)

    # --- embeddings (gather glue in plain JAX; everything else in the kernel) ---
    emb = (params["word_emb"][input_ids]
           + params["pos_emb"][jnp.arange(L)][None, :, :]
           + params["type_emb"][0][None, None, :])                    # [B, L, H]
    emb2 = emb.reshape(B * L, H)

    # --- extended attention mask: (1 - mask) * -10000, shape [B, L] ---
    mask_bias = (1.0 - attention_mask.astype(jnp.float32)) * -10000.0

    # --- single fused kernel: emb LN + NLAYERS BertLayers + fc_seq ---
    out_pad = fused_encoder_p(emb2, mask_bias, params)                # [B*L, 128]
    seq_emb = out_pad[:, :SEQ_DIM].reshape(B, L, SEQ_DIM)
    return None, seq_emb


# ------------------------------ main ---------------------------------------------
if __name__ == "__main__":
    key = jax.random.PRNGKey(0)
    k_param, k_ids = jax.random.split(key)

    params = init_params(k_param)

    # deterministic "tokenized" inputs
    input_ids = jax.random.randint(k_ids, (B, L), 0, VOCAB, dtype=jnp.int32)
    attention_mask = jnp.ones((B, L), jnp.int32)
    attention_mask = attention_mask.at[1, 6:].set(0)   # second sentence is shorter (padded)

    _, seq_emb = text_encoder_forward(params, input_ids, attention_mask)
    seq_emb = jax.block_until_ready(seq_emb)

    assert seq_emb.shape == (B, L, SEQ_DIM), seq_emb.shape
    assert bool(jnp.all(jnp.isfinite(seq_emb)))
    print("KERNEL_OK")
</pallas_src>

<mosaic_0001>
module attributes {stable_mosaic.version = 11 : i64} {
  func.func @text_encoder_kernel(%arg0: memref<16x32xf32, #tpu.memory_space<vmem>>, %arg1: memref<2x8xf32, #tpu.memory_space<vmem>>, %arg2: memref<1x32xf32, #tpu.memory_space<vmem>>, %arg3: memref<1x32xf32, #tpu.memory_space<vmem>>, %arg4: memref<2x32x384xbf16, #tpu.memory_space<vmem>>, %arg5: memref<2x1x384xf32, #tpu.memory_space<vmem>>, %arg6: memref<2x32x32xbf16, #tpu.memory_space<vmem>>, %arg7: memref<2x1x32xf32, #tpu.memory_space<vmem>>, %arg8: memref<2x1x32xf32, #tpu.memory_space<vmem>>, %arg9: memref<2x1x32xf32, #tpu.memory_space<vmem>>, %arg10: memref<2x32x128xbf16, #tpu.memory_space<vmem>>, %arg11: memref<2x1x128xf32, #tpu.memory_space<vmem>>, %arg12: memref<2x128x32xbf16, #tpu.memory_space<vmem>>, %arg13: memref<2x1x32xf32, #tpu.memory_space<vmem>>, %arg14: memref<2x1x32xf32, #tpu.memory_space<vmem>>, %arg15: memref<2x1x32xf32, #tpu.memory_space<vmem>>, %arg16: memref<32x128xbf16, #tpu.memory_space<vmem>>, %arg17: memref<1x128xf32, #tpu.memory_space<vmem>>, %arg18: memref<16x128xf32, #tpu.memory_space<vmem>>) attributes {dimension_semantics = [], scalar_prefetch = 0 : i64, scratch_operands = 0 : i64, tpu.core_type = #tpu.core_type<tc>} {
    %c0 = arith.constant 0 : index
    %c0_0 = arith.constant 0 : index
    %0 = vector.load %arg0[%c0, %c0_0] : memref<16x32xf32, #tpu.memory_space<vmem>>, vector<16x32xf32>
    %c0_1 = arith.constant 0 : index
    %c0_2 = arith.constant 0 : index
    %1 = vector.load %arg2[%c0_1, %c0_2] : memref<1x32xf32, #tpu.memory_space<vmem>>, vector<1x32xf32>
    %c0_3 = arith.constant 0 : index
    %c0_4 = arith.constant 0 : index
    %2 = vector.load %arg3[%c0_3, %c0_4] : memref<1x32xf32, #tpu.memory_space<vmem>>, vector<1x32xf32>
    %cst = arith.constant dense<0.000000e+00> : vector<16xf32>
    %3 = vector.multi_reduction <add>, %0, %cst [1] : vector<16x32xf32> to vector<16xf32>
    %4 = vector.shape_cast %3 : vector<16xf32> to vector<16x1xf32>
    %cst_5 = arith.constant 3.200000e+01 : f32
    %5 = vector.broadcast %cst_5 : f32 to vector<16x1xf32>
    %6 = arith.divf %4, %5 : vector<16x1xf32>
    %7 = vector.broadcast %6 : vector<16x1xf32> to vector<16x32xf32>
    %8 = arith.subf %0, %7 : vector<16x32xf32>
    %9 = arith.mulf %8, %8 : vector<16x32xf32>
    %cst_6 = arith.constant dense<0.000000e+00> : vector<16xf32>
    %10 = vector.multi_reduction <add>, %9, %cst_6 [1] : vector<16x32xf32> to vector<16xf32>
    %11 = vector.shape_cast %10 : vector<16xf32> to vector<16x1xf32>
    %cst_7 = arith.constant 3.200000e+01 : f32
    %12 = vector.broadcast %cst_7 : f32 to vector<16x1xf32>
    %13 = arith.divf %11, %12 : vector<16x1xf32>
    %14 = vector.broadcast %6 : vector<16x1xf32> to vector<16x32xf32>
    %15 = arith.subf %0, %14 : vector<16x32xf32>
    %cst_8 = arith.constant 9.99999996E-13 : f32
    %16 = vector.broadcast %cst_8 : f32 to vector<16x1xf32>
    %17 = arith.addf %13, %16 : vector<16x1xf32>
    %18 = math.rsqrt %17 : vector<16x1xf32>
    %19 = vector.broadcast %18 : vector<16x1xf32> to vector<16x32xf32>
    %20 = arith.mulf %15, %19 : vector<16x32xf32>
    %21 = vector.broadcast %1 : vector<1x32xf32> to vector<16x32xf32>
    %22 = arith.mulf %20, %21 : vector<16x32xf32>
    %23 = vector.broadcast %2 : vector<1x32xf32> to vector<16x32xf32>
    %24 = arith.addf %22, %23 : vector<16x32xf32>
    %c0_9 = arith.constant 0 : index
    %c0_10 = arith.constant 0 : index
    %25 = vector.load %arg1[%c0_9, %c0_10] : memref<2x8xf32, #tpu.memory_space<vmem>>, vector<2x8xf32>
    %26 = vector.shape_cast %25 : vector<2x8xf32> to vector<2x1x8xf32>
    %27 = vector.shape_cast %26 : vector<2x1x8xf32> to vector<2x1x8xf32>
    %28 = vector.broadcast %27 : vector<2x1x8xf32> to vector<2x8x8xf32>
    %29 = arith.truncf %24 : vector<16x32xf32> to vector<16x32xbf16>
    %c0_11 = arith.constant 0 : index
    %c0_12 = arith.constant 0 : index
    %c0_13 = arith.constant 0 : index
    %30 = vector.load %arg4[%c0_11, %c0_12, %c0_13] : memref<2x32x384xbf16, #tpu.memory_space<vmem>>, vector<1x32x384xbf16>
    %31 = vector.shape_cast %30 : vector<1x32x384xbf16> to vector<32x384xbf16>
    %cst_14 = arith.constant dense<0.000000e+00> : vector<16x384xf32>
    %32 = tpu.matmul %29, %31, %cst_14 {dimension_numbers = #tpu.dot_dimension_numbers<[1], [0], [0], [1], [0, 0, 1, 1], [], []>} : vector<16x32xbf16>, vector<32x384xbf16>, vector<16x384xf32> -> vector<16x384xf32>
    %c0_15 = arith.constant 0 : index
    %c0_16 = arith.constant 0 : index
    %c0_17 = arith.constant 0 : index
    %33 = vector.load %arg5[%c0_15, %c0_16, %c0_17] : memref<2x1x384xf32, #tpu.memory_space<vmem>>, vector<1x1x384xf32>
    %34 = vector.shape_cast %33 : vector<1x1x384xf32> to vector<1x384xf32>
    %35 = vector.broadcast %34 : vector<1x384xf32> to vector<16x384xf32>
    %36 = arith.addf %32, %35 : vector<16x384xf32>
    %37 = vector.extract_strided_slice %36 {offsets = [0, 0], sizes = [16, 8], strides = [1, 1]} : vector<16x384xf32> to vector<16x8xf32>
    %38 = vector.shape_cast %37 : vector<16x8xf32> to vector<2x8x8xf32>
    %39 = arith.truncf %38 : vector<2x8x8xf32> to vector<2x8x8xbf16>
    %40 = vector.extract_strided_slice %36 {offsets = [0, 128], sizes = [16, 8], strides = [1, 1]} : vector<16x384xf32> to vector<16x8xf32>
    %41 = vector.shape_cast %40 : vector<16x8xf32> to vector<2x8x8xf32>
    %42 = arith.truncf %41 : vector<2x8x8xf32> to vector<2x8x8xbf16>
    %43 = vector.extract_strided_slice %36 {offsets = [0, 256], sizes = [16, 8], strides = [1, 1]} : vector<16x384xf32> to vector<16x8xf32>
    %44 = vector.shape_cast %43 : vector<16x8xf32> to vector<2x8x8xf32>
    %45 = arith.truncf %44 : vector<2x8x8xf32> to vector<2x8x8xbf16>
    "tpu.trace_start"() <{level = 10 : i32, message = "bqd,bkd->bqk"}> : () -> ()
    %cst_18 = arith.constant dense<0.000000e+00> : vector<2x8x8xf32>
    %46 = tpu.matmul %39, %42, %cst_18 {dimension_numbers = #tpu.dot_dimension_numbers<[2], [2], [1], [1], [0, 0, 0, 1, 1, 1], [0], [0]>} : vector<2x8x8xbf16>, vector<2x8x8xbf16>, vector<2x8x8xf32> -> vector<2x8x8xf32>
    "tpu.trace_stop"() : () -> ()
    %47 = arith.addf %46, %28 : vector<2x8x8xf32>
    %cst_19 = arith.constant dense<0xFF800000> : vector<2x8xf32>
    %48 = vector.multi_reduction <maximumf>, %47, %cst_19 [2] : vector<2x8x8xf32> to vector<2x8xf32>
    %49 = vector.shape_cast %48 : vector<2x8xf32> to vector<2x8x1xf32>
    %50 = vector.broadcast %49 : vector<2x8x1xf32> to vector<2x8x8xf32>
    %51 = arith.subf %47, %50 : vector<2x8x8xf32>
    %52 = math.exp %51 : vector<2x8x8xf32>
    %cst_20 = arith.constant dense<0.000000e+00> : vector<2x8xf32>
    %53 = vector.multi_reduction <add>, %52, %cst_20 [2] : vector<2x8x8xf32> to vector<2x8xf32>
    %54 = vector.shape_cast %53 : vector<2x8xf32> to vector<2x8x1xf32>
    %55 = tpu.reciprocal %54 {approx = true} : vector<2x8x1xf32> -> vector<2x8x1xf32>
    %56 = vector.broadcast %55 : vector<2x8x1xf32> to vector<2x8x8xf32>
    %57 = arith.mulf %52, %56 : vector<2x8x8xf32>
    %58 = arith.truncf %57 : vector<2x8x8xf32> to vector<2x8x8xbf16>
    "tpu.trace_start"() <{level = 10 : i32, message = "bqk,bkd->bqd"}> : () -> ()
    %cst_21 = arith.constant dense<0.000000e+00> : vector<2x8x8xf32>
    %59 = tpu.matmul %58, %45, %cst_21 {dimension_numbers = #tpu.dot_dimension_numbers<[2], [1], [1], [2], [0, 0, 0, 1, 1, 2], [0], [0]>} : vector<2x8x8xbf16>, vector<2x8x8xbf16>, vector<2x8x8xf32> -> vector<2x8x8xf32>
    "tpu.trace_stop"() : () -> ()
    %60 = vector.shape_cast %59 : vector<2x8x8xf32> to vector<16x8xf32>
    %61 = vector.extract_strided_slice %36 {offsets = [0, 8], sizes = [16, 8], strides = [1, 1]} : vector<16x384xf32> to vector<16x8xf32>
    %62 = vector.shape_cast %61 : vector<16x8xf32> to vector<2x8x8xf32>
    %63 = arith.truncf %62 : vector<2x8x8xf32> to vector<2x8x8xbf16>
    %64 = vector.extract_strided_slice %36 {offsets = [0, 136], sizes = [16, 8], strides = [1, 1]} : vector<16x384xf32> to vector<16x8xf32>
    %65 = vector.shape_cast %64 : vector<16x8xf32> to vector<2x8x8xf32>
    %66 = arith.truncf %65 : vector<2x8x8xf32> to vector<2x8x8xbf16>
    %67 = vector.extract_strided_slice %36 {offsets = [0, 264], sizes = [16, 8], strides = [1, 1]} : vector<16x384xf32> to vector<16x8xf32>
    %68 = vector.shape_cast %67 : vector<16x8xf32> to vector<2x8x8xf32>
    %69 = arith.truncf %68 : vector<2x8x8xf32> to vector<2x8x8xbf16>
    "tpu.trace_start"() <{level = 10 : i32, message = "bqd,bkd->bqk"}> : () -> ()
    %cst_22 = arith.constant dense<0.000000e+00> : vector<2x8x8xf32>
    %70 = tpu.matmul %63, %66, %cst_22 {dimension_numbers = #tpu.dot_dimension_numbers<[2], [2], [1], [1], [0, 0, 0, 1, 1, 1], [0], [0]>} : vector<2x8x8xbf16>, vector<2x8x8xbf16>, vector<2x8x8xf32> -> vector<2x8x8xf32>
    "tpu.trace_stop"() : () -> ()
    %71 = arith.addf %70, %28 : vector<2x8x8xf32>
    %cst_23 = arith.constant dense<0xFF800000> : vector<2x8xf32>
    %72 = vector.multi_reduction <maximumf>, %71, %cst_23 [2] : vector<2x8x8xf32> to vector<2x8xf32>
    %73 = vector.shape_cast %72 : vector<2x8xf32> to vector<2x8x1xf32>
    %74 = vector.broadcast %73 : vector<2x8x1xf32> to vector<2x8x8xf32>
    %75 = arith.subf %71, %74 : vector<2x8x8xf32>
    %76 = math.exp %75 : vector<2x8x8xf32>
    %cst_24 = arith.constant dense<0.000000e+00> : vector<2x8xf32>
    %77 = vector.multi_reduction <add>, %76, %cst_24 [2] : vector<2x8x8xf32> to vector<2x8xf32>
    %78 = vector.shape_cast %77 : vector<2x8xf32> to vector<2x8x1xf32>
    %79 = tpu.reciprocal %78 {approx = true} : vector<2x8x1xf32> -> vector<2x8x1xf32>
    %80 = vector.broadcast %79 : vector<2x8x1xf32> to vector<2x8x8xf32>
    %81 = arith.mulf %76, %80 : vector<2x8x8xf32>
    %82 = arith.truncf %81 : vector<2x8x8xf32> to vector<2x8x8xbf16>
    "tpu.trace_start"() <{level = 10 : i32, message = "bqk,bkd->bqd"}> : () -> ()
    %cst_25 = arith.constant dense<0.000000e+00> : vector<2x8x8xf32>
    %83 = tpu.matmul %82, %69, %cst_25 {dimension_numbers = #tpu.dot_dimension_numbers<[2], [1], [1], [2], [0, 0, 0, 1, 1, 2], [0], [0]>} : vector<2x8x8xbf16>, vector<2x8x8xbf16>, vector<2x8x8xf32> -> vector<2x8x8xf32>
    "tpu.trace_stop"() : () -> ()
    %84 = vector.shape_cast %83 : vector<2x8x8xf32> to vector<16x8xf32>
    %85 = vector.extract_strided_slice %36 {offsets = [0, 16], sizes = [16, 8], strides = [1, 1]} : vector<16x384xf32> to vector<16x8xf32>
    %86 = vector.shape_cast %85 : vector<16x8xf32> to vector<2x8x8xf32>
    %87 = arith.truncf %86 : vector<2x8x8xf32> to vector<2x8x8xbf16>
    %88 = vector.extract_strided_slice %36 {offsets = [0, 144], sizes = [16, 8], strides = [1, 1]} : vector<16x384xf32> to vector<16x8xf32>
    %89 = vector.shape_cast %88 : vector<16x8xf32> to vector<2x8x8xf32>
    %90 = arith.truncf %89 : vector<2x8x8xf32> to vector<2x8x8xbf16>
    %91 = vector.extract_strided_slice %36 {offsets = [0, 272], sizes = [16, 8], strides = [1, 1]} : vector<16x384xf32> to vector<16x8xf32>
    %92 = vector.shape_cast %91 : vector<16x8xf32> to vector<2x8x8xf32>
    %93 = arith.truncf %92 : vector<2x8x8xf32> to vector<2x8x8xbf16>
    "tpu.trace_start"() <{level = 10 : i32, message = "bqd,bkd->bqk"}> : () -> ()
    %cst_26 = arith.constant dense<0.000000e+00> : vector<2x8x8xf32>
    %94 = tpu.matmul %87, %90, %cst_26 {dimension_numbers = #tpu.dot_dimension_numbers<[2], [2], [1], [1], [0, 0, 0, 1, 1, 1], [0], [0]>} : vector<2x8x8xbf16>, vector<2x8x8xbf16>, vector<2x8x8xf32> -> vector<2x8x8xf32>
    "tpu.trace_stop"() : () -> ()
    %95 = arith.addf %94, %28 : vector<2x8x8xf32>
    %cst_27 = arith.constant dense<0xFF800000> : vector<2x8xf32>
    %96 = vector.multi_reduction <maximumf>, %95, %cst_27 [2] : vector<2x8x8xf32> to vector<2x8xf32>
    %97 = vector.shape_cast %96 : vector<2x8xf32> to vector<2x8x1xf32>
    %98 = vector.broadcast %97 : vector<2x8x1xf32> to vector<2x8x8xf32>
    %99 = arith.subf %95, %98 : vector<2x8x8xf32>
    %100 = math.exp %99 : vector<2x8x8xf32>
    %cst_28 = arith.constant dense<0.000000e+00> : vector<2x8xf32>
    %101 = vector.multi_reduction <add>, %100, %cst_28 [2] : vector<2x8x8xf32> to vector<2x8xf32>
    %102 = vector.shape_cast %101 : vector<2x8xf32> to vector<2x8x1xf32>
    %103 = tpu.reciprocal %102 {approx = true} : vector<2x8x1xf32> -> vector<2x8x1xf32>
    %104 = vector.broadcast %103 : vector<2x8x1xf32> to vector<2x8x8xf32>
    %105 = arith.mulf %100, %104 : vector<2x8x8xf32>
    %106 = arith.truncf %105 : vector<2x8x8xf32> to vector<2x8x8xbf16>
    "tpu.trace_start"() <{level = 10 : i32, message = "bqk,bkd->bqd"}> : () -> ()
    %cst_29 = arith.constant dense<0.000000e+00> : vector<2x8x8xf32>
    %107 = tpu.matmul %106, %93, %cst_29 {dimension_numbers = #tpu.dot_dimension_numbers<[2], [1], [1], [2], [0, 0, 0, 1, 1, 2], [0], [0]>} : vector<2x8x8xbf16>, vector<2x8x8xbf16>, vector<2x8x8xf32> -> vector<2x8x8xf32>
    "tpu.trace_stop"() : () -> ()
    %108 = vector.shape_cast %107 : vector<2x8x8xf32> to vector<16x8xf32>
    %109 = vector.extract_strided_slice %36 {offsets = [0, 24], sizes = [16, 8], strides = [1, 1]} : vector<16x384xf32> to vector<16x8xf32>
    %110 = vector.shape_cast %109 : vector<16x8xf32> to vector<2x8x8xf32>
    %111 = arith.truncf %110 : vector<2x8x8xf32> to vector<2x8x8xbf16>
    %112 = vector.extract_strided_slice %36 {offsets = [0, 152], sizes = [16, 8], strides = [1, 1]} : vector<16x384xf32> to vector<16x8xf32>
    %113 = vector.shape_cast %112 : vector<16x8xf32> to vector<2x8x8xf32>
    %114 = arith.truncf %113 : vector<2x8x8xf32> to vector<2x8x8xbf16>
    %115 = vector.extract_strided_slice %36 {offsets = [0, 280], sizes = [16, 8], strides = [1, 1]} : vector<16x384xf32> to vector<16x8xf32>
    %116 = vector.shape_cast %115 : vector<16x8xf32> to vector<2x8x8xf32>
    %117 = arith.truncf %116 : vector<2x8x8xf32> to vector<2x8x8xbf16>
    "tpu.trace_start"() <{level = 10 : i32, message = "bqd,bkd->bqk"}> : () -> ()
    %cst_30 = arith.constant dense<0.000000e+00> : vector<2x8x8xf32>
    %118 = tpu.matmul %111, %114, %cst_30 {dimension_numbers = #tpu.dot_dimension_numbers<[2], [2], [1], [1], [0, 0, 0, 1, 1, 1], [0], [0]>} : vector<2x8x8xbf16>, vector<2x8x8xbf16>, vector<2x8x8xf32> -> vector<2x8x8xf32>
    "tpu.trace_stop"() : () -> ()
    %119 = arith.addf %118, %28 : vector<2x8x8xf32>
    %cst_31 = arith.constant dense<0xFF800000> : vector<2x8xf32>
    %120 = vector.multi_reduction <maximumf>, %119, %cst_31 [2] : vector<2x8x8xf32> to vector<2x8xf32>
    %121 = vector.shape_cast %120 : vector<2x8xf32> to vector<2x8x1xf32>
    %122 = vector.broadcast %121 : vector<2x8x1xf32> to vector<2x8x8xf32>
    %123 = arith.subf %119, %122 : vector<2x8x8xf32>
    %124 = math.exp %123 : vector<2x8x8xf32>
    %cst_32 = arith.constant dense<0.000000e+00> : vector<2x8xf32>
    %125 = vector.multi_reduction <add>, %124, %cst_32 [2] : vector<2x8x8xf32> to vector<2x8xf32>
    %126 = vector.shape_cast %125 : vector<2x8xf32> to vector<2x8x1xf32>
    %127 = tpu.reciprocal %126 {approx = true} : vector<2x8x1xf32> -> vector<2x8x1xf32>
    %128 = vector.broadcast %127 : vector<2x8x1xf32> to vector<2x8x8xf32>
    %129 = arith.mulf %124, %128 : vector<2x8x8xf32>
    %130 = arith.truncf %129 : vector<2x8x8xf32> to vector<2x8x8xbf16>
    "tpu.trace_start"() <{level = 10 : i32, message = "bqk,bkd->bqd"}> : () -> ()
    %cst_33 = arith.constant dense<0.000000e+00> : vector<2x8x8xf32>
    %131 = tpu.matmul %130, %117, %cst_33 {dimension_numbers = #tpu.dot_dimension_numbers<[2], [1], [1], [2], [0, 0, 0, 1, 1, 2], [0], [0]>} : vector<2x8x8xbf16>, vector<2x8x8xbf16>, vector<2x8x8xf32> -> vector<2x8x8xf32>
    "tpu.trace_stop"() : () -> ()
    %132 = vector.shape_cast %131 : vector<2x8x8xf32> to vector<16x8xf32>
    %133 = tpu.concatenate %60, %84, %108, %132 in 1 : vector<16x8xf32>, vector<16x8xf32>, vector<16x8xf32>, vector<16x8xf32> -> vector<16x32xf32>
    %134 = arith.truncf %133 : vector<16x32xf32> to vector<16x32xbf16>
    %c0_34 = arith.constant 0 : index
    %c0_35 = arith.constant 0 : index
    %c0_36 = arith.constant 0 : index
    %135 = vector.load %arg6[%c0_34, %c0_35, %c0_36] : memref<2x32x32xbf16, #tpu.memory_space<vmem>>, vector<1x32x32xbf16>
    %136 = vector.shape_cast %135 : vector<1x32x32xbf16> to vector<32x32xbf16>
    %cst_37 = arith.constant dense<0.000000e+00> : vector<16x32xf32>
    %137 = tpu.matmul %134, %136, %cst_37 {dimension_numbers = #tpu.dot_dimension_numbers<[1], [0], [0], [1], [0, 0, 1, 1], [], []>} : vector<16x32xbf16>, vector<32x32xbf16>, vector<16x32xf32> -> vector<16x32xf32>
    %c0_38 = arith.constant 0 : index
    %c0_39 = arith.constant 0 : index
    %c0_40 = arith.constant 0 : index
    %138 = vector.load %arg7[%c0_38, %c0_39, %c0_40] : memref<2x1x32xf32, #tpu.memory_space<vmem>>, vector<1x1x32xf32>
    %139 = vector.shape_cast %138 : vector<1x1x32xf32> to vector<1x32xf32>
    %140 = vector.broadcast %139 : vector<1x32xf32> to vector<16x32xf32>
    %141 = arith.addf %137, %140 : vector<16x32xf32>
    %142 = arith.addf %24, %141 : vector<16x32xf32>
    %c0_41 = arith.constant 0 : index
    %c0_42 = arith.constant 0 : index
    %c0_43 = arith.constant 0 : index
    %143 = vector.load %arg8[%c0_41, %c0_42, %c0_43] : memref<2x1x32xf32, #tpu.memory_space<vmem>>, vector<1x1x32xf32>
    %144 = vector.shape_cast %143 : vector<1x1x32xf32> to vector<1x32xf32>
    %c0_44 = arith.constant 0 : index
    %c0_45 = arith.constant 0 : index
    %c0_46 = arith.constant 0 : index
    %145 = vector.load %arg9[%c0_44, %c0_45, %c0_46] : memref<2x1x32xf32, #tpu.memory_space<vmem>>, vector<1x1x32xf32>
    %146 = vector.shape_cast %145 : vector<1x1x32xf32> to vector<1x32xf32>
    %cst_47 = arith.constant dense<0.000000e+00> : vector<16xf32>
    %147 = vector.multi_reduction <add>, %142, %cst_47 [1] : vector<16x32xf32> to vector<16xf32>
    %148 = vector.shape_cast %147 : vector<16xf32> to vector<16x1xf32>
    %cst_48 = arith.constant 3.200000e+01 : f32
    %149 = vector.broadcast %cst_48 : f32 to vector<16x1xf32>
    %150 = arith.divf %148, %149 : vector<16x1xf32>
    %151 = vector.broadcast %150 : vector<16x1xf32> to vector<16x32xf32>
    %152 = arith.subf %142, %151 : vector<16x32xf32>
    %153 = arith.mulf %152, %152 : vector<16x32xf32>
    %cst_49 = arith.constant dense<0.000000e+00> : vector<16xf32>
    %154 = vector.multi_reduction <add>, %153, %cst_49 [1] : vector<16x32xf32> to vector<16xf32>
    %155 = vector.shape_cast %154 : vector<16xf32> to vector<16x1xf32>
    %cst_50 = arith.constant 3.200000e+01 : f32
    %156 = vector.broadcast %cst_50 : f32 to vector<16x1xf32>
    %157 = arith.divf %155, %156 : vector<16x1xf32>
    %158 = vector.broadcast %150 : vector<16x1xf32> to vector<16x32xf32>
    %159 = arith.subf %142, %158 : vector<16x32xf32>
    %cst_51 = arith.constant 9.99999996E-13 : f32
    %160 = vector.broadcast %cst_51 : f32 to vector<16x1xf32>
    %161 = arith.addf %157, %160 : vector<16x1xf32>
    %162 = math.rsqrt %161 : vector<16x1xf32>
    %163 = vector.broadcast %162 : vector<16x1xf32> to vector<16x32xf32>
    %164 = arith.mulf %159, %163 : vector<16x32xf32>
    %165 = vector.broadcast %144 : vector<1x32xf32> to vector<16x32xf32>
    %166 = arith.mulf %164, %165 : vector<16x32xf32>
    %167 = vector.broadcast %146 : vector<1x32xf32> to vector<16x32xf32>
    %168 = arith.addf %166, %167 : vector<16x32xf32>
    %169 = arith.truncf %168 : vector<16x32xf32> to vector<16x32xbf16>
    %c0_52 = arith.constant 0 : index
    %c0_53 = arith.constant 0 : index
    %c0_54 = arith.constant 0 : index
    %170 = vector.load %arg10[%c0_52, %c0_53, %c0_54] : memref<2x32x128xbf16, #tpu.memory_space<vmem>>, vector<1x32x128xbf16>
    %171 = vector.shape_cast %170 : vector<1x32x128xbf16> to vector<32x128xbf16>
    %cst_55 = arith.constant dense<0.000000e+00> : vector<16x128xf32>
    %172 = tpu.matmul %169, %171, %cst_55 {dimension_numbers = #tpu.dot_dimension_numbers<[1], [0], [0], [1], [0, 0, 1, 1], [], []>} : vector<16x32xbf16>, vector<32x128xbf16>, vector<16x128xf32> -> vector<16x128xf32>
    %c0_56 = arith.constant 0 : index
    %c0_57 = arith.constant 0 : index
    %c0_58 = arith.constant 0 : index
    %173 = vector.load %arg11[%c0_56, %c0_57, %c0_58] : memref<2x1x128xf32, #tpu.memory_space<vmem>>, vector<1x1x128xf32>
    %174 = vector.shape_cast %173 : vector<1x1x128xf32> to vector<1x128xf32>
    %175 = vector.broadcast %174 : vector<1x128xf32> to vector<16x128xf32>
    %176 = arith.addf %172, %175 : vector<16x128xf32>
    %177 = arith.mulf %176, %176 : vector<16x128xf32>
    %178 = arith.mulf %176, %177 : vector<16x128xf32>
    %cst_59 = arith.constant 4.471500e-02 : f32
    %179 = vector.broadcast %cst_59 : f32 to vector<16x128xf32>
    %180 = arith.mulf %179, %178 : vector<16x128xf32>
    %181 = arith.addf %176, %180 : vector<16x128xf32>
    %cst_60 = arith.constant 0.797884583 : f32
    %182 = vector.broadcast %cst_60 : f32 to vector<16x128xf32>
    %183 = arith.mulf %182, %181 : vector<16x128xf32>
    %184 = math.tanh %183 : vector<16x128xf32>
    %cst_61 = arith.constant 1.000000e+00 : f32
    %185 = vector.broadcast %cst_61 : f32 to vector<16x128xf32>
    %186 = arith.addf %185, %184 : vector<16x128xf32>
    %cst_62 = arith.constant 5.000000e-01 : f32
    %187 = vector.broadcast %cst_62 : f32 to vector<16x128xf32>
    %188 = arith.mulf %187, %186 : vector<16x128xf32>
    %189 = arith.mulf %176, %188 : vector<16x128xf32>
    %190 = arith.truncf %189 : vector<16x128xf32> to vector<16x128xbf16>
    %c0_63 = arith.constant 0 : index
    %c0_64 = arith.constant 0 : index
    %c0_65 = arith.constant 0 : index
    %191 = vector.load %arg12[%c0_63, %c0_64, %c0_65] : memref<2x128x32xbf16, #tpu.memory_space<vmem>>, vector<1x128x32xbf16>
    %192 = vector.shape_cast %191 : vector<1x128x32xbf16> to vector<128x32xbf16>
    %cst_66 = arith.constant dense<0.000000e+00> : vector<16x32xf32>
    %193 = tpu.matmul %190, %192, %cst_66 {dimension_numbers = #tpu.dot_dimension_numbers<[1], [0], [0], [1], [0, 0, 1, 1], [], []>} : vector<16x128xbf16>, vector<128x32xbf16>, vector<16x32xf32> -> vector<16x32xf32>
    %c0_67 = arith.constant 0 : index
    %c0_68 = arith.constant 0 : index
    %c0_69 = arith.constant 0 : index
    %194 = vector.load %arg13[%c0_67, %c0_68, %c0_69] : memref<2x1x32xf32, #tpu.memory_space<vmem>>, vector<1x1x32xf32>
    %195 = vector.shape_cast %194 : vector<1x1x32xf32> to vector<1x32xf32>
    %196 = vector.broadcast %195 : vector<1x32xf32> to vector<16x32xf32>
    %197 = arith.addf %193, %196 : vector<16x32xf32>
    %198 = arith.addf %168, %197 : vector<16x32xf32>
    %c0_70 = arith.constant 0 : index
    %c0_71 = arith.constant 0 : index
    %c0_72 = arith.constant 0 : index
    %199 = vector.load %arg14[%c0_70, %c0_71, %c0_72] : memref<2x1x32xf32, #tpu.memory_space<vmem>>, vector<1x1x32xf32>
    %200 = vector.shape_cast %199 : vector<1x1x32xf32> to vector<1x32xf32>
    %c0_73 = arith.constant 0 : index
    %c0_74 = arith.constant 0 : index
    %c0_75 = arith.constant 0 : index
    %201 = vector.load %arg15[%c0_73, %c0_74, %c0_75] : memref<2x1x32xf32, #tpu.memory_space<vmem>>, vector<1x1x32xf32>
    %202 = vector.shape_cast %201 : vector<1x1x32xf32> to vector<1x32xf32>
    %cst_76 = arith.constant dense<0.000000e+00> : vector<16xf32>
    %203 = vector.multi_reduction <add>, %198, %cst_76 [1] : vector<16x32xf32> to vector<16xf32>
    %204 = vector.shape_cast %203 : vector<16xf32> to vector<16x1xf32>
    %cst_77 = arith.constant 3.200000e+01 : f32
    %205 = vector.broadcast %cst_77 : f32 to vector<16x1xf32>
    %206 = arith.divf %204, %205 : vector<16x1xf32>
    %207 = vector.broadcast %206 : vector<16x1xf32> to vector<16x32xf32>
    %208 = arith.subf %198, %207 : vector<16x32xf32>
    %209 = arith.mulf %208, %208 : vector<16x32xf32>
    %cst_78 = arith.constant dense<0.000000e+00> : vector<16xf32>
    %210 = vector.multi_reduction <add>, %209, %cst_78 [1] : vector<16x32xf32> to vector<16xf32>
    %211 = vector.shape_cast %210 : vector<16xf32> to vector<16x1xf32>
    %cst_79 = arith.constant 3.200000e+01 : f32
    %212 = vector.broadcast %cst_79 : f32 to vector<16x1xf32>
    %213 = arith.divf %211, %212 : vector<16x1xf32>
    %214 = vector.broadcast %206 : vector<16x1xf32> to vector<16x32xf32>
    %215 = arith.subf %198, %214 : vector<16x32xf32>
    %cst_80 = arith.constant 9.99999996E-13 : f32
    %216 = vector.broadcast %cst_80 : f32 to vector<16x1xf32>
    %217 = arith.addf %213, %216 : vector<16x1xf32>
    %218 = math.rsqrt %217 : vector<16x1xf32>
    %219 = vector.broadcast %218 : vector<16x1xf32> to vector<16x32xf32>
    %220 = arith.mulf %215, %219 : vector<16x32xf32>
    %221 = vector.broadcast %200 : vector<1x32xf32> to vector<16x32xf32>
    %222 = arith.mulf %220, %221 : vector<16x32xf32>
    %223 = vector.broadcast %202 : vector<1x32xf32> to vector<16x32xf32>
    %224 = arith.addf %222, %223 : vector<16x32xf32>
    %225 = arith.truncf %224 : vector<16x32xf32> to vector<16x32xbf16>
    %c1 = arith.constant 1 : index
    %c0_81 = arith.constant 0 : index
    %c0_82 = arith.constant 0 : index
    %226 = vector.load %arg4[%c1, %c0_81, %c0_82] : memref<2x32x384xbf16, #tpu.memory_space<vmem>>, vector<1x32x384xbf16>
    %227 = vector.shape_cast %226 : vector<1x32x384xbf16> to vector<32x384xbf16>
    %cst_83 = arith.constant dense<0.000000e+00> : vector<16x384xf32>
    %228 = tpu.matmul %225, %227, %cst_83 {dimension_numbers = #tpu.dot_dimension_numbers<[1], [0], [0], [1], [0, 0, 1, 1], [], []>} : vector<16x32xbf16>, vector<32x384xbf16>, vector<16x384xf32> -> vector<16x384xf32>
    %c1_84 = arith.constant 1 : index
    %c0_85 = arith.constant 0 : index
    %c0_86 = arith.constant 0 : index
    %229 = vector.load %arg5[%c1_84, %c0_85, %c0_86] : memref<2x1x384xf32, #tpu.memory_space<vmem>>, vector<1x1x384xf32>
    %230 = vector.shape_cast %229 : vector<1x1x384xf32> to vector<1x384xf32>
    %231 = vector.broadcast %230 : vector<1x384xf32> to vector<16x384xf32>
    %232 = arith.addf %228, %231 : vector<16x384xf32>
    %233 = vector.extract_strided_slice %232 {offsets = [0, 0], sizes = [16, 8], strides = [1, 1]} : vector<16x384xf32> to vector<16x8xf32>
    %234 = vector.shape_cast %233 : vector<16x8xf32> to vector<2x8x8xf32>
    %235 = arith.truncf %234 : vector<2x8x8xf32> to vector<2x8x8xbf16>
    %236 = vector.extract_strided_slice %232 {offsets = [0, 128], sizes = [16, 8], strides = [1, 1]} : vector<16x384xf32> to vector<16x8xf32>
    %237 = vector.shape_cast %236 : vector<16x8xf32> to vector<2x8x8xf32>
    %238 = arith.truncf %237 : vector<2x8x8xf32> to vector<2x8x8xbf16>
    %239 = vector.extract_strided_slice %232 {offsets = [0, 256], sizes = [16, 8], strides = [1, 1]} : vector<16x384xf32> to vector<16x8xf32>
    %240 = vector.shape_cast %239 : vector<16x8xf32> to vector<2x8x8xf32>
    %241 = arith.truncf %240 : vector<2x8x8xf32> to vector<2x8x8xbf16>
    "tpu.trace_start"() <{level = 10 : i32, message = "bqd,bkd->bqk"}> : () -> ()
    %cst_87 = arith.constant dense<0.000000e+00> : vector<2x8x8xf32>
    %242 = tpu.matmul %235, %238, %cst_87 {dimension_numbers = #tpu.dot_dimension_numbers<[2], [2], [1], [1], [0, 0, 0, 1, 1, 1], [0], [0]>} : vector<2x8x8xbf16>, vector<2x8x8xbf16>, vector<2x8x8xf32> -> vector<2x8x8xf32>
    "tpu.trace_stop"() : () -> ()
    %243 = arith.addf %242, %28 : vector<2x8x8xf32>
    %cst_88 = arith.constant dense<0xFF800000> : vector<2x8xf32>
    %244 = vector.multi_reduction <maximumf>, %243, %cst_88 [2] : vector<2x8x8xf32> to vector<2x8xf32>
    %245 = vector.shape_cast %244 : vector<2x8xf32> to vector<2x8x1xf32>
    %246 = vector.broadcast %245 : vector<2x8x1xf32> to vector<2x8x8xf32>
    %247 = arith.subf %243, %246 : vector<2x8x8xf32>
    %248 = math.exp %247 : vector<2x8x8xf32>
    %cst_89 = arith.constant dense<0.000000e+00> : vector<2x8xf32>
    %249 = vector.multi_reduction <add>, %248, %cst_89 [2] : vector<2x8x8xf32> to vector<2x8xf32>
    %250 = vector.shape_cast %249 : vector<2x8xf32> to vector<2x8x1xf32>
    %251 = tpu.reciprocal %250 {approx = true} : vector<2x8x1xf32> -> vector<2x8x1xf32>
    %252 = vector.broadcast %251 : vector<2x8x1xf32> to vector<2x8x8xf32>
    %253 = arith.mulf %248, %252 : vector<2x8x8xf32>
    %254 = arith.truncf %253 : vector<2x8x8xf32> to vector<2x8x8xbf16>
    "tpu.trace_start"() <{level = 10 : i32, message = "bqk,bkd->bqd"}> : () -> ()
    %cst_90 = arith.constant dense<0.000000e+00> : vector<2x8x8xf32>
    %255 = tpu.matmul %254, %241, %cst_90 {dimension_numbers = #tpu.dot_dimension_numbers<[2], [1], [1], [2], [0, 0, 0, 1, 1, 2], [0], [0]>} : vector<2x8x8xbf16>, vector<2x8x8xbf16>, vector<2x8x8xf32> -> vector<2x8x8xf32>
    "tpu.trace_stop"() : () -> ()
    %256 = vector.shape_cast %255 : vector<2x8x8xf32> to vector<16x8xf32>
    %257 = vector.extract_strided_slice %232 {offsets = [0, 8], sizes = [16, 8], strides = [1, 1]} : vector<16x384xf32> to vector<16x8xf32>
    %258 = vector.shape_cast %257 : vector<16x8xf32> to vector<2x8x8xf32>
    %259 = arith.truncf %258 : vector<2x8x8xf32> to vector<2x8x8xbf16>
    %260 = vector.extract_strided_slice %232 {offsets = [0, 136], sizes = [16, 8], strides = [1, 1]} : vector<16x384xf32> to vector<16x8xf32>
    %261 = vector.shape_cast %260 : vector<16x8xf32> to vector<2x8x8xf32>
    %262 = arith.truncf %261 : vector<2x8x8xf32> to vector<2x8x8xbf16>
    %263 = vector.extract_strided_slice %232 {offsets = [0, 264], sizes = [16, 8], strides = [1, 1]} : vector<16x384xf32> to vector<16x8xf32>
    %264 = vector.shape_cast %263 : vector<16x8xf32> to vector<2x8x8xf32>
    %265 = arith.truncf %264 : vector<2x8x8xf32> to vector<2x8x8xbf16>
    "tpu.trace_start"() <{level = 10 : i32, message = "bqd,bkd->bqk"}> : () -> ()
    %cst_91 = arith.constant dense<0.000000e+00> : vector<2x8x8xf32>
    %266 = tpu.matmul %259, %262, %cst_91 {dimension_numbers = #tpu.dot_dimension_numbers<[2], [2], [1], [1], [0, 0, 0, 1, 1, 1], [0], [0]>} : vector<2x8x8xbf16>, vector<2x8x8xbf16>, vector<2x8x8xf32> -> vector<2x8x8xf32>
    "tpu.trace_stop"() : () -> ()
    %267 = arith.addf %266, %28 : vector<2x8x8xf32>
    %cst_92 = arith.constant dense<0xFF800000> : vector<2x8xf32>
    %268 = vector.multi_reduction <maximumf>, %267, %cst_92 [2] : vector<2x8x8xf32> to vector<2x8xf32>
    %269 = vector.shape_cast %268 : vector<2x8xf32> to vector<2x8x1xf32>
    %270 = vector.broadcast %269 : vector<2x8x1xf32> to vector<2x8x8xf32>
    %271 = arith.subf %267, %270 : vector<2x8x8xf32>
    %272 = math.exp %271 : vector<2x8x8xf32>
    %cst_93 = arith.constant dense<0.000000e+00> : vector<2x8xf32>
    %273 = vector.multi_reduction <add>, %272, %cst_93 [2] : vector<2x8x8xf32> to vector<2x8xf32>
    %274 = vector.shape_cast %273 : vector<2x8xf32> to vector<2x8x1xf32>
    %275 = tpu.reciprocal %274 {approx = true} : vector<2x8x1xf32> -> vector<2x8x1xf32>
    %276 = vector.broadcast %275 : vector<2x8x1xf32> to vector<2x8x8xf32>
    %277 = arith.mulf %272, %276 : vector<2x8x8xf32>
    %278 = arith.truncf %277 : vector<2x8x8xf32> to vector<2x8x8xbf16>
    "tpu.trace_start"() <{level = 10 : i32, message = "bqk,bkd->bqd"}> : () -> ()
    %cst_94 = arith.constant dense<0.000000e+00> : vector<2x8x8xf32>
    %279 = tpu.matmul %278, %265, %cst_94 {dimension_numbers = #tpu.dot_dimension_numbers<[2], [1], [1], [2], [0, 0, 0, 1, 1, 2], [0], [0]>} : vector<2x8x8xbf16>, vector<2x8x8xbf16>, vector<2x8x8xf32> -> vector<2x8x8xf32>
    "tpu.trace_stop"() : () -> ()
    %280 = vector.shape_cast %279 : vector<2x8x8xf32> to vector<16x8xf32>
    %281 = vector.extract_strided_slice %232 {offsets = [0, 16], sizes = [16, 8], strides = [1, 1]} : vector<16x384xf32> to vector<16x8xf32>
    %282 = vector.shape_cast %281 : vector<16x8xf32> to vector<2x8x8xf32>
    %283 = arith.truncf %282 : vector<2x8x8xf32> to vector<2x8x8xbf16>
    %284 = vector.extract_strided_slice %232 {offsets = [0, 144], sizes = [16, 8], strides = [1, 1]} : vector<16x384xf32> to vector<16x8xf32>
    %285 = vector.shape_cast %284 : vector<16x8xf32> to vector<2x8x8xf32>
    %286 = arith.truncf %285 : vector<2x8x8xf32> to vector<2x8x8xbf16>
    %287 = vector.extract_strided_slice %232 {offsets = [0, 272], sizes = [16, 8], strides = [1, 1]} : vector<16x384xf32> to vector<16x8xf32>
    %288 = vector.shape_cast %287 : vector<16x8xf32> to vector<2x8x8xf32>
    %289 = arith.truncf %288 : vector<2x8x8xf32> to vector<2x8x8xbf16>
    "tpu.trace_start"() <{level = 10 : i32, message = "bqd,bkd->bqk"}> : () -> ()
    %cst_95 = arith.constant dense<0.000000e+00> : vector<2x8x8xf32>
    %290 = tpu.matmul %283, %286, %cst_95 {dimension_numbers = #tpu.dot_dimension_numbers<[2], [2], [1], [1], [0, 0, 0, 1, 1, 1], [0], [0]>} : vector<2x8x8xbf16>, vector<2x8x8xbf16>, vector<2x8x8xf32> -> vector<2x8x8xf32>
    "tpu.trace_stop"() : () -> ()
    %291 = arith.addf %290, %28 : vector<2x8x8xf32>
    %cst_96 = arith.constant dense<0xFF800000> : vector<2x8xf32>
    %292 = vector.multi_reduction <maximumf>, %291, %cst_96 [2] : vector<2x8x8xf32> to vector<2x8xf32>
    %293 = vector.shape_cast %292 : vector<2x8xf32> to vector<2x8x1xf32>
    %294 = vector.broadcast %293 : vector<2x8x1xf32> to vector<2x8x8xf32>
    %295 = arith.subf %291, %294 : vector<2x8x8xf32>
    %296 = math.exp %295 : vector<2x8x8xf32>
    %cst_97 = arith.constant dense<0.000000e+00> : vector<2x8xf32>
    %297 = vector.multi_reduction <add>, %296, %cst_97 [2] : vector<2x8x8xf32> to vector<2x8xf32>
    %298 = vector.shape_cast %297 : vector<2x8xf32> to vector<2x8x1xf32>
    %299 = tpu.reciprocal %298 {approx = true} : vector<2x8x1xf32> -> vector<2x8x1xf32>
    %300 = vector.broadcast %299 : vector<2x8x1xf32> to vector<2x8x8xf32>
    %301 = arith.mulf %296, %300 : vector<2x8x8xf32>
    %302 = arith.truncf %301 : vector<2x8x8xf32> to vector<2x8x8xbf16>
    "tpu.trace_start"() <{level = 10 : i32, message = "bqk,bkd->bqd"}> : () -> ()
    %cst_98 = arith.constant dense<0.000000e+00> : vector<2x8x8xf32>
    %303 = tpu.matmul %302, %289, %cst_98 {dimension_numbers = #tpu.dot_dimension_numbers<[2], [1], [1], [2], [0, 0, 0, 1, 1, 2], [0], [0]>} : vector<2x8x8xbf16>, vector<2x8x8xbf16>, vector<2x8x8xf32> -> vector<2x8x8xf32>
    "tpu.trace_stop"() : () -> ()
    %304 = vector.shape_cast %303 : vector<2x8x8xf32> to vector<16x8xf32>
    %305 = vector.extract_strided_slice %232 {offsets = [0, 24], sizes = [16, 8], strides = [1, 1]} : vector<16x384xf32> to vector<16x8xf32>
    %306 = vector.shape_cast %305 : vector<16x8xf32> to vector<2x8x8xf32>
    %307 = arith.truncf %306 : vector<2x8x8xf32> to vector<2x8x8xbf16>
    %308 = vector.extract_strided_slice %232 {offsets = [0, 152], sizes = [16, 8], strides = [1, 1]} : vector<16x384xf32> to vector<16x8xf32>
    %309 = vector.shape_cast %308 : vector<16x8xf32> to vector<2x8x8xf32>
    %310 = arith.truncf %309 : vector<2x8x8xf32> to vector<2x8x8xbf16>
    %311 = vector.extract_strided_slice %232 {offsets = [0, 280], sizes = [16, 8], strides = [1, 1]} : vector<16x384xf32> to vector<16x8xf32>
    %312 = vector.shape_cast %311 : vector<16x8xf32> to vector<2x8x8xf32>
    %313 = arith.truncf %312 : vector<2x8x8xf32> to vector<2x8x8xbf16>
    "tpu.trace_start"() <{level = 10 : i32, message = "bqd,bkd->bqk"}> : () -> ()
    %cst_99 = arith.constant dense<0.000000e+00> : vector<2x8x8xf32>
    %314 = tpu.matmul %307, %310, %cst_99 {dimension_numbers = #tpu.dot_dimension_numbers<[2], [2], [1], [1], [0, 0, 0, 1, 1, 1], [0], [0]>} : vector<2x8x8xbf16>, vector<2x8x8xbf16>, vector<2x8x8xf32> -> vector<2x8x8xf32>
    "tpu.trace_stop"() : () -> ()
    %315 = arith.addf %314, %28 : vector<2x8x8xf32>
    %cst_100 = arith.constant dense<0xFF800000> : vector<2x8xf32>
    %316 = vector.multi_reduction <maximumf>, %315, %cst_100 [2] : vector<2x8x8xf32> to vector<2x8xf32>
    %317 = vector.shape_cast %316 : vector<2x8xf32> to vector<2x8x1xf32>
    %318 = vector.broadcast %317 : vector<2x8x1xf32> to vector<2x8x8xf32>
    %319 = arith.subf %315, %318 : vector<2x8x8xf32>
    %320 = math.exp %319 : vector<2x8x8xf32>
    %cst_101 = arith.constant dense<0.000000e+00> : vector<2x8xf32>
    %321 = vector.multi_reduction <add>, %320, %cst_101 [2] : vector<2x8x8xf32> to vector<2x8xf32>
    %322 = vector.shape_cast %321 : vector<2x8xf32> to vector<2x8x1xf32>
    %323 = tpu.reciprocal %322 {approx = true} : vector<2x8x1xf32> -> vector<2x8x1xf32>
    %324 = vector.broadcast %323 : vector<2x8x1xf32> to vector<2x8x8xf32>
    %325 = arith.mulf %320, %324 : vector<2x8x8xf32>
    %326 = arith.truncf %325 : vector<2x8x8xf32> to vector<2x8x8xbf16>
    "tpu.trace_start"() <{level = 10 : i32, message = "bqk,bkd->bqd"}> : () -> ()
    %cst_102 = arith.constant dense<0.000000e+00> : vector<2x8x8xf32>
    %327 = tpu.matmul %326, %313, %cst_102 {dimension_numbers = #tpu.dot_dimension_numbers<[2], [1], [1], [2], [0, 0, 0, 1, 1, 2], [0], [0]>} : vector<2x8x8xbf16>, vector<2x8x8xbf16>, vector<2x8x8xf32> -> vector<2x8x8xf32>
    "tpu.trace_stop"() : () -> ()
    %328 = vector.shape_cast %327 : vector<2x8x8xf32> to vector<16x8xf32>
    %329 = tpu.concatenate %256, %280, %304, %328 in 1 : vector<16x8xf32>, vector<16x8xf32>, vector<16x8xf32>, vector<16x8xf32> -> vector<16x32xf32>
    %330 = arith.truncf %329 : vector<16x32xf32> to vector<16x32xbf16>
    %c1_103 = arith.constant 1 : index
    %c0_104 = arith.constant 0 : index
    %c0_105 = arith.constant 0 : index
    %331 = vector.load %arg6[%c1_103, %c0_104, %c0_105] : memref<2x32x32xbf16, #tpu.memory_space<vmem>>, vector<1x32x32xbf16>
    %332 = vector.shape_cast %331 : vector<1x32x32xbf16> to vector<32x32xbf16>
    %cst_106 = arith.constant dense<0.000000e+00> : vector<16x32xf32>
    %333 = tpu.matmul %330, %332, %cst_106 {dimension_numbers = #tpu.dot_dimension_numbers<[1], [0], [0], [1], [0, 0, 1, 1], [], []>} : vector<16x32xbf16>, vector<32x32xbf16>, vector<16x32xf32> -> vector<16x32xf32>
    %c1_107 = arith.constant 1 : index
    %c0_108 = arith.constant 0 : index
    %c0_109 = arith.constant 0 : index
    %334 = vector.load %arg7[%c1_107, %c0_108, %c0_109] : memref<2x1x32xf32, #tpu.memory_space<vmem>>, vector<1x1x32xf32>
    %335 = vector.shape_cast %334 : vector<1x1x32xf32> to vector<1x32xf32>
    %336 = vector.broadcast %335 : vector<1x32xf32> to vector<16x32xf32>
    %337 = arith.addf %333, %336 : vector<16x32xf32>
    %338 = arith.addf %224, %337 : vector<16x32xf32>
    %c1_110 = arith.constant 1 : index
    %c0_111 = arith.constant 0 : index
    %c0_112 = arith.constant 0 : index
    %339 = vector.load %arg8[%c1_110, %c0_111, %c0_112] : memref<2x1x32xf32, #tpu.memory_space<vmem>>, vector<1x1x32xf32>
    %340 = vector.shape_cast %339 : vector<1x1x32xf32> to vector<1x32xf32>
    %c1_113 = arith.constant 1 : index
    %c0_114 = arith.constant 0 : index
    %c0_115 = arith.constant 0 : index
    %341 = vector.load %arg9[%c1_113, %c0_114, %c0_115] : memref<2x1x32xf32, #tpu.memory_space<vmem>>, vector<1x1x32xf32>
    %342 = vector.shape_cast %341 : vector<1x1x32xf32> to vector<1x32xf32>
    %cst_116 = arith.constant dense<0.000000e+00> : vector<16xf32>
    %343 = vector.multi_reduction <add>, %338, %cst_116 [1] : vector<16x32xf32> to vector<16xf32>
    %344 = vector.shape_cast %343 : vector<16xf32> to vector<16x1xf32>
    %cst_117 = arith.constant 3.200000e+01 : f32
    %345 = vector.broadcast %cst_117 : f32 to vector<16x1xf32>
    %346 = arith.divf %344, %345 : vector<16x1xf32>
    %347 = vector.broadcast %346 : vector<16x1xf32> to vector<16x32xf32>
    %348 = arith.subf %338, %347 : vector<16x32xf32>
    %349 = arith.mulf %348, %348 : vector<16x32xf32>
    %cst_118 = arith.constant dense<0.000000e+00> : vector<16xf32>
    %350 = vector.multi_reduction <add>, %349, %cst_118 [1] : vector<16x32xf32> to vector<16xf32>
    %351 = vector.shape_cast %350 : vector<16xf32> to vector<16x1xf32>
    %cst_119 = arith.constant 3.200000e+01 : f32
    %352 = vector.broadcast %cst_119 : f32 to vector<16x1xf32>
    %353 = arith.divf %351, %352 : vector<16x1xf32>
    %354 = vector.broadcast %346 : vector<16x1xf32> to vector<16x32xf32>
    %355 = arith.subf %338, %354 : vector<16x32xf32>
    %cst_120 = arith.constant 9.99999996E-13 : f32
    %356 = vector.broadcast %cst_120 : f32 to vector<16x1xf32>
    %357 = arith.addf %353, %356 : vector<16x1xf32>
    %358 = math.rsqrt %357 : vector<16x1xf32>
    %359 = vector.broadcast %358 : vector<16x1xf32> to vector<16x32xf32>
    %360 = arith.mulf %355, %359 : vector<16x32xf32>
    %361 = vector.broadcast %340 : vector<1x32xf32> to vector<16x32xf32>
    %362 = arith.mulf %360, %361 : vector<16x32xf32>
    %363 = vector.broadcast %342 : vector<1x32xf32> to vector<16x32xf32>
    %364 = arith.addf %362, %363 : vector<16x32xf32>
    %365 = arith.truncf %364 : vector<16x32xf32> to vector<16x32xbf16>
    %c1_121 = arith.constant 1 : index
    %c0_122 = arith.constant 0 : index
    %c0_123 = arith.constant 0 : index
    %366 = vector.load %arg10[%c1_121, %c0_122, %c0_123] : memref<2x32x128xbf16, #tpu.memory_space<vmem>>, vector<1x32x128xbf16>
    %367 = vector.shape_cast %366 : vector<1x32x128xbf16> to vector<32x128xbf16>
    %cst_124 = arith.constant dense<0.000000e+00> : vector<16x128xf32>
    %368 = tpu.matmul %365, %367, %cst_124 {dimension_numbers = #tpu.dot_dimension_numbers<[1], [0], [0], [1], [0, 0, 1, 1], [], []>} : vector<16x32xbf16>, vector<32x128xbf16>, vector<16x128xf32> -> vector<16x128xf32>
    %c1_125 = arith.constant 1 : index
    %c0_126 = arith.constant 0 : index
    %c0_127 = arith.constant 0 : index
    %369 = vector.load %arg11[%c1_125, %c0_126, %c0_127] : memref<2x1x128xf32, #tpu.memory_space<vmem>>, vector<1x1x128xf32>
    %370 = vector.shape_cast %369 : vector<1x1x128xf32> to vector<1x128xf32>
    %371 = vector.broadcast %370 : vector<1x128xf32> to vector<16x128xf32>
    %372 = arith.addf %368, %371 : vector<16x128xf32>
    %373 = arith.mulf %372, %372 : vector<16x128xf32>
    %374 = arith.mulf %372, %373 : vector<16x128xf32>
    %cst_128 = arith.constant 4.471500e-02 : f32
    %375 = vector.broadcast %cst_128 : f32 to vector<16x128xf32>
    %376 = arith.mulf %375, %374 : vector<16x128xf32>
    %377 = arith.addf %372, %376 : vector<16x128xf32>
    %cst_129 = arith.constant 0.797884583 : f32
    %378 = vector.broadcast %cst_129 : f32 to vector<16x128xf32>
    %379 = arith.mulf %378, %377 : vector<16x128xf32>
    %380 = math.tanh %379 : vector<16x128xf32>
    %cst_130 = arith.constant 1.000000e+00 : f32
    %381 = vector.broadcast %cst_130 : f32 to vector<16x128xf32>
    %382 = arith.addf %381, %380 : vector<16x128xf32>
    %cst_131 = arith.constant 5.000000e-01 : f32
    %383 = vector.broadcast %cst_131 : f32 to vector<16x128xf32>
    %384 = arith.mulf %383, %382 : vector<16x128xf32>
    %385 = arith.mulf %372, %384 : vector<16x128xf32>
    %386 = arith.truncf %385 : vector<16x128xf32> to vector<16x128xbf16>
    %c1_132 = arith.constant 1 : index
    %c0_133 = arith.constant 0 : index
    %c0_134 = arith.constant 0 : index
    %387 = vector.load %arg12[%c1_132, %c0_133, %c0_134] : memref<2x128x32xbf16, #tpu.memory_space<vmem>>, vector<1x128x32xbf16>
    %388 = vector.shape_cast %387 : vector<1x128x32xbf16> to vector<128x32xbf16>
    %cst_135 = arith.constant dense<0.000000e+00> : vector<16x32xf32>
    %389 = tpu.matmul %386, %388, %cst_135 {dimension_numbers = #tpu.dot_dimension_numbers<[1], [0], [0], [1], [0, 0, 1, 1], [], []>} : vector<16x128xbf16>, vector<128x32xbf16>, vector<16x32xf32> -> vector<16x32xf32>
    %c1_136 = arith.constant 1 : index
    %c0_137 = arith.constant 0 : index
    %c0_138 = arith.constant 0 : index
    %390 = vector.load %arg13[%c1_136, %c0_137, %c0_138] : memref<2x1x32xf32, #tpu.memory_space<vmem>>, vector<1x1x32xf32>
    %391 = vector.shape_cast %390 : vector<1x1x32xf32> to vector<1x32xf32>
    %392 = vector.broadcast %391 : vector<1x32xf32> to vector<16x32xf32>
    %393 = arith.addf %389, %392 : vector<16x32xf32>
    %394 = arith.addf %364, %393 : vector<16x32xf32>
    %c1_139 = arith.constant 1 : index
    %c0_140 = arith.constant 0 : index
    %c0_141 = arith.constant 0 : index
    %395 = vector.load %arg14[%c1_139, %c0_140, %c0_141] : memref<2x1x32xf32, #tpu.memory_space<vmem>>, vector<1x1x32xf32>
    %396 = vector.shape_cast %395 : vector<1x1x32xf32> to vector<1x32xf32>
    %c1_142 = arith.constant 1 : index
    %c0_143 = arith.constant 0 : index
    %c0_144 = arith.constant 0 : index
    %397 = vector.load %arg15[%c1_142, %c0_143, %c0_144] : memref<2x1x32xf32, #tpu.memory_space<vmem>>, vector<1x1x32xf32>
    %398 = vector.shape_cast %397 : vector<1x1x32xf32> to vector<1x32xf32>
    %cst_145 = arith.constant dense<0.000000e+00> : vector<16xf32>
    %399 = vector.multi_reduction <add>, %394, %cst_145 [1] : vector<16x32xf32> to vector<16xf32>
    %400 = vector.shape_cast %399 : vector<16xf32> to vector<16x1xf32>
    %cst_146 = arith.constant 3.200000e+01 : f32
    %401 = vector.broadcast %cst_146 : f32 to vector<16x1xf32>
    %402 = arith.divf %400, %401 : vector<16x1xf32>
    %403 = vector.broadcast %402 : vector<16x1xf32> to vector<16x32xf32>
    %404 = arith.subf %394, %403 : vector<16x32xf32>
    %405 = arith.mulf %404, %404 : vector<16x32xf32>
    %cst_147 = arith.constant dense<0.000000e+00> : vector<16xf32>
    %406 = vector.multi_reduction <add>, %405, %cst_147 [1] : vector<16x32xf32> to vector<16xf32>
    %407 = vector.shape_cast %406 : vector<16xf32> to vector<16x1xf32>
    %cst_148 = arith.constant 3.200000e+01 : f32
    %408 = vector.broadcast %cst_148 : f32 to vector<16x1xf32>
    %409 = arith.divf %407, %408 : vector<16x1xf32>
    %410 = vector.broadcast %402 : vector<16x1xf32> to vector<16x32xf32>
    %411 = arith.subf %394, %410 : vector<16x32xf32>
    %cst_149 = arith.constant 9.99999996E-13 : f32
    %412 = vector.broadcast %cst_149 : f32 to vector<16x1xf32>
    %413 = arith.addf %409, %412 : vector<16x1xf32>
    %414 = math.rsqrt %413 : vector<16x1xf32>
    %415 = vector.broadcast %414 : vector<16x1xf32> to vector<16x32xf32>
    %416 = arith.mulf %411, %415 : vector<16x32xf32>
    %417 = vector.broadcast %396 : vector<1x32xf32> to vector<16x32xf32>
    %418 = arith.mulf %416, %417 : vector<16x32xf32>
    %419 = vector.broadcast %398 : vector<1x32xf32> to vector<16x32xf32>
    %420 = arith.addf %418, %419 : vector<16x32xf32>
    %421 = arith.truncf %420 : vector<16x32xf32> to vector<16x32xbf16>
    %c0_150 = arith.constant 0 : index
    %c0_151 = arith.constant 0 : index
    %422 = vector.load %arg16[%c0_150, %c0_151] : memref<32x128xbf16, #tpu.memory_space<vmem>>, vector<32x128xbf16>
    %cst_152 = arith.constant dense<0.000000e+00> : vector<16x128xf32>
    %423 = tpu.matmul %421, %422, %cst_152 {dimension_numbers = #tpu.dot_dimension_numbers<[1], [0], [0], [1], [0, 0, 1, 1], [], []>} : vector<16x32xbf16>, vector<32x128xbf16>, vector<16x128xf32> -> vector<16x128xf32>
    %c0_153 = arith.constant 0 : index
    %c0_154 = arith.constant 0 : index
    %424 = vector.load %arg17[%c0_153, %c0_154] : memref<1x128xf32, #tpu.memory_space<vmem>>, vector<1x128xf32>
    %425 = vector.broadcast %424 : vector<1x128xf32> to vector<16x128xf32>
    %426 = arith.addf %423, %425 : vector<16x128xf32>
    %c0_155 = arith.constant 0 : index
    %c0_156 = arith.constant 0 : index
    %427 = vector.load %arg18[%c0_155, %c0_156] : memref<16x128xf32, #tpu.memory_space<vmem>>, vector<16x128xf32>
    tpu.vector_store %arg18[%c0_155, %c0_156], %426 {strides = array<i32>} : memref<16x128xf32, #tpu.memory_space<vmem>>, vector<16x128xf32>,
    return
  }
}

</mosaic_0001>

<llo_original>
// kernel: tpu_custom_call.1
$region0: #{tpu_custom_call.1}
  #allocation0 [shape = 'u32[]', space=smem, size = 0x4, offset = 0x4, fixed_abs, tag = 'smem constant byte address 0x4 - core index']
  #allocation1 [shape = 'u32[144,128]{1,0:T(1,128)}', space=vmem, size = 0x12000, scoped, tag = 'internal scratch']
  %s0 = inlined_call_operand.hbm [shape: f32[16,32], index: 0, kind: input, shape index: {}]
  %s1 = inlined_call_operand.hbm [shape: f32[2,8], index: 1, kind: input, shape index: {}]
  %s2 = inlined_call_operand.vmem [shape: f32[1,32], index: 2, kind: input, shape index: {}]
  %s3 = inlined_call_operand.hbm [shape: f32[1,32], index: 3, kind: input, shape index: {}]
  %s4 = inlined_call_operand.vmem [shape: bf16[2,32,384], index: 4, kind: input, shape index: {}]
  %s5 = inlined_call_operand.hbm [shape: f32[2,1,384], index: 5, kind: input, shape index: {}]
  %s6 = inlined_call_operand.vmem [shape: bf16[2,32,32], index: 6, kind: input, shape index: {}]
  %s7 = inlined_call_operand.hbm [shape: f32[2,1,32], index: 7, kind: input, shape index: {}]
  %s8 = inlined_call_operand.hbm [shape: f32[2,1,32], index: 8, kind: input, shape index: {}]
  %s9 = inlined_call_operand.hbm [shape: f32[2,1,32], index: 9, kind: input, shape index: {}]
  %s10 = inlined_call_operand.vmem [shape: bf16[2,32,128], index: 10, kind: input, shape index: {}]
  %s11 = inlined_call_operand.hbm [shape: f32[2,1,128], index: 11, kind: input, shape index: {}]
  %s12 = inlined_call_operand.vmem [shape: bf16[2,128,32], index: 12, kind: input, shape index: {}]
  %s13 = inlined_call_operand.hbm [shape: f32[2,1,32], index: 13, kind: input, shape index: {}]
  %s14 = inlined_call_operand.vmem [shape: f32[2,1,32], index: 14, kind: input, shape index: {}]
  %s15 = inlined_call_operand.vmem [shape: f32[2,1,32], index: 15, kind: input, shape index: {}]
  %s16 = inlined_call_operand.vmem [shape: bf16[32,128], index: 16, kind: input, shape index: {}]
  %s17 = inlined_call_operand.vmem [shape: f32[1,128], index: 17, kind: input, shape index: {}]
  %s18 = inlined_call_operand.hbm [shape: f32[16,128], index: 18, kind: output, shape index: {}]
  %s19 = sld [smem:[#allocation0]]
  $region118: #{tpu_custom_call.1} parent=0
    _
  %s21 = ssub.s32 1, %s19
  %s22 = scalar_select 0, %s21, %s19
  $region1: #{tpu_custom_call.1} parent=0
    #allocation2 [shape = 'u8[8192]{0}', space=vmem, size = 0x2000, scoped, tag = 'input window, operand 0, single buffered']
    #allocation3 [shape = 's32[1]{0}', space=sflag, size = 0x4, scoped, tag = 'scoped memory for tpu_custom_call.1']
    #allocation4 [shape = 's32[1]{0}', space=sflag, size = 0x4, scoped, tag = 'scoped memory for tpu_custom_call.1']
    #allocation5 [shape = 'u8[1024]{0}', space=vmem, size = 0x400, scoped, tag = 'input window, operand 1, single buffered']
    #allocation6 [shape = 's32[1]{0}', space=sflag, size = 0x4, scoped, tag = 'scoped memory for tpu_custom_call.1']
    #allocation7 [shape = 'u8[512]{0}', space=vmem, size = 0x400, scoped, tag = 'input window, operand 3, single buffered']
    #allocation8 [shape = 'u8[3072]{0}', space=vmem, size = 0xc00, scoped, tag = 'input window, operand 5, single buffered']
    #allocation9 [shape = 's32[1]{0}', space=sflag, size = 0x4, scoped, tag = 'scoped memory for tpu_custom_call.1']
    #allocation10 [shape = 'u8[1024]{0}', space=vmem, size = 0x400, scoped, tag = 'input window, operand 7, single buffered']
    #allocation11 [shape = 'u8[1024]{0}', space=vmem, size = 0x400, scoped, tag = 'input window, operand 8, single buffered']
    #allocation12 [shape = 's32[1]{0}', space=sflag, size = 0x4, scoped, tag = 'scoped memory for tpu_custom_call.1']
    #allocation13 [shape = 'u8[1024]{0}', space=vmem, size = 0x400, scoped, tag = 'input window, operand 9, single buffered']
    #allocation14 [shape = 'u8[1024]{0}', space=vmem, size = 0x400, scoped, tag = 'input window, operand 11, single buffered']
    #allocation15 [shape = 's32[1]{0}', space=sflag, size = 0x4, scoped, tag = 'scoped memory for tpu_custom_call.1']
    #allocation16 [shape = 'u8[1024]{0}', space=vmem, size = 0x400, scoped, tag = 'input window, operand 13, single buffered']
    #allocation17 [shape = 'u8[8192]{0}', space=vmem, size = 0x2000, scoped, tag = 'output window, operand 0, single buffered']
    %23 = vsyncpa [#allocation3], 0
    %24 = vsyncpa [#allocation6], 0
    %25 = vsyncpa [#allocation9], 0
    %26 = vsyncpa [#allocation12], 0
    %27 = vsyncpa [#allocation15], 0
    %28 = vsyncpa [#allocation4], 0
    // Predicated region
    $region2: #{tpu_custom_call.1} parent=1 // pred_check
      _
    $region3: #{tpu_custom_call.1} parent=1 // pred_check_branch
      %30 = sbr.rel (0) target = $region5
    $region4: #{tpu_custom_call.1} parent=1 // pred_region
      %s32 = ssub.s32 256, 256
      %33 = vsyncadd [#allocation3], %s32
      %s34 = sshll.u32 [#allocation2], 4
      %s35 = int_to_ptr.vmem [resolvable:$true] %s34
      %40 = dma.hbm_to_vmem [thread:$0]  %s0, 256, %s35, [#allocation3], 128, 128, 8
    $region5: #{tpu_custom_call.1} parent=1 // pred_fallthru
      _
    // Predicated region
    $region6: #{tpu_custom_call.1} parent=1 // pred_check
      _
    $region7: #{tpu_custom_call.1} parent=1 // pred_check_branch
      %42 = sbr.rel (0) target = $region9
    $region8: #{tpu_custom_call.1} parent=1 // pred_region
      %s44 = ssub.s32 32, 32
      %45 = vsyncadd [#allocation6], %s44
      %s47 = sshll.u32 [#allocation5], 4
      %s48 = int_to_ptr.vmem [resolvable:$true] %s47
      %50 = dma.hbm_to_vmem [thread:$0]  %s1, 32, %s48, [#allocation6]
    $region9: #{tpu_custom_call.1} parent=1 // pred_fallthru
      _
    // Predicated region
    $region10: #{tpu_custom_call.1} parent=1 // pred_check
      _
    $region11: #{tpu_custom_call.1} parent=1 // pred_check_branch
      %52 = sbr.rel (0) target = $region13
    $region12: #{tpu_custom_call.1} parent=1 // pred_region
      _
    $region13: #{tpu_custom_call.1} parent=1 // pred_fallthru
      _
    // Predicated region
    $region14: #{tpu_custom_call.1} parent=1 // pred_check
      _
    $region15: #{tpu_custom_call.1} parent=1 // pred_check_branch
      %54 = sbr.rel (0) target = $region17
    $region16: #{tpu_custom_call.1} parent=1 // pred_region
      %s56 = ssub.s32 16, 16
      %57 = vsyncadd [#allocation6], %s56
      %s59 = sshll.u32 [#allocation7], 4
      %s60 = int_to_ptr.vmem [resolvable:$true] %s59
      %62 = dma.hbm_to_vmem [thread:$0]  %s3, 16, %s60, [#allocation6]
    $region17: #{tpu_custom_call.1} parent=1 // pred_fallthru
      _
    // Predicated region
    $region18: #{tpu_custom_call.1} parent=1 // pred_check
      _
    $region19: #{tpu_custom_call.1} parent=1 // pred_check_branch
      %64 = sbr.rel (0) target = $region21
    $region20: #{tpu_custom_call.1} parent=1 // pred_region
      _
    $region21: #{tpu_custom_call.1} parent=1 // pred_fallthru
      _
    // Predicated region
    $region22: #{tpu_custom_call.1} parent=1 // pred_check
      _
    $region23: #{tpu_custom_call.1} parent=1 // pred_check_branch
      %66 = sbr.rel (0) target = $region25
    $region24: #{tpu_custom_call.1} parent=1 // pred_region
      %s68 = ssub.s32 96, 96
      %69 = vsyncadd [#allocation9], %s68
      %s70 = sshll.u32 [#allocation8], 4
      %s71 = int_to_ptr.vmem [resolvable:$true] %s70
      %76 = dma.hbm_to_vmem [thread:$0]  %s5, 96, %s71, [#allocation9], 48, 48, 3
    $region25: #{tpu_custom_call.1} parent=1 // pred_fallthru
      _
    // Predicated region
    $region26: #{tpu_custom_call.1} parent=1 // pred_check
      _
    $region27: #{tpu_custom_call.1} parent=1 // pred_check_branch
      %78 = sbr.rel (0) target = $region29
    $region28: #{tpu_custom_call.1} parent=1 // pred_region
      _
    $region29: #{tpu_custom_call.1} parent=1 // pred_fallthru
      _
    // Predicated region
    $region30: #{tpu_custom_call.1} parent=1 // pred_check
      _
    $region31: #{tpu_custom_call.1} parent=1 // pred_check_branch
      %80 = sbr.rel (0) target = $region33
    $region32: #{tpu_custom_call.1} parent=1 // pred_region
      %s82 = ssub.s32 32, 32
      %83 = vsyncadd [#allocation9], %s82
      %s84 = sshll.u32 [#allocation10], 4
      %s85 = int_to_ptr.vmem [resolvable:$true] %s84
      %90 = dma.hbm_to_vmem [thread:$0]  %s7, 32, %s85, [#allocation9], 16, 16, 1
    $region33: #{tpu_custom_call.1} parent=1 // pred_fallthru
      _
    // Predicated region
    $region34: #{tpu_custom_call.1} parent=1 // pred_check
      _
    $region35: #{tpu_custom_call.1} parent=1 // pred_check_branch
      %92 = sbr.rel (0) target = $region37
    $region36: #{tpu_custom_call.1} parent=1 // pred_region
      %s94 = ssub.s32 32, 32
      %95 = vsyncadd [#allocation12], %s94
      %s96 = sshll.u32 [#allocation11], 4
      %s97 = int_to_ptr.vmem [resolvable:$true] %s96
      %102 = dma.hbm_to_vmem [thread:$0]  %s8, 32, %s97, [#allocation12], 16, 16, 1
    $region37: #{tpu_custom_call.1} parent=1 // pred_fallthru
      _
    // Predicated region
    $region38: #{tpu_custom_call.1} parent=1 // pred_check
      _
    $region39: #{tpu_custom_call.1} parent=1 // pred_check_branch
      %104 = sbr.rel (0) target = $region41
    $region40: #{tpu_custom_call.1} parent=1 // pred_region
      %s106 = ssub.s32 32, 32
      %107 = vsyncadd [#allocation12], %s106
      %s108 = sshll.u32 [#allocation13], 4
      %s109 = int_to_ptr.vmem [resolvable:$true] %s108
      %114 = dma.hbm_to_vmem [thread:$0]  %s9, 32, %s109, [#allocation12], 16, 16, 1
    $region41: #{tpu_custom_call.1} parent=1 // pred_fallthru
      _
    // Predicated region
    $region42: #{tpu_custom_call.1} parent=1 // pred_check
      _
    $region43: #{tpu_custom_call.1} parent=1 // pred_check_branch
      %116 = sbr.rel (0) target = $region45
    $region44: #{tpu_custom_call.1} parent=1 // pred_region
      _
    $region45: #{tpu_custom_call.1} parent=1 // pred_fallthru
      _
    // Predicated region
    $region46: #{tpu_custom_call.1} parent=1 // pred_check
      _
    $region47: #{tpu_custom_call.1} parent=1 // pred_check_branch
      %118 = sbr.rel (0) target = $region49
    $region48: #{tpu_custom_call.1} parent=1 // pred_region
      %s120 = ssub.s32 32, 32
      %121 = vsyncadd [#allocation15], %s120
      %s122 = sshll.u32 [#allocation14], 4
      %s123 = int_to_ptr.vmem [resolvable:$true] %s122
      %128 = dma.hbm_to_vmem [thread:$0]  %s11, 32, %s123, [#allocation15], 16, 16, 1
    $region49: #{tpu_custom_call.1} parent=1 // pred_fallthru
      _
    // Predicated region
    $region50: #{tpu_custom_call.1} parent=1 // pred_check
      _
    $region51: #{tpu_custom_call.1} parent=1 // pred_check_branch
      %130 = sbr.rel (0) target = $region53
    $region52: #{tpu_custom_call.1} parent=1 // pred_region
      _
    $region53: #{tpu_custom_call.1} parent=1 // pred_fallthru
      _
    // Predicated region
    $region54: #{tpu_custom_call.1} parent=1 // pred_check
      _
    $region55: #{tpu_custom_call.1} parent=1 // pred_check_branch
      %132 = sbr.rel (0) target = $region57
    $region56: #{tpu_custom_call.1} parent=1 // pred_region
      %s134 = ssub.s32 32, 32
      %135 = vsyncadd [#allocation15], %s134
      %s136 = sshll.u32 [#allocation16], 4
      %s137 = int_to_ptr.vmem [resolvable:$true] %s136
      %142 = dma.hbm_to_vmem [thread:$0]  %s13, 32, %s137, [#allocation15], 16, 16, 1
    $region57: #{tpu_custom_call.1} parent=1 // pred_fallthru
      _
    // Predicated region
    $region58: #{tpu_custom_call.1} parent=1 // pred_check
      _
    $region59: #{tpu_custom_call.1} parent=1 // pred_check_branch
      %144 = sbr.rel (0) target = $region61
    $region60: #{tpu_custom_call.1} parent=1 // pred_region
      _
    $region61: #{tpu_custom_call.1} parent=1 // pred_fallthru
      _
    // Predicated region
    $region62: #{tpu_custom_call.1} parent=1 // pred_check
      _
    $region63: #{tpu_custom_call.1} parent=1 // pred_check_branch
      %146 = sbr.rel (0) target = $region65
    $region64: #{tpu_custom_call.1} parent=1 // pred_region
      _
    $region65: #{tpu_custom_call.1} parent=1 // pred_fallthru
      _
    // Predicated region
    $region66: #{tpu_custom_call.1} parent=1 // pred_check
      _
    $region67: #{tpu_custom_call.1} parent=1 // pred_check_branch
      %148 = sbr.rel (0) target = $region69
    $region68: #{tpu_custom_call.1} parent=1 // pred_region
      _
    $region69: #{tpu_custom_call.1} parent=1 // pred_fallthru
      _
    // Predicated region
    $region70: #{tpu_custom_call.1} parent=1 // pred_check
      _
    $region71: #{tpu_custom_call.1} parent=1 // pred_check_branch
      %150 = sbr.rel (0) target = $region73
    $region72: #{tpu_custom_call.1} parent=1 // pred_region
      _
    $region73: #{tpu_custom_call.1} parent=1 // pred_fallthru
      _
    // Predicated region
    $region74: #{tpu_custom_call.1} parent=1 // pred_check
      _
    $region75: #{tpu_custom_call.1} parent=1 // pred_check_branch
      %152 = sbr.rel (0) target = $region77
    $region76: #{tpu_custom_call.1} parent=1 // pred_region
      %153 = dma.done [#allocation3], 256
    $region77: #{tpu_custom_call.1} parent=1 // pred_fallthru
      _
    // Predicated region
    $region78: #{tpu_custom_call.1} parent=1 // pred_check
      _
    $region79: #{tpu_custom_call.1} parent=1 // pred_check_branch
      %155 = sbr.rel (0) target = $region81
    $region80: #{tpu_custom_call.1} parent=1 // pred_region
      %156 = dma.done [#allocation6], 32
    $region81: #{tpu_custom_call.1} parent=1 // pred_fallthru
      _
    // Predicated region
    $region82: #{tpu_custom_call.1} parent=1 // pred_check
      _
    $region83: #{tpu_custom_call.1} parent=1 // pred_check_branch
      %158 = sbr.rel (0) target = $region85
    $region84: #{tpu_custom_call.1} parent=1 // pred_region
      %159 = dma.done [#allocation6], 16
    $region85: #{tpu_custom_call.1} parent=1 // pred_fallthru
      _
    // Predicated region
    $region86: #{tpu_custom_call.1} parent=1 // pred_check
      _
    $region87: #{tpu_custom_call.1} parent=1 // pred_check_branch
      %161 = sbr.rel (0) target = $region89
    $region88: #{tpu_custom_call.1} parent=1 // pred_region
      %162 = dma.done [#allocation9], 96
    $region89: #{tpu_custom_call.1} parent=1 // pred_fallthru
      _
    // Predicated region
    $region90: #{tpu_custom_call.1} parent=1 // pred_check
      _
    $region91: #{tpu_custom_call.1} parent=1 // pred_check_branch
      %164 = sbr.rel (0) target = $region93
    $region92: #{tpu_custom_call.1} parent=1 // pred_region
      %165 = dma.done [#allocation9], 32
    $region93: #{tpu_custom_call.1} parent=1 // pred_fallthru
      _
    // Predicated region
    $region94: #{tpu_custom_call.1} parent=1 // pred_check
      _
    $region95: #{tpu_custom_call.1} parent=1 // pred_check_branch
      %167 = sbr.rel (0) target = $region97
    $region96: #{tpu_custom_call.1} parent=1 // pred_region
      %168 = dma.done [#allocation12], 32
    $region97: #{tpu_custom_call.1} parent=1 // pred_fallthru
      _
    // Predicated region
    $region98: #{tpu_custom_call.1} parent=1 // pred_check
      _
    $region99: #{tpu_custom_call.1} parent=1 // pred_check_branch
      %170 = sbr.rel (0) target = $region101
    $region100: #{tpu_custom_call.1} parent=1 // pred_region
      %171 = dma.done [#allocation12], 32
    $region101: #{tpu_custom_call.1} parent=1 // pred_fallthru
      _
    // Predicated region
    $region102: #{tpu_custom_call.1} parent=1 // pred_check
      _
    $region103: #{tpu_custom_call.1} parent=1 // pred_check_branch
      %173 = sbr.rel (0) target = $region105
    $region104: #{tpu_custom_call.1} parent=1 // pred_region
      %174 = dma.done [#allocation15], 32
    $region105: #{tpu_custom_call.1} parent=1 // pred_fallthru
      _
    // Predicated region
    $region106: #{tpu_custom_call.1} parent=1 // pred_check
      _
    $region107: #{tpu_custom_call.1} parent=1 // pred_check_branch
      %176 = sbr.rel (0) target = $region109
    $region108: #{tpu_custom_call.1} parent=1 // pred_region
      %177 = dma.done [#allocation15], 32
    $region109: #{tpu_custom_call.1} parent=1 // pred_fallthru
      _
    %v179 = vld [vmem:[#allocation2] sm:$0xff]
    %v180 = vld [vmem:[#allocation2 + $0x8] sm:$0xff]
    %v181 = vld [vmem:[%s2] sm:$0x1]
    %v182 = vld [vmem:[#allocation7] sm:$0x1]
    %vm183 = vcmask 261120
    %v184 = vsel %vm183, %v179, 0.0
    %185 = vadd.xlane.f32.xlu0 %v184
    %v186 = vpop.xlane.xlu0 %185
    %v187 = vsel %vm183, %v180, 0.0
    %188 = vadd.xlane.f32.xlu0 %v187
    %v189 = vpop.xlane.xlu0 %188
    %v190 = vrcp.pop 32.0
    %v191 = vmul.f32 %v186, %v190
    %v192 = vmul.f32 %v189, %v190
    %v193 = vsub.f32 %v179, %v191
    %v194 = vsub.f32 %v180, %v192
    %v195 = vmul.f32 %v193, %v193
    %v196 = vmul.f32 %v194, %v194
    %v197 = vsel %vm183, %v195, 0.0
    %198 = vadd.xlane.f32.xlu0 %v197
    %v199 = vpop.xlane.xlu0 %198
    %v200 = vsel %vm183, %v196, 0.0
    %201 = vadd.xlane.f32.xlu0 %v200
    %v202 = vpop.xlane.xlu0 %201
    %v203 = vmul.f32 %v199, %v190
    %v204 = vmul.f32 %v202, %v190
    %v205 = vadd.f32 %v203, 1e-12
    %v206 = vadd.f32 %v204, 1e-12
    %v207 = vrsqrt.pop %v205
    %v208 = vrsqrt.pop %v206
    %v209 = vmul.f32 %v193, %v207
    %v210 = vmul.f32 %v194, %v208
    %v212 = vlaneseq
    %v213 = vshrl.u32 %v212, 7
    %v214 = vsub.s32 0, %v213
    %v215 = vrot.slane %v181, %v214
    %v217 = vmul.f32 %v209, %v215
    %v218 = vmul.f32 %v210, %v215
    %v220 = vlaneseq
    %v221 = vshrl.u32 %v220, 7
    %v222 = vsub.s32 0, %v221
    %v223 = vrot.slane %v182, %v222
    %v225 = vadd.f32 %v217, %v223
    %v226 = vadd.f32 %v218, %v223
    %v227 = vld [vmem:[#allocation5] sm:$0x3]
    %v230 = vunpack.c.l.s4 1966171168
    %v231 = vunpack.c.0.s8 %v230
    %v232 = vlaneseq
    %v233 = vshrl.u32 %v232, 7
    %v234 = vsub.s32 %v231, %v233
    %v235 = vrot.slane %v227, %v234
    %v236 = vcombine.high %v235, %v235
    %v238 = vunpack.c.l.s4 1966171168
    %v239 = vunpack.c.0.s8 %v238
    %v240 = vlaneseq
    %v241 = vshrl.u32 %v240, 7
    %v242 = vsub.s32 %v239, %v241
    %v243 = vrot.slane %v235, %v242
    %v245 = vunpack.c.l.s4 1966171168
    %v246 = vunpack.c.0.s8 %v245
    %v247 = vlaneseq
    %v248 = vshrl.u32 %v247, 7
    %v249 = vsub.s32 %v246, %v248
    %v250 = vrot.slane %v236, %v249
    %v251 = vlaneseq
    %v252 = vshrl.u32 %v251, 7
    %v253 = vsub.s32 0, %v252
    %v254 = vrot.slane %v243, %v253
    %v255 = vlaneseq
    %v256 = vshrl.u32 %v255, 7
    %v257 = vsub.s32 0, %v256
    %v258 = vrot.slane %v250, %v257
    %v261 = vpack.c.bf16 %v226, %v225
    %v262 = vld [vmem:[%s4] sm:$0xff]
    %v263 = vld [vmem:[%s4 + $0x8] sm:$0xf]
    %v264 = vld [vmem:[%s4 + $0xc] sm:$0xff]
    %v265 = vld [vmem:[%s4 + $0x14] sm:$0xf]
    %v266 = vld [vmem:[%s4 + $0x18] sm:$0xff]
    %v267 = vld [vmem:[%s4 + $0x20] sm:$0xf]
    %v268 = vld [vmem:[%s4 + $0x24] sm:$0xff]
    %v269 = vld [vmem:[%s4 + $0x2c] sm:$0xf]
    %v270 = vld [vmem:[#allocation8] sm:$0x7]
    %v272 = vlaneseq
    %v273 = vshrl.u32 %v272, 7
    %v274 = vsub.s32 0, %v273
    %v275 = vrot.slane %v270, %v274
    %v276 = vlaneseq
    %v277 = vshrl.u32 %v276, 7
    %v278 = vsub.s32 1, %v277
    %v279 = vrot.slane %v270, %v278
    %v280 = vlaneseq
    %v281 = vshrl.u32 %v280, 7
    %v282 = vsub.s32 2, %v281
    %v283 = vrot.slane %v270, %v282
    %v295 = vunpack.c.l.b16 %v262
    %v296 = vunpack.c.h.b16 %v262
    %v297 = vunpack.c.l.b16 %v263
    %v298 = vunpack.c.l.b16 %v264
    %v299 = vunpack.c.h.b16 %v264
    %v300 = vunpack.c.l.b16 %v265
    %v301 = vunpack.c.l.b16 %v266
    %v302 = vunpack.c.h.b16 %v266
    %v303 = vunpack.c.l.b16 %v267
    %v304 = vunpack.c.l.b16 %v268
    %v305 = vunpack.c.h.b16 %v268
    %v306 = vunpack.c.l.b16 %v269
    %v307 = vpack.c.b16 %v298, %v295
    %v308 = vpack.c.b16 %v299, %v296
    %v309 = vpack.c.b16 %v300, %v297
    %v310 = vpack.c.b16 %v304, %v301
    %v311 = vpack.c.b16 %v305, %v302
    %v312 = vpack.c.b16 %v306, %v303
    %v320 = vsel %vm183, %v261, 0
    %322 = vmatprep.subr.bf16.mxu0 %v308
    %323 = vmatpush1.bf16.msra.mxu0 %v307
    %324 = vmatprep.subr.bf16.mxu0 %v311
    %325 = vmatpush1.bf16.msra.mxu0 %v310
    %326 = vmatprep.subr.bf16.mxu0 0
    %327 = vmatpush1.bf16.msra.mxu0 0
    %328 = vmatprep.subr.bf16.mxu0 0
    %329 = vmatpush1.bf16.msra.mxu0 0
    %330 = vmatprep.subr.bf16.mxu0 0
    %331 = vmatpush1.bf16.msra.mxu0 0
    %332 = vmatprep.subr.bf16.mxu0 0
    %333 = vmatpush1.bf16.msra.mxu0 0
    %334 = vmatprep.subr.bf16.mxu0 0
    %335 = vmatpush1.bf16.msra.mxu0 0
    %336 = vmatprep.subr.bf16.mxu0 0
    %337 = vmatpush1.bf16.msra.mxu0 0
    %338 = vmatprep.subr.bf16.mxu0 0
    %339 = vmatpush1.bf16.msra.mxu0 0
    %340 = vmatprep.subr.bf16.mxu0 0
    %341 = vmatpush1.bf16.msra.mxu0 0
    %342 = vmatprep.subr.bf16.mxu0 0
    %343 = vmatpush1.bf16.msra.mxu0 0
    %344 = vmatprep.subr.bf16.mxu0 0
    %345 = vmatpush1.bf16.msra.mxu0 0
    %346 = vmatprep.subr.bf16.mxu0 0
    %347 = vmatpush1.bf16.msra.mxu0 0
    %348 = vmatprep.subr.bf16.mxu0 0
    %349 = vmatpush1.bf16.msra.mxu0 0
    %350 = vmatprep.subr.bf16.mxu0 0
    %351 = vmatpush1.bf16.msra.mxu0 0
    %352 = vmatprep.subr.bf16.mxu0 0
    %353 = vmatpush1.bf16.msra.mxu0 0
    %354 = vmatprep.mubr.bf16.mxu0 0
    %355 = vmatmul.mubr.bf16.gmra.mrb[0].mxu0 %v320
    %v356 = vpop.f32.mrb[0].mxu0
    %v357 = vadd.f32 %v275, %v356
    %v358 = vpop.f32.mrb[0].mxu0
    %v359 = vadd.f32 %v279, %v358
    %v360 = vpop.f32.mrb[0].mxu0
    %v361 = vadd.f32 %v275, %v360
    %v362 = vpop.f32.mrb[0].mxu0
    %v363 = vadd.f32 %v279, %v362
    %364 = vdwg.mxu0
    %365 = vmatprep.subr.bf16.mxu0 0
    %366 = vmatpush1.bf16.msra.mxu0 %v309
    %367 = vmatprep.subr.bf16.mxu0 0
    %368 = vmatpush1.bf16.msra.mxu0 %v312
    %369 = vmatprep.subr.bf16.mxu0 0
    %370 = vmatpush1.bf16.msra.mxu0 0
    %371 = vmatprep.subr.bf16.mxu0 0
    %372 = vmatpush1.bf16.msra.mxu0 0
    %373 = vmatprep.subr.bf16.mxu0 0
    %374 = vmatpush1.bf16.msra.mxu0 0
    %375 = vmatprep.subr.bf16.mxu0 0
    %376 = vmatpush1.bf16.msra.mxu0 0
    %377 = vmatprep.subr.bf16.mxu0 0
    %378 = vmatpush1.bf16.msra.mxu0 0
    %379 = vmatprep.subr.bf16.mxu0 0
    %380 = vmatpush1.bf16.msra.mxu0 0
    %381 = vmatprep.subr.bf16.mxu0 0
    %382 = vmatpush1.bf16.msra.mxu0 0
    %383 = vmatprep.subr.bf16.mxu0 0
    %384 = vmatpush1.bf16.msra.mxu0 0
    %385 = vmatprep.subr.bf16.mxu0 0
    %386 = vmatpush1.bf16.msra.mxu0 0
    %387 = vmatprep.subr.bf16.mxu0 0
    %388 = vmatpush1.bf16.msra.mxu0 0
    %389 = vmatprep.subr.bf16.mxu0 0
    %390 = vmatpush1.bf16.msra.mxu0 0
    %391 = vmatprep.subr.bf16.mxu0 0
    %392 = vmatpush1.bf16.msra.mxu0 0
    %393 = vmatprep.subr.bf16.mxu0 0
    %394 = vmatpush1.bf16.msra.mxu0 0
    %395 = vmatprep.subr.bf16.mxu0 0
    %396 = vmatpush1.bf16.msra.mxu0 0
    %397 = vmatprep.mubr.bf16.mxu0 0
    %398 = vmatmul.mubr.bf16.gmra.mrb[0].mxu0 %v320
    %v399 = vpop.f32.mrb[0].mxu0
    %v400 = vadd.f32 %v283, %v399
    %v401 = vpop.f32.mrb[0].mxu0
    %v402 = vpop.f32.mrb[0].mxu0
    %v403 = vadd.f32 %v283, %v402
    %v404 = vpop.f32.mrb[0].mxu0
    %405 = vdwg.mxu0
    %v406 = vpack.c.bf16 %v357, %v357
    %v407 = vpack.c.bf16 %v361, %v361
    %v408 = vpack.c.bf16 %v359, %v359
    %v409 = vpack.c.bf16 %v363, %v363
    %v410 = vpack.c.bf16 %v400, %v400
    %v411 = vpack.c.bf16 %v403, %v403
    %vm412 = vcmask 64512
    %v414 = vsel %vm412, %v406, 0
    %v417 = vsel %vm412, %v408, 0
    %419 = vmatprep.subr.bf16.mxu0 0
    %420 = vmatpush1.bf16.xpose.msra.mxu0 %v417
    %421 = vmatprep.subr.bf16.mxu0 0
    %422 = vmatpush1.bf16.xpose.msra.mxu0 0
    %423 = vmatprep.subr.bf16.mxu0 0
    %424 = vmatpush1.bf16.xpose.msra.mxu0 0
    %425 = vmatprep.subr.bf16.mxu0 0
    %426 = vmatpush1.bf16.xpose.msra.mxu0 0
    %427 = vmatprep.subr.bf16.mxu0 0
    %428 = vmatpush1.bf16.xpose.msra.mxu0 0
    %429 = vmatprep.subr.bf16.mxu0 0
    %430 = vmatpush1.bf16.xpose.msra.mxu0 0
    %431 = vmatprep.subr.bf16.mxu0 0
    %432 = vmatpush1.bf16.xpose.msra.mxu0 0
    %433 = vmatprep.subr.bf16.mxu0 0
    %434 = vmatpush1.bf16.xpose.msra.mxu0 0
    %435 = vmatprep.subr.bf16.mxu0 0
    %436 = vmatpush1.bf16.xpose.msra.mxu0 0
    %437 = vmatprep.subr.bf16.mxu0 0
    %438 = vmatpush1.bf16.xpose.msra.mxu0 0
    %439 = vmatprep.subr.bf16.mxu0 0
    %440 = vmatpush1.bf16.xpose.msra.mxu0 0
    %441 = vmatprep.subr.bf16.mxu0 0
    %442 = vmatpush1.bf16.xpose.msra.mxu0 0
    %443 = vmatprep.subr.bf16.mxu0 0
    %444 = vmatpush1.bf16.xpose.msra.mxu0 0
    %445 = vmatprep.subr.bf16.mxu0 0
    %446 = vmatpush1.bf16.xpose.msra.mxu0 0
    %447 = vmatprep.subr.bf16.mxu0 0
    %448 = vmatpush1.bf16.xpose.msra.mxu0 0
    %449 = vmatprep.subr.bf16.mxu0 0
    %450 = vmatpush1.bf16.xpose.msra.mxu0 0
    %451 = vmatprep.mubr.bf16.mxu0 0
    %452 = vmatmul.mubr.bf16.gmra.mrb[0].mxu0 %v414
    %v453 = vpop.f32.mrb[0].mxu0
    %v454 = vadd.f32 %v254, %v453
    %v455 = vpop.f32.mrb[0].mxu0
    %v456 = vpop.f32.mrb[0].mxu0
    %v457 = vpop.f32.mrb[0].mxu0
    %458 = vdwg.mxu0
    %v460 = vsel %vm412, %v407, 0
    %v463 = vsel %vm412, %v409, 0
    %465 = vmatprep.subr.bf16.mxu0 0
    %466 = vmatpush1.bf16.xpose.msra.mxu0 %v463
    %467 = vmatprep.subr.bf16.mxu0 0
    %468 = vmatpush1.bf16.xpose.msra.mxu0 0
    %469 = vmatprep.subr.bf16.mxu0 0
    %470 = vmatpush1.bf16.xpose.msra.mxu0 0
    %471 = vmatprep.subr.bf16.mxu0 0
    %472 = vmatpush1.bf16.xpose.msra.mxu0 0
    %473 = vmatprep.subr.bf16.mxu0 0
    %474 = vmatpush1.bf16.xpose.msra.mxu0 0
    %475 = vmatprep.subr.bf16.mxu0 0
    %476 = vmatpush1.bf16.xpose.msra.mxu0 0
    %477 = vmatprep.subr.bf16.mxu0 0
    %478 = vmatpush1.bf16.xpose.msra.mxu0 0
    %479 = vmatprep.subr.bf16.mxu0 0
    %480 = vmatpush1.bf16.xpose.msra.mxu0 0
    %481 = vmatprep.subr.bf16.mxu0 0
    %482 = vmatpush1.bf16.xpose.msra.mxu0 0
    %483 = vmatprep.subr.bf16.mxu0 0
    %484 = vmatpush1.bf16.xpose.msra.mxu0 0
    %485 = vmatprep.subr.bf16.mxu0 0
    %486 = vmatpush1.bf16.xpose.msra.mxu0 0
    %487 = vmatprep.subr.bf16.mxu0 0
    %488 = vmatpush1.bf16.xpose.msra.mxu0 0
    %489 = vmatprep.subr.bf16.mxu0 0
    %490 = vmatpush1.bf16.xpose.msra.mxu0 0
    %491 = vmatprep.subr.bf16.mxu0 0
    %492 = vmatpush1.bf16.xpose.msra.mxu0 0
    %493 = vmatprep.subr.bf16.mxu0 0
    %494 = vmatpush1.bf16.xpose.msra.mxu0 0
    %495 = vmatprep.subr.bf16.mxu0 0
    %496 = vmatpush1.bf16.xpose.msra.mxu0 0
    %497 = vmatprep.mubr.bf16.mxu0 0
    %498 = vmatmul.mubr.bf16.gmra.mrb[0].mxu0 %v460
    %v499 = vpop.f32.mrb[0].mxu0
    %v500 = vadd.f32 %v258, %v499
    %v501 = vpop.f32.mrb[0].mxu0
    %v502 = vpop.f32.mrb[0].mxu0
    %v503 = vpop.f32.mrb[0].mxu0
    %504 = vdwg.mxu0
    %v505 = vsel %vm412, %v454, -inf
    %506 = vmax.xlane.f32.xlu0 %v505
    %v507 = vpop.xlane.xlu0 %506
    %v508 = vsel %vm412, %v500, -inf
    %509 = vmax.xlane.f32.xlu0 %v508
    %v510 = vpop.xlane.xlu0 %509
    %v511 = vsub.f32 %v454, %v507
    %v512 = vsub.f32 %v500, %v510
    %v513 = vmul.f32 %v511, 1.442695
    %v514 = vpow.pop %v513
    %v515 = vmul.f32 %v512, 1.442695
    %v516 = vpow.pop %v515
    %v517 = vsel %vm412, %v514, 0.0
    %518 = vadd.xlane.f32.xlu0 %v517
    %v519 = vpop.xlane.xlu0 %518
    %v520 = vsel %vm412, %v516, 0.0
    %521 = vadd.xlane.f32.xlu0 %v520
    %v522 = vpop.xlane.xlu0 %521
    %v523 = vrcp.pop %v519
    %v524 = vrcp.pop %v522
    %v525 = vmul.f32 %v514, %v523
    %v526 = vmul.f32 %v516, %v524
    %v527 = vpack.c.bf16 %v525, %v525
    %v528 = vpack.c.bf16 %v526, %v526
    %v530 = vsel %vm412, %v527, 0
    %vm532 = vcmask 1043456
    %v534 = vsel %vm532, %v410, 0
    %536 = vmatprep.subr.bf16.mxu0 0
    %537 = vmatpush1.bf16.msra.mxu0 %v534
    %538 = vmatprep.subr.bf16.mxu0 0
    %539 = vmatpush1.bf16.msra.mxu0 0
    %540 = vmatprep.subr.bf16.mxu0 0
    %541 = vmatpush1.bf16.msra.mxu0 0
    %542 = vmatprep.subr.bf16.mxu0 0
    %543 = vmatpush1.bf16.msra.mxu0 0
    %544 = vmatprep.subr.bf16.mxu0 0
    %545 = vmatpush1.bf16.msra.mxu0 0
    %546 = vmatprep.subr.bf16.mxu0 0
    %547 = vmatpush1.bf16.msra.mxu0 0
    %548 = vmatprep.subr.bf16.mxu0 0
    %549 = vmatpush1.bf16.msra.mxu0 0
    %550 = vmatprep.subr.bf16.mxu0 0
    %551 = vmatpush1.bf16.msra.mxu0 0
    %552 = vmatprep.subr.bf16.mxu0 0
    %553 = vmatpush1.bf16.msra.mxu0 0
    %554 = vmatprep.subr.bf16.mxu0 0
    %555 = vmatpush1.bf16.msra.mxu0 0
    %556 = vmatprep.subr.bf16.mxu0 0
    %557 = vmatpush1.bf16.msra.mxu0 0
    %558 = vmatprep.subr.bf16.mxu0 0
    %559 = vmatpush1.bf16.msra.mxu0 0
    %560 = vmatprep.subr.bf16.mxu0 0
    %561 = vmatpush1.bf16.msra.mxu0 0
    %562 = vmatprep.subr.bf16.mxu0 0
    %563 = vmatpush1.bf16.msra.mxu0 0
    %564 = vmatprep.subr.bf16.mxu0 0
    %565 = vmatpush1.bf16.msra.mxu0 0
    %566 = vmatprep.subr.bf16.mxu0 0
    %567 = vmatpush1.bf16.msra.mxu0 0
    %568 = vmatprep.mubr.bf16.mxu0 0
    %569 = vmatmul.mubr.bf16.gmra.mrb[0].mxu0 %v530
    %v570 = vpop.f32.mrb[0].mxu0
    %v571 = vadd.f32 0.0, %v570
    %v572 = vpop.f32.mrb[0].mxu0
    %v573 = vpop.f32.mrb[0].mxu0
    %v574 = vpop.f32.mrb[0].mxu0
    %575 = vdwg.mxu0
    %v577 = vsel %vm412, %v528, 0
    %v580 = vsel %vm532, %v411, 0
    %582 = vmatprep.subr.bf16.mxu0 0
    %583 = vmatpush1.bf16.msra.mxu0 %v580
    %584 = vmatprep.subr.bf16.mxu0 0
    %585 = vmatpush1.bf16.msra.mxu0 0
    %586 = vmatprep.subr.bf16.mxu0 0
    %587 = vmatpush1.bf16.msra.mxu0 0
    %588 = vmatprep.subr.bf16.mxu0 0
    %589 = vmatpush1.bf16.msra.mxu0 0
    %590 = vmatprep.subr.bf16.mxu0 0
    %591 = vmatpush1.bf16.msra.mxu0 0
    %592 = vmatprep.subr.bf16.mxu0 0
    %593 = vmatpush1.bf16.msra.mxu0 0
    %594 = vmatprep.subr.bf16.mxu0 0
    %595 = vmatpush1.bf16.msra.mxu0 0
    %596 = vmatprep.subr.bf16.mxu0 0
    %597 = vmatpush1.bf16.msra.mxu0 0
    %598 = vmatprep.subr.bf16.mxu0 0
    %599 = vmatpush1.bf16.msra.mxu0 0
    %600 = vmatprep.subr.bf16.mxu0 0
    %601 = vmatpush1.bf16.msra.mxu0 0
    %602 = vmatprep.subr.bf16.mxu0 0
    %603 = vmatpush1.bf16.msra.mxu0 0
    %604 = vmatprep.subr.bf16.mxu0 0
    %605 = vmatpush1.bf16.msra.mxu0 0
    %606 = vmatprep.subr.bf16.mxu0 0
    %607 = vmatpush1.bf16.msra.mxu0 0
    %608 = vmatprep.subr.bf16.mxu0 0
    %609 = vmatpush1.bf16.msra.mxu0 0
    %610 = vmatprep.subr.bf16.mxu0 0
    %611 = vmatpush1.bf16.msra.mxu0 0
    %612 = vmatprep.subr.bf16.mxu0 0
    %613 = vmatpush1.bf16.msra.mxu0 0
    %614 = vmatprep.mubr.bf16.mxu0 0
    %615 = vmatmul.mubr.bf16.gmra.mrb[0].mxu0 %v577
    %v616 = vpop.f32.mrb[0].mxu0
    %v617 = vadd.f32 0.0, %v616
    %v618 = vpop.f32.mrb[0].mxu0
    %v619 = vpop.f32.mrb[0].mxu0
    %v620 = vpop.f32.mrb[0].mxu0
    %621 = vdwg.mxu0
    %623 = vrot.lane.b32.xlu0 %v406, 120
    %v624 = vpop.permute.xlu0 %623
    %626 = vrot.lane.b32.xlu0 %v408, 120
    %v627 = vpop.permute.xlu0 %626
    %v629 = vsel %vm412, %v624, 0
    %v632 = vsel %vm412, %v627, 0
    %634 = vmatprep.subr.bf16.mxu0 0
    %635 = vmatpush1.bf16.xpose.msra.mxu0 %v632
    %636 = vmatprep.subr.bf16.mxu0 0
    %637 = vmatpush1.bf16.xpose.msra.mxu0 0
    %638 = vmatprep.subr.bf16.mxu0 0
    %639 = vmatpush1.bf16.xpose.msra.mxu0 0
    %640 = vmatprep.subr.bf16.mxu0 0
    %641 = vmatpush1.bf16.xpose.msra.mxu0 0
    %642 = vmatprep.subr.bf16.mxu0 0
    %643 = vmatpush1.bf16.xpose.msra.mxu0 0
    %644 = vmatprep.subr.bf16.mxu0 0
    %645 = vmatpush1.bf16.xpose.msra.mxu0 0
    %646 = vmatprep.subr.bf16.mxu0 0
    %647 = vmatpush1.bf16.xpose.msra.mxu0 0
    %648 = vmatprep.subr.bf16.mxu0 0
    %649 = vmatpush1.bf16.xpose.msra.mxu0 0
    %650 = vmatprep.subr.bf16.mxu0 0
    %651 = vmatpush1.bf16.xpose.msra.mxu0 0
    %652 = vmatprep.subr.bf16.mxu0 0
    %653 = vmatpush1.bf16.xpose.msra.mxu0 0
    %654 = vmatprep.subr.bf16.mxu0 0
    %655 = vmatpush1.bf16.xpose.msra.mxu0 0
    %656 = vmatprep.subr.bf16.mxu0 0
    %657 = vmatpush1.bf16.xpose.msra.mxu0 0
    %658 = vmatprep.subr.bf16.mxu0 0
    %659 = vmatpush1.bf16.xpose.msra.mxu0 0
    %660 = vmatprep.subr.bf16.mxu0 0
    %661 = vmatpush1.bf16.xpose.msra.mxu0 0
    %662 = vmatprep.subr.bf16.mxu0 0
    %663 = vmatpush1.bf16.xpose.msra.mxu0 0
    %664 = vmatprep.subr.bf16.mxu0 0
    %665 = vmatpush1.bf16.xpose.msra.mxu0 0
    %666 = vmatprep.mubr.bf16.mxu0 0
    %667 = vmatmul.mubr.bf16.gmra.mrb[0].mxu0 %v629
    %v668 = vpop.f32.mrb[0].mxu0
    %v669 = vadd.f32 %v254, %v668
    %v670 = vpop.f32.mrb[0].mxu0
    %v671 = vpop.f32.mrb[0].mxu0
    %v672 = vpop.f32.mrb[0].mxu0
    %673 = vdwg.mxu0
    %675 = vrot.lane.b32.xlu0 %v407, 120
    %v676 = vpop.permute.xlu0 %675
    %678 = vrot.lane.b32.xlu0 %v409, 120
    %v679 = vpop.permute.xlu0 %678
    %v681 = vsel %vm412, %v676, 0
    %v684 = vsel %vm412, %v679, 0
    %686 = vmatprep.subr.bf16.mxu0 0
    %687 = vmatpush1.bf16.xpose.msra.mxu0 %v684
    %688 = vmatprep.subr.bf16.mxu0 0
    %689 = vmatpush1.bf16.xpose.msra.mxu0 0
    %690 = vmatprep.subr.bf16.mxu0 0
    %691 = vmatpush1.bf16.xpose.msra.mxu0 0
    %692 = vmatprep.subr.bf16.mxu0 0
    %693 = vmatpush1.bf16.xpose.msra.mxu0 0
    %694 = vmatprep.subr.bf16.mxu0 0
    %695 = vmatpush1.bf16.xpose.msra.mxu0 0
    %696 = vmatprep.subr.bf16.mxu0 0
    %697 = vmatpush1.bf16.xpose.msra.mxu0 0
    %698 = vmatprep.subr.bf16.mxu0 0
    %699 = vmatpush1.bf16.xpose.msra.mxu0 0
    %700 = vmatprep.subr.bf16.mxu0 0
    %701 = vmatpush1.bf16.xpose.msra.mxu0 0
    %702 = vmatprep.subr.bf16.mxu0 0
    %703 = vmatpush1.bf16.xpose.msra.mxu0 0
    %704 = vmatprep.subr.bf16.mxu0 0
    %705 = vmatpush1.bf16.xpose.msra.mxu0 0
    %706 = vmatprep.subr.bf16.mxu0 0
    %707 = vmatpush1.bf16.xpose.msra.mxu0 0
    %708 = vmatprep.subr.bf16.mxu0 0
    %709 = vmatpush1.bf16.xpose.msra.mxu0 0
    %710 = vmatprep.subr.bf16.mxu0 0
    %711 = vmatpush1.bf16.xpose.msra.mxu0 0
    %712 = vmatprep.subr.bf16.mxu0 0
    %713 = vmatpush1.bf16.xpose.msra.mxu0 0
    %714 = vmatprep.subr.bf16.mxu0 0
    %715 = vmatpush1.bf16.xpose.msra.mxu0 0
    %716 = vmatprep.subr.bf16.mxu0 0
    %717 = vmatpush1.bf16.xpose.msra.mxu0 0
    %718 = vmatprep.mubr.bf16.mxu0 0
    %719 = vmatmul.mubr.bf16.gmra.mrb[0].mxu0 %v681
    %v720 = vpop.f32.mrb[0].mxu0
    %v721 = vadd.f32 %v258, %v720
    %v722 = vpop.f32.mrb[0].mxu0
    %v723 = vpop.f32.mrb[0].mxu0
    %v724 = vpop.f32.mrb[0].mxu0
    %725 = vdwg.mxu0
    %v726 = vsel %vm412, %v669, -inf
    %727 = vmax.xlane.f32.xlu0 %v726
    %v728 = vpop.xlane.xlu0 %727
    %v729 = vsel %vm412, %v721, -inf
    %730 = vmax.xlane.f32.xlu0 %v729
    %v731 = vpop.xlane.xlu0 %730
    %v732 = vsub.f32 %v669, %v728
    %v733 = vsub.f32 %v721, %v731
    %v734 = vmul.f32 %v732, 1.442695
    %v735 = vpow.pop %v734
    %v736 = vmul.f32 %v733, 1.442695
    %v737 = vpow.pop %v736
    %v738 = vsel %vm412, %v735, 0.0
    %739 = vadd.xlane.f32.xlu0 %v738
    %v740 = vpop.xlane.xlu0 %739
    %v741 = vsel %vm412, %v737, 0.0
    %742 = vadd.xlane.f32.xlu0 %v741
    %v743 = vpop.xlane.xlu0 %742
    %v744 = vrcp.pop %v740
    %v745 = vrcp.pop %v743
    %v746 = vmul.f32 %v735, %v744
    %v747 = vmul.f32 %v737, %v745
    %v748 = vpack.c.bf16 %v746, %v746
    %v749 = vpack.c.bf16 %v747, %v747
    %751 = vrot.lane.b32.xlu0 %v410, 120
    %v752 = vpop.permute.xlu0 %751
    %v754 = vsel %vm412, %v748, 0
    %v757 = vsel %vm532, %v752, 0
    %759 = vmatprep.subr.bf16.mxu0 0
    %760 = vmatpush1.bf16.msra.mxu0 %v757
    %761 = vmatprep.subr.bf16.mxu0 0
    %762 = vmatpush1.bf16.msra.mxu0 0
    %763 = vmatprep.subr.bf16.mxu0 0
    %764 = vmatpush1.bf16.msra.mxu0 0
    %765 = vmatprep.subr.bf16.mxu0 0
    %766 = vmatpush1.bf16.msra.mxu0 0
    %767 = vmatprep.subr.bf16.mxu0 0
    %768 = vmatpush1.bf16.msra.mxu0 0
    %769 = vmatprep.subr.bf16.mxu0 0
    %770 = vmatpush1.bf16.msra.mxu0 0
    %771 = vmatprep.subr.bf16.mxu0 0
    %772 = vmatpush1.bf16.msra.mxu0 0
    %773 = vmatprep.subr.bf16.mxu0 0
    %774 = vmatpush1.bf16.msra.mxu0 0
    %775 = vmatprep.subr.bf16.mxu0 0
    %776 = vmatpush1.bf16.msra.mxu0 0
    %777 = vmatprep.subr.bf16.mxu0 0
    %778 = vmatpush1.bf16.msra.mxu0 0
    %779 = vmatprep.subr.bf16.mxu0 0
    %780 = vmatpush1.bf16.msra.mxu0 0
    %781 = vmatprep.subr.bf16.mxu0 0
    %782 = vmatpush1.bf16.msra.mxu0 0
    %783 = vmatprep.subr.bf16.mxu0 0
    %784 = vmatpush1.bf16.msra.mxu0 0
    %785 = vmatprep.subr.bf16.mxu0 0
    %786 = vmatpush1.bf16.msra.mxu0 0
    %787 = vmatprep.subr.bf16.mxu0 0
    %788 = vmatpush1.bf16.msra.mxu0 0
    %789 = vmatprep.subr.bf16.mxu0 0
    %790 = vmatpush1.bf16.msra.mxu0 0
    %791 = vmatprep.mubr.bf16.mxu0 0
    %792 = vmatmul.mubr.bf16.gmra.mrb[0].mxu0 %v754
    %v793 = vpop.f32.mrb[0].mxu0
    %v794 = vadd.f32 0.0, %v793
    %v795 = vpop.f32.mrb[0].mxu0
    %v796 = vpop.f32.mrb[0].mxu0
    %v797 = vpop.f32.mrb[0].mxu0
    %798 = vdwg.mxu0
    %800 = vrot.lane.b32.xlu0 %v411, 120
    %v801 = vpop.permute.xlu0 %800
    %v803 = vsel %vm412, %v749, 0
    %v806 = vsel %vm532, %v801, 0
    %808 = vmatprep.subr.bf16.mxu0 0
    %809 = vmatpush1.bf16.msra.mxu0 %v806
    %810 = vmatprep.subr.bf16.mxu0 0
    %811 = vmatpush1.bf16.msra.mxu0 0
    %812 = vmatprep.subr.bf16.mxu0 0
    %813 = vmatpush1.bf16.msra.mxu0 0
    %814 = vmatprep.subr.bf16.mxu0 0
    %815 = vmatpush1.bf16.msra.mxu0 0
    %816 = vmatprep.subr.bf16.mxu0 0
    %817 = vmatpush1.bf16.msra.mxu0 0
    %818 = vmatprep.subr.bf16.mxu0 0
    %819 = vmatpush1.bf16.msra.mxu0 0
    %820 = vmatprep.subr.bf16.mxu0 0
    %821 = vmatpush1.bf16.msra.mxu0 0
    %822 = vmatprep.subr.bf16.mxu0 0
    %823 = vmatpush1.bf16.msra.mxu0 0
    %824 = vmatprep.subr.bf16.mxu0 0
    %825 = vmatpush1.bf16.msra.mxu0 0
    %826 = vmatprep.subr.bf16.mxu0 0
    %827 = vmatpush1.bf16.msra.mxu0 0
    %828 = vmatprep.subr.bf16.mxu0 0
    %829 = vmatpush1.bf16.msra.mxu0 0
    %830 = vmatprep.subr.bf16.mxu0 0
    %831 = vmatpush1.bf16.msra.mxu0 0
    %832 = vmatprep.subr.bf16.mxu0 0
    %833 = vmatpush1.bf16.msra.mxu0 0
    %834 = vmatprep.subr.bf16.mxu0 0
    %835 = vmatpush1.bf16.msra.mxu0 0
    %836 = vmatprep.subr.bf16.mxu0 0
    %837 = vmatpush1.bf16.msra.mxu0 0
    %838 = vmatprep.subr.bf16.mxu0 0
    %839 = vmatpush1.bf16.msra.mxu0 0
    %840 = vmatprep.mubr.bf16.mxu0 0
    %841 = vmatmul.mubr.bf16.gmra.mrb[0].mxu0 %v803
    %v842 = vpop.f32.mrb[0].mxu0
    %v843 = vadd.f32 0.0, %v842
    %v844 = vpop.f32.mrb[0].mxu0
    %v845 = vpop.f32.mrb[0].mxu0
    %v846 = vpop.f32.mrb[0].mxu0
    %847 = vdwg.mxu0
    %848 = vrot.lane.b32.xlu0 %v406, 112
    %v849 = vpop.permute.xlu0 %848
    %850 = vrot.lane.b32.xlu0 %v408, 112
    %v851 = vpop.permute.xlu0 %850
    %v853 = vsel %vm412, %v849, 0
    %v856 = vsel %vm412, %v851, 0
    %858 = vmatprep.subr.bf16.mxu0 0
    %859 = vmatpush1.bf16.xpose.msra.mxu0 %v856
    %860 = vmatprep.subr.bf16.mxu0 0
    %861 = vmatpush1.bf16.xpose.msra.mxu0 0
    %862 = vmatprep.subr.bf16.mxu0 0
    %863 = vmatpush1.bf16.xpose.msra.mxu0 0
    %864 = vmatprep.subr.bf16.mxu0 0
    %865 = vmatpush1.bf16.xpose.msra.mxu0 0
    %866 = vmatprep.subr.bf16.mxu0 0
    %867 = vmatpush1.bf16.xpose.msra.mxu0 0
    %868 = vmatprep.subr.bf16.mxu0 0
    %869 = vmatpush1.bf16.xpose.msra.mxu0 0
    %870 = vmatprep.subr.bf16.mxu0 0
    %871 = vmatpush1.bf16.xpose.msra.mxu0 0
    %872 = vmatprep.subr.bf16.mxu0 0
    %873 = vmatpush1.bf16.xpose.msra.mxu0 0
    %874 = vmatprep.subr.bf16.mxu0 0
    %875 = vmatpush1.bf16.xpose.msra.mxu0 0
    %876 = vmatprep.subr.bf16.mxu0 0
    %877 = vmatpush1.bf16.xpose.msra.mxu0 0
    %878 = vmatprep.subr.bf16.mxu0 0
    %879 = vmatpush1.bf16.xpose.msra.mxu0 0
    %880 = vmatprep.subr.bf16.mxu0 0
    %881 = vmatpush1.bf16.xpose.msra.mxu0 0
    %882 = vmatprep.subr.bf16.mxu0 0
    %883 = vmatpush1.bf16.xpose.msra.mxu0 0
    %884 = vmatprep.subr.bf16.mxu0 0
    %885 = vmatpush1.bf16.xpose.msra.mxu0 0
    %886 = vmatprep.subr.bf16.mxu0 0
    %887 = vmatpush1.bf16.xpose.msra.mxu0 0
    %888 = vmatprep.subr.bf16.mxu0 0
    %889 = vmatpush1.bf16.xpose.msra.mxu0 0
    %890 = vmatprep.mubr.bf16.mxu0 0
    %891 = vmatmul.mubr.bf16.gmra.mrb[0].mxu0 %v853
    %v892 = vpop.f32.mrb[0].mxu0
    %v893 = vadd.f32 %v254, %v892
    %v894 = vpop.f32.mrb[0].mxu0
    %v895 = vpop.f32.mrb[0].mxu0
    %v896 = vpop.f32.mrb[0].mxu0
    %897 = vdwg.mxu0
    %898 = vrot.lane.b32.xlu0 %v407, 112
    %v899 = vpop.permute.xlu0 %898
    %900 = vrot.lane.b32.xlu0 %v409, 112
    %v901 = vpop.permute.xlu0 %900
    %v903 = vsel %vm412, %v899, 0
    %v906 = vsel %vm412, %v901, 0
    %908 = vmatprep.subr.bf16.mxu0 0
    %909 = vmatpush1.bf16.xpose.msra.mxu0 %v906
    %910 = vmatprep.subr.bf16.mxu0 0
    %911 = vmatpush1.bf16.xpose.msra.mxu0 0
    %912 = vmatprep.subr.bf16.mxu0 0
    %913 = vmatpush1.bf16.xpose.msra.mxu0 0
    %914 = vmatprep.subr.bf16.mxu0 0
    %915 = vmatpush1.bf16.xpose.msra.mxu0 0
    %916 = vmatprep.subr.bf16.mxu0 0
    %917 = vmatpush1.bf16.xpose.msra.mxu0 0
    %918 = vmatprep.subr.bf16.mxu0 0
    %919 = vmatpush1.bf16.xpose.msra.mxu0 0
    %920 = vmatprep.subr.bf16.mxu0 0
    %921 = vmatpush1.bf16.xpose.msra.mxu0 0
    %922 = vmatprep.subr.bf16.mxu0 0
    %923 = vmatpush1.bf16.xpose.msra.mxu0 0
    %924 = vmatprep.subr.bf16.mxu0 0
    %925 = vmatpush1.bf16.xpose.msra.mxu0 0
    %926 = vmatprep.subr.bf16.mxu0 0
    %927 = vmatpush1.bf16.xpose.msra.mxu0 0
    %928 = vmatprep.subr.bf16.mxu0 0
    %929 = vmatpush1.bf16.xpose.msra.mxu0 0
    %930 = vmatprep.subr.bf16.mxu0 0
    %931 = vmatpush1.bf16.xpose.msra.mxu0 0
    %932 = vmatprep.subr.bf16.mxu0 0
    %933 = vmatpush1.bf16.xpose.msra.mxu0 0
    %934 = vmatprep.subr.bf16.mxu0 0
    %935 = vmatpush1.bf16.xpose.msra.mxu0 0
    %936 = vmatprep.subr.bf16.mxu0 0
    %937 = vmatpush1.bf16.xpose.msra.mxu0 0
    %938 = vmatprep.subr.bf16.mxu0 0
    %939 = vmatpush1.bf16.xpose.msra.mxu0 0
    %940 = vmatprep.mubr.bf16.mxu0 0
    %941 = vmatmul.mubr.bf16.gmra.mrb[0].mxu0 %v903
    %v942 = vpop.f32.mrb[0].mxu0
    %v943 = vadd.f32 %v258, %v942
    %v944 = vpop.f32.mrb[0].mxu0
    %v945 = vpop.f32.mrb[0].mxu0
    %v946 = vpop.f32.mrb[0].mxu0
    %947 = vdwg.mxu0
    %v948 = vsel %vm412, %v893, -inf
    %949 = vmax.xlane.f32.xlu0 %v948
    %v950 = vpop.xlane.xlu0 %949
    %v951 = vsel %vm412, %v943, -inf
    %952 = vmax.xlane.f32.xlu0 %v951
    %v953 = vpop.xlane.xlu0 %952
    %v954 = vsub.f32 %v893, %v950
    %v955 = vsub.f32 %v943, %v953
    %v956 = vmul.f32 %v954, 1.442695
    %v957 = vpow.pop %v956
    %v958 = vmul.f32 %v955, 1.442695
    %v959 = vpow.pop %v958
    %v960 = vsel %vm412, %v957, 0.0
    %961 = vadd.xlane.f32.xlu0 %v960
    %v962 = vpop.xlane.xlu0 %961
    %v963 = vsel %vm412, %v959, 0.0
    %964 = vadd.xlane.f32.xlu0 %v963
    %v965 = vpop.xlane.xlu0 %964
    %v966 = vrcp.pop %v962
    %v967 = vrcp.pop %v965
    %v968 = vmul.f32 %v957, %v966
    %v969 = vmul.f32 %v959, %v967
    %v970 = vpack.c.bf16 %v968, %v968
    %v971 = vpack.c.bf16 %v969, %v969
    %972 = vrot.lane.b32.xlu0 %v410, 112
    %v973 = vpop.permute.xlu0 %972
    %v975 = vsel %vm412, %v970, 0
    %v978 = vsel %vm532, %v973, 0
    %980 = vmatprep.subr.bf16.mxu0 0
    %981 = vmatpush1.bf16.msra.mxu0 %v978
    %982 = vmatprep.subr.bf16.mxu0 0
    %983 = vmatpush1.bf16.msra.mxu0 0
    %984 = vmatprep.subr.bf16.mxu0 0
    %985 = vmatpush1.bf16.msra.mxu0 0
    %986 = vmatprep.subr.bf16.mxu0 0
    %987 = vmatpush1.bf16.msra.mxu0 0
    %988 = vmatprep.subr.bf16.mxu0 0
    %989 = vmatpush1.bf16.msra.mxu0 0
    %990 = vmatprep.subr.bf16.mxu0 0
    %991 = vmatpush1.bf16.msra.mxu0 0
    %992 = vmatprep.subr.bf16.mxu0 0
    %993 = vmatpush1.bf16.msra.mxu0 0
    %994 = vmatprep.subr.bf16.mxu0 0
    %995 = vmatpush1.bf16.msra.mxu0 0
    %996 = vmatprep.subr.bf16.mxu0 0
    %997 = vmatpush1.bf16.msra.mxu0 0
    %998 = vmatprep.subr.bf16.mxu0 0
    %999 = vmatpush1.bf16.msra.mxu0 0
    %1000 = vmatprep.subr.bf16.mxu0 0
    %1001 = vmatpush1.bf16.msra.mxu0 0
    %1002 = vmatprep.subr.bf16.mxu0 0
    %1003 = vmatpush1.bf16.msra.mxu0 0
    %1004 = vmatprep.subr.bf16.mxu0 0
    %1005 = vmatpush1.bf16.msra.mxu0 0
    %1006 = vmatprep.subr.bf16.mxu0 0
    %1007 = vmatpush1.bf16.msra.mxu0 0
    %1008 = vmatprep.subr.bf16.mxu0 0
    %1009 = vmatpush1.bf16.msra.mxu0 0
    %1010 = vmatprep.subr.bf16.mxu0 0
    %1011 = vmatpush1.bf16.msra.mxu0 0
    %1012 = vmatprep.mubr.bf16.mxu0 0
    %1013 = vmatmul.mubr.bf16.gmra.mrb[0].mxu0 %v975
    %v1014 = vpop.f32.mrb[0].mxu0
    %v1015 = vadd.f32 0.0, %v1014
    %v1016 = vpop.f32.mrb[0].mxu0
    %v1017 = vpop.f32.mrb[0].mxu0
    %v1018 = vpop.f32.mrb[0].mxu0
    %1019 = vdwg.mxu0
    %1020 = vrot.lane.b32.xlu0 %v411, 112
    %v1021 = vpop.permute.xlu0 %1020
    %v1023 = vsel %vm412, %v971, 0
    %v1026 = vsel %vm532, %v1021, 0
    %1028 = vmatprep.subr.bf16.mxu0 0
    %1029 = vmatpush1.bf16.msra.mxu0 %v1026
    %1030 = vmatprep.subr.bf16.mxu0 0
    %1031 = vmatpush1.bf16.msra.mxu0 0
    %1032 = vmatprep.subr.bf16.mxu0 0
    %1033 = vmatpush1.bf16.msra.mxu0 0
    %1034 = vmatprep.subr.bf16.mxu0 0
    %1035 = vmatpush1.bf16.msra.mxu0 0
    %1036 = vmatprep.subr.bf16.mxu0 0
    %1037 = vmatpush1.bf16.msra.mxu0 0
    %1038 = vmatprep.subr.bf16.mxu0 0
    %1039 = vmatpush1.bf16.msra.mxu0 0
    %1040 = vmatprep.subr.bf16.mxu0 0
    %1041 = vmatpush1.bf16.msra.mxu0 0
    %1042 = vmatprep.subr.bf16.mxu0 0
    %1043 = vmatpush1.bf16.msra.mxu0 0
    %1044 = vmatprep.subr.bf16.mxu0 0
    %1045 = vmatpush1.bf16.msra.mxu0 0
    %1046 = vmatprep.subr.bf16.mxu0 0
    %1047 = vmatpush1.bf16.msra.mxu0 0
    %1048 = vmatprep.subr.bf16.mxu0 0
    %1049 = vmatpush1.bf16.msra.mxu0 0
    %1050 = vmatprep.subr.bf16.mxu0 0
    %1051 = vmatpush1.bf16.msra.mxu0 0
    %1052 = vmatprep.subr.bf16.mxu0 0
    %1053 = vmatpush1.bf16.msra.mxu0 0
    %1054 = vmatprep.subr.bf16.mxu0 0
    %1055 = vmatpush1.bf16.msra.mxu0 0
    %1056 = vmatprep.subr.bf16.mxu0 0
    %1057 = vmatpush1.bf16.msra.mxu0 0
    %1058 = vmatprep.subr.bf16.mxu0 0
    %1059 = vmatpush1.bf16.msra.mxu0 0
    %1060 = vmatprep.mubr.bf16.mxu0 0
    %1061 = vmatmul.mubr.bf16.gmra.mrb[0].mxu0 %v1023
    %v1062 = vpop.f32.mrb[0].mxu0
    %v1063 = vadd.f32 0.0, %v1062
    %v1064 = vpop.f32.mrb[0].mxu0
    %v1065 = vpop.f32.mrb[0].mxu0
    %v1066 = vpop.f32.mrb[0].mxu0
    %1067 = vdwg.mxu0
    %1068 = vrot.lane.b32.xlu0 %v406, 104
    %v1069 = vpop.permute.xlu0 %1068
    %1070 = vrot.lane.b32.xlu0 %v408, 104
    %v1071 = vpop.permute.xlu0 %1070
    %v1073 = vsel %vm412, %v1069, 0
    %v1076 = vsel %vm412, %v1071, 0
    %1078 = vmatprep.subr.bf16.mxu0 0
    %1079 = vmatpush1.bf16.xpose.msra.mxu0 %v1076
    %1080 = vmatprep.subr.bf16.mxu0 0
    %1081 = vmatpush1.bf16.xpose.msra.mxu0 0
    %1082 = vmatprep.subr.bf16.mxu0 0
    %1083 = vmatpush1.bf16.xpose.msra.mxu0 0
    %1084 = vmatprep.subr.bf16.mxu0 0
    %1085 = vmatpush1.bf16.xpose.msra.mxu0 0
    %1086 = vmatprep.subr.bf16.mxu0 0
    %1087 = vmatpush1.bf16.xpose.msra.mxu0 0
    %1088 = vmatprep.subr.bf16.mxu0 0
    %1089 = vmatpush1.bf16.xpose.msra.mxu0 0
    %1090 = vmatprep.subr.bf16.mxu0 0
    %1091 = vmatpush1.bf16.xpose.msra.mxu0 0
    %1092 = vmatprep.subr.bf16.mxu0 0
    %1093 = vmatpush1.bf16.xpose.msra.mxu0 0
    %1094 = vmatprep.subr.bf16.mxu0 0
    %1095 = vmatpush1.bf16.xpose.msra.mxu0 0
    %1096 = vmatprep.subr.bf16.mxu0 0
    %1097 = vmatpush1.bf16.xpose.msra.mxu0 0
    %1098 = vmatprep.subr.bf16.mxu0 0
    %1099 = vmatpush1.bf16.xpose.msra.mxu0 0
    %1100 = vmatprep.subr.bf16.mxu0 0
    %1101 = vmatpush1.bf16.xpose.msra.mxu0 0
    %1102 = vmatprep.subr.bf16.mxu0 0
    %1103 = vmatpush1.bf16.xpose.msra.mxu0 0
    %1104 = vmatprep.subr.bf16.mxu0 0
    %1105 = vmatpush1.bf16.xpose.msra.mxu0 0
    %1106 = vmatprep.subr.bf16.mxu0 0
    %1107 = vmatpush1.bf16.xpose.msra.mxu0 0
    %1108 = vmatprep.subr.bf16.mxu0 0
    %1109 = vmatpush1.bf16.xpose.msra.mxu0 0
    %1110 = vmatprep.mubr.bf16.mxu0 0
    %1111 = vmatmul.mubr.bf16.gmra.mrb[0].mxu0 %v1073
    %v1112 = vpop.f32.mrb[0].mxu0
    %v1113 = vadd.f32 %v254, %v1112
    %v1114 = vpop.f32.mrb[0].mxu0
    %v1115 = vpop.f32.mrb[0].mxu0
    %v1116 = vpop.f32.mrb[0].mxu0
    %1117 = vdwg.mxu0
    %1118 = vrot.lane.b32.xlu0 %v407, 104
    %v1119 = vpop.permute.xlu0 %1118
    %1120 = vrot.lane.b32.xlu0 %v409, 104
    %v1121 = vpop.permute.xlu0 %1120
    %v1123 = vsel %vm412, %v1119, 0
    %v1126 = vsel %vm412, %v1121, 0
    %1128 = vmatprep.subr.bf16.mxu0 0
    %1129 = vmatpush1.bf16.xpose.msra.mxu0 %v1126
    %1130 = vmatprep.subr.bf16.mxu0 0
    %1131 = vmatpush1.bf16.xpose.msra.mxu0 0
    %1132 = vmatprep.subr.bf16.mxu0 0
    %1133 = vmatpush1.bf16.xpose.msra.mxu0 0
    %1134 = vmatprep.subr.bf16.mxu0 0
    %1135 = vmatpush1.bf16.xpose.msra.mxu0 0
    %1136 = vmatprep.subr.bf16.mxu0 0
    %1137 = vmatpush1.bf16.xpose.msra.mxu0 0
    %1138 = vmatprep.subr.bf16.mxu0 0
    %1139 = vmatpush1.bf16.xpose.msra.mxu0 0
    %1140 = vmatprep.subr.bf16.mxu0 0
    %1141 = vmatpush1.bf16.xpose.msra.mxu0 0
    %1142 = vmatprep.subr.bf16.mxu0 0
    %1143 = vmatpush1.bf16.xpose.msra.mxu0 0
    %1144 = vmatprep.subr.bf16.mxu0 0
    %1145 = vmatpush1.bf16.xpose.msra.mxu0 0
    %1146 = vmatprep.subr.bf16.mxu0 0
    %1147 = vmatpush1.bf16.xpose.msra.mxu0 0
    %1148 = vmatprep.subr.bf16.mxu0 0
    %1149 = vmatpush1.bf16.xpose.msra.mxu0 0
    %1150 = vmatprep.subr.bf16.mxu0 0
    %1151 = vmatpush1.bf16.xpose.msra.mxu0 0
    %1152 = vmatprep.subr.bf16.mxu0 0
    %1153 = vmatpush1.bf16.xpose.msra.mxu0 0
    %1154 = vmatprep.subr.bf16.mxu0 0
    %1155 = vmatpush1.bf16.xpose.msra.mxu0 0
    %1156 = vmatprep.subr.bf16.mxu0 0
    %1157 = vmatpush1.bf16.xpose.msra.mxu0 0
    %1158 = vmatprep.subr.bf16.mxu0 0
    %1159 = vmatpush1.bf16.xpose.msra.mxu0 0
    %1160 = vmatprep.mubr.bf16.mxu0 0
    %1161 = vmatmul.mubr.bf16.gmra.mrb[0].mxu0 %v1123
    %v1162 = vpop.f32.mrb[0].mxu0
    %v1163 = vadd.f32 %v258, %v1162
    %v1164 = vpop.f32.mrb[0].mxu0
    %v1165 = vpop.f32.mrb[0].mxu0
    %v1166 = vpop.f32.mrb[0].mxu0
    %1167 = vdwg.mxu0
    %v1168 = vsel %vm412, %v1113, -inf
    %1169 = vmax.xlane.f32.xlu0 %v1168
    %v1170 = vpop.xlane.xlu0 %1169
    %v1171 = vsel %vm412, %v1163, -inf
    %1172 = vmax.xlane.f32.xlu0 %v1171
    %v1173 = vpop.xlane.xlu0 %1172
    %v1174 = vsub.f32 %v1113, %v1170
    %v1175 = vsub.f32 %v1163, %v1173
    %v1176 = vmul.f32 %v1174, 1.442695
    %v1177 = vpow.pop %v1176
    %v1178 = vmul.f32 %v1175, 1.442695
    %v1179 = vpow.pop %v1178
    %v1180 = vsel %vm412, %v1177, 0.0
    %1181 = vadd.xlane.f32.xlu0 %v1180
    %v1182 = vpop.xlane.xlu0 %1181
    %v1183 = vsel %vm412, %v1179, 0.0
    %1184 = vadd.xlane.f32.xlu0 %v1183
    %v1185 = vpop.xlane.xlu0 %1184
    %v1186 = vrcp.pop %v1182
    %v1187 = vrcp.pop %v1185
    %v1188 = vmul.f32 %v1177, %v1186
    %v1189 = vmul.f32 %v1179, %v1187
    %v1190 = vpack.c.bf16 %v1188, %v1188
    %v1191 = vpack.c.bf16 %v1189, %v1189
    %1192 = vrot.lane.b32.xlu0 %v410, 104
    %v1193 = vpop.permute.xlu0 %1192
    %v1195 = vsel %vm412, %v1190, 0
    %v1198 = vsel %vm532, %v1193, 0
    %1200 = vmatprep.subr.bf16.mxu0 0
    %1201 = vmatpush1.bf16.msra.mxu0 %v1198
    %1202 = vmatprep.subr.bf16.mxu0 0
    %1203 = vmatpush1.bf16.msra.mxu0 0
    %1204 = vmatprep.subr.bf16.mxu0 0
    %1205 = vmatpush1.bf16.msra.mxu0 0
    %1206 = vmatprep.subr.bf16.mxu0 0
    %1207 = vmatpush1.bf16.msra.mxu0 0
    %1208 = vmatprep.subr.bf16.mxu0 0
    %1209 = vmatpush1.bf16.msra.mxu0 0
    %1210 = vmatprep.subr.bf16.mxu0 0
    %1211 = vmatpush1.bf16.msra.mxu0 0
    %1212 = vmatprep.subr.bf16.mxu0 0
    %1213 = vmatpush1.bf16.msra.mxu0 0
    %1214 = vmatprep.subr.bf16.mxu0 0
    %1215 = vmatpush1.bf16.msra.mxu0 0
    %1216 = vmatprep.subr.bf16.mxu0 0
    %1217 = vmatpush1.bf16.msra.mxu0 0
    %1218 = vmatprep.subr.bf16.mxu0 0
    %1219 = vmatpush1.bf16.msra.mxu0 0
    %1220 = vmatprep.subr.bf16.mxu0 0
    %1221 = vmatpush1.bf16.msra.mxu0 0
    %1222 = vmatprep.subr.bf16.mxu0 0
    %1223 = vmatpush1.bf16.msra.mxu0 0
    %1224 = vmatprep.subr.bf16.mxu0 0
    %1225 = vmatpush1.bf16.msra.mxu0 0
    %1226 = vmatprep.subr.bf16.mxu0 0
    %1227 = vmatpush1.bf16.msra.mxu0 0
    %1228 = vmatprep.subr.bf16.mxu0 0
    %1229 = vmatpush1.bf16.msra.mxu0 0
    %1230 = vmatprep.subr.bf16.mxu0 0
    %1231 = vmatpush1.bf16.msra.mxu0 0
    %1232 = vmatprep.mubr.bf16.mxu0 0
    %1233 = vmatmul.mubr.bf16.gmra.mrb[0].mxu0 %v1195
    %v1234 = vpop.f32.mrb[0].mxu0
    %v1235 = vadd.f32 0.0, %v1234
    %v1236 = vpop.f32.mrb[0].mxu0
    %v1237 = vpop.f32.mrb[0].mxu0
    %v1238 = vpop.f32.mrb[0].mxu0
    %1239 = vdwg.mxu0
    %1240 = vrot.lane.b32.xlu0 %v411, 104
    %v1241 = vpop.permute.xlu0 %1240
    %v1243 = vsel %vm412, %v1191, 0
    %v1246 = vsel %vm532, %v1241, 0
    %1248 = vmatprep.subr.bf16.mxu0 0
    %1249 = vmatpush1.bf16.msra.mxu0 %v1246
    %1250 = vmatprep.subr.bf16.mxu0 0
    %1251 = vmatpush1.bf16.msra.mxu0 0
    %1252 = vmatprep.subr.bf16.mxu0 0
    %1253 = vmatpush1.bf16.msra.mxu0 0
    %1254 = vmatprep.subr.bf16.mxu0 0
    %1255 = vmatpush1.bf16.msra.mxu0 0
    %1256 = vmatprep.subr.bf16.mxu0 0
    %1257 = vmatpush1.bf16.msra.mxu0 0
    %1258 = vmatprep.subr.bf16.mxu0 0
    %1259 = vmatpush1.bf16.msra.mxu0 0
    %1260 = vmatprep.subr.bf16.mxu0 0
    %1261 = vmatpush1.bf16.msra.mxu0 0
    %1262 = vmatprep.subr.bf16.mxu0 0
    %1263 = vmatpush1.bf16.msra.mxu0 0
    %1264 = vmatprep.subr.bf16.mxu0 0
    %1265 = vmatpush1.bf16.msra.mxu0 0
    %1266 = vmatprep.subr.bf16.mxu0 0
    %1267 = vmatpush1.bf16.msra.mxu0 0
    %1268 = vmatprep.subr.bf16.mxu0 0
    %1269 = vmatpush1.bf16.msra.mxu0 0
    %1270 = vmatprep.subr.bf16.mxu0 0
    %1271 = vmatpush1.bf16.msra.mxu0 0
    %1272 = vmatprep.subr.bf16.mxu0 0
    %1273 = vmatpush1.bf16.msra.mxu0 0
    %1274 = vmatprep.subr.bf16.mxu0 0
    %1275 = vmatpush1.bf16.msra.mxu0 0
    %1276 = vmatprep.subr.bf16.mxu0 0
    %1277 = vmatpush1.bf16.msra.mxu0 0
    %1278 = vmatprep.subr.bf16.mxu0 0
    %1279 = vmatpush1.bf16.msra.mxu0 0
    %1280 = vmatprep.mubr.bf16.mxu0 0
    %1281 = vmatmul.mubr.bf16.gmra.mrb[0].mxu0 %v1243
    %v1282 = vpop.f32.mrb[0].mxu0
    %v1283 = vadd.f32 0.0, %v1282
    %v1284 = vpop.f32.mrb[0].mxu0
    %v1285 = vpop.f32.mrb[0].mxu0
    %v1286 = vpop.f32.mrb[0].mxu0
    %1287 = vdwg.mxu0
    %1290 = vrot.lane.b32.xlu0 %v794, 8
    %v1291 = vpop.permute.xlu0 %1290
    %1292 = vrot.lane.b32.xlu0 %v843, 8
    %v1293 = vpop.permute.xlu0 %1292
    %1298 = vrot.lane.b32.xlu0 %v1015, 16
    %v1299 = vpop.permute.xlu0 %1298
    %1300 = vrot.lane.b32.xlu0 %v1063, 16
    %v1301 = vpop.permute.xlu0 %1300
    %1306 = vrot.lane.b32.xlu0 %v1235, 24
    %v1307 = vpop.permute.xlu0 %1306
    %1308 = vrot.lane.b32.xlu0 %v1283, 24
    %v1309 = vpop.permute.xlu0 %1308
    %v1312 = vsel %vm412, %v571, %v1291
    %v1313 = vsel %vm412, %v617, %v1293
    %vm1314 = vcmask 130048
    %v1315 = vsel %vm1314, %v1312, %v1299
    %v1316 = vsel %vm1314, %v1313, %v1301
    %vm1317 = vcmask 195584
    %v1318 = vsel %vm1317, %v1315, %v1307
    %v1319 = vsel %vm1317, %v1316, %v1309
    %v1320 = vpack.c.bf16 %v1319, %v1318
    %v1321 = vld [vmem:[%s6] sm:$0xf]
    %v1322 = vld [vmem:[%s6 + $0x4] sm:$0xf]
    %v1323 = vld [vmem:[%s6 + $0x8] sm:$0xf]
    %v1324 = vld [vmem:[%s6 + $0xc] sm:$0xf]
    %v1325 = vld [vmem:[#allocation10] sm:$0x1]
    %v1327 = vlaneseq
    %v1328 = vshrl.u32 %v1327, 7
    %v1329 = vsub.s32 0, %v1328
    %v1330 = vrot.slane %v1325, %v1329
    %v1336 = vunpack.c.l.b16 %v1321
    %v1337 = vunpack.c.l.b16 %v1322
    %v1338 = vunpack.c.l.b16 %v1323
    %v1339 = vunpack.c.l.b16 %v1324
    %v1340 = vpack.c.b16 %v1337, %v1336
    %v1341 = vpack.c.b16 %v1339, %v1338
    %v1345 = vsel %vm183, %v1320, 0
    %1347 = vmatprep.subr.bf16.mxu0 0
    %1348 = vmatpush1.bf16.msra.mxu0 %v1340
    %1349 = vmatprep.subr.bf16.mxu0 0
    %1350 = vmatpush1.bf16.msra.mxu0 %v1341
    %1351 = vmatprep.subr.bf16.mxu0 0
    %1352 = vmatpush1.bf16.msra.mxu0 0
    %1353 = vmatprep.subr.bf16.mxu0 0
    %1354 = vmatpush1.bf16.msra.mxu0 0
    %1355 = vmatprep.subr.bf16.mxu0 0
    %1356 = vmatpush1.bf16.msra.mxu0 0
    %1357 = vmatprep.subr.bf16.mxu0 0
    %1358 = vmatpush1.bf16.msra.mxu0 0
    %1359 = vmatprep.subr.bf16.mxu0 0
    %1360 = vmatpush1.bf16.msra.mxu0 0
    %1361 = vmatprep.subr.bf16.mxu0 0
    %1362 = vmatpush1.bf16.msra.mxu0 0
    %1363 = vmatprep.subr.bf16.mxu0 0
    %1364 = vmatpush1.bf16.msra.mxu0 0
    %1365 = vmatprep.subr.bf16.mxu0 0
    %1366 = vmatpush1.bf16.msra.mxu0 0
    %1367 = vmatprep.subr.bf16.mxu0 0
    %1368 = vmatpush1.bf16.msra.mxu0 0
    %1369 = vmatprep.subr.bf16.mxu0 0
    %1370 = vmatpush1.bf16.msra.mxu0 0
    %1371 = vmatprep.subr.bf16.mxu0 0
    %1372 = vmatpush1.bf16.msra.mxu0 0
    %1373 = vmatprep.subr.bf16.mxu0 0
    %1374 = vmatpush1.bf16.msra.mxu0 0
    %1375 = vmatprep.subr.bf16.mxu0 0
    %1376 = vmatpush1.bf16.msra.mxu0 0
    %1377 = vmatprep.subr.bf16.mxu0 0
    %1378 = vmatpush1.bf16.msra.mxu0 0
    %1379 = vmatprep.mubr.bf16.mxu0 0
    %1380 = vmatmul.mubr.bf16.gmra.mrb[0].mxu0 %v1345
    %v1381 = vpop.f32.mrb[0].mxu0
    %v1382 = vadd.f32 %v1330, %v1381
    %v1383 = vpop.f32.mrb[0].mxu0
    %v1384 = vpop.f32.mrb[0].mxu0
    %v1385 = vadd.f32 %v1330, %v1384
    %v1386 = vpop.f32.mrb[0].mxu0
    %1387 = vdwg.mxu0
    %v1388 = vadd.f32 %v225, %v1382
    %v1389 = vadd.f32 %v226, %v1385
    %v1390 = vld [vmem:[#allocation11] sm:$0x1]
    %v1391 = vld [vmem:[#allocation13] sm:$0x1]
    %v1392 = vsel %vm183, %v1388, 0.0
    %1393 = vadd.xlane.f32.xlu0 %v1392
    %v1394 = vpop.xlane.xlu0 %1393
    %v1395 = vsel %vm183, %v1389, 0.0
    %1396 = vadd.xlane.f32.xlu0 %v1395
    %v1397 = vpop.xlane.xlu0 %1396
    %v1398 = vmul.f32 %v1394, %v190
    %v1399 = vmul.f32 %v1397, %v190
    %v1400 = vsub.f32 %v1388, %v1398
    %v1401 = vsub.f32 %v1389, %v1399
    %v1402 = vmul.f32 %v1400, %v1400
    %v1403 = vmul.f32 %v1401, %v1401
    %v1404 = vsel %vm183, %v1402, 0.0
    %1405 = vadd.xlane.f32.xlu0 %v1404
    %v1406 = vpop.xlane.xlu0 %1405
    %v1407 = vsel %vm183, %v1403, 0.0
    %1408 = vadd.xlane.f32.xlu0 %v1407
    %v1409 = vpop.xlane.xlu0 %1408
    %v1410 = vmul.f32 %v1406, %v190
    %v1411 = vmul.f32 %v1409, %v190
    %v1412 = vadd.f32 %v1410, 1e-12
    %v1413 = vadd.f32 %v1411, 1e-12
    %v1414 = vrsqrt.pop %v1412
    %v1415 = vrsqrt.pop %v1413
    %v1416 = vmul.f32 %v1400, %v1414
    %v1417 = vmul.f32 %v1401, %v1415
    %v1419 = vlaneseq
    %v1420 = vshrl.u32 %v1419, 7
    %v1421 = vsub.s32 0, %v1420
    %v1422 = vrot.slane %v1390, %v1421
    %v1424 = vmul.f32 %v1416, %v1422
    %v1425 = vmul.f32 %v1417, %v1422
    %v1427 = vlaneseq
    %v1428 = vshrl.u32 %v1427, 7
    %v1429 = vsub.s32 0, %v1428
    %v1430 = vrot.slane %v1391, %v1429
    %v1432 = vadd.f32 %v1424, %v1430
    %v1433 = vadd.f32 %v1425, %v1430
    %v1434 = vpack.c.bf16 %v1433, %v1432
    %v1435 = vld [vmem:[%s10] sm:$0xf]
    %v1436 = vld [vmem:[%s10 + $0x4] sm:$0xf]
    %v1437 = vld [vmem:[%s10 + $0x8] sm:$0xf]
    %v1438 = vld [vmem:[%s10 + $0xc] sm:$0xf]
    %v1439 = vld [vmem:[#allocation14] sm:$0x1]
    %v1441 = vlaneseq
    %v1442 = vshrl.u32 %v1441, 7
    %v1443 = vsub.s32 0, %v1442
    %v1444 = vrot.slane %v1439, %v1443
    %v1450 = vunpack.c.l.b16 %v1435
    %v1451 = vunpack.c.l.b16 %v1436
    %v1452 = vunpack.c.l.b16 %v1437
    %v1453 = vunpack.c.l.b16 %v1438
    %v1454 = vpack.c.b16 %v1451, %v1450
    %v1455 = vpack.c.b16 %v1453, %v1452
    %v1459 = vsel %vm183, %v1434, 0
    %1461 = vmatprep.subr.bf16.mxu0 0
    %1462 = vmatpush1.bf16.msra.mxu0 %v1454
    %1463 = vmatprep.subr.bf16.mxu0 0
    %1464 = vmatpush1.bf16.msra.mxu0 %v1455
    %1465 = vmatprep.subr.bf16.mxu0 0
    %1466 = vmatpush1.bf16.msra.mxu0 0
    %1467 = vmatprep.subr.bf16.mxu0 0
    %1468 = vmatpush1.bf16.msra.mxu0 0
    %1469 = vmatprep.subr.bf16.mxu0 0
    %1470 = vmatpush1.bf16.msra.mxu0 0
    %1471 = vmatprep.subr.bf16.mxu0 0
    %1472 = vmatpush1.bf16.msra.mxu0 0
    %1473 = vmatprep.subr.bf16.mxu0 0
    %1474 = vmatpush1.bf16.msra.mxu0 0
    %1475 = vmatprep.subr.bf16.mxu0 0
    %1476 = vmatpush1.bf16.msra.mxu0 0
    %1477 = vmatprep.subr.bf16.mxu0 0
    %1478 = vmatpush1.bf16.msra.mxu0 0
    %1479 = vmatprep.subr.bf16.mxu0 0
    %1480 = vmatpush1.bf16.msra.mxu0 0
    %1481 = vmatprep.subr.bf16.mxu0 0
    %1482 = vmatpush1.bf16.msra.mxu0 0
    %1483 = vmatprep.subr.bf16.mxu0 0
    %1484 = vmatpush1.bf16.msra.mxu0 0
    %1485 = vmatprep.subr.bf16.mxu0 0
    %1486 = vmatpush1.bf16.msra.mxu0 0
    %1487 = vmatprep.subr.bf16.mxu0 0
    %1488 = vmatpush1.bf16.msra.mxu0 0
    %1489 = vmatprep.subr.bf16.mxu0 0
    %1490 = vmatpush1.bf16.msra.mxu0 0
    %1491 = vmatprep.subr.bf16.mxu0 0
    %1492 = vmatpush1.bf16.msra.mxu0 0
    %1493 = vmatprep.mubr.bf16.mxu0 0
    %1494 = vmatmul.mubr.bf16.gmra.mrb[0].mxu0 %v1459
    %v1495 = vpop.f32.mrb[0].mxu0
    %v1496 = vadd.f32 %v1444, %v1495
    %v1497 = vpop.f32.mrb[0].mxu0
    %v1498 = vpop.f32.mrb[0].mxu0
    %v1499 = vadd.f32 %v1444, %v1498
    %v1500 = vpop.f32.mrb[0].mxu0
    %1501 = vdwg.mxu0
    %v1502 = vmul.f32 %v1496, %v1496
    %v1503 = vmul.f32 %v1499, %v1499
    %v1504 = vmul.f32 %v1496, %v1502
    %v1505 = vmul.f32 %v1499, %v1503
    %v1506 = vmul.f32 %v1504, 0.044715
    %v1507 = vmul.f32 %v1505, 0.044715
    %v1508 = vadd.f32 %v1496, %v1506
    %v1509 = vadd.f32 %v1499, %v1507
    %v1510 = vmul.f32 %v1508, 0.7978846
    %v1511 = vmul.f32 %v1509, 0.7978846
    %v1512 = vtanh.pop %v1510
    %v1513 = vtanh.pop %v1511
    %v1514 = vadd.f32 %v1512, 1.0
    %v1515 = vadd.f32 %v1513, 1.0
    %v1516 = vmul.f32 %v1514, 0.5
    %v1517 = vmul.f32 %v1515, 0.5
    %v1518 = vmul.f32 %v1496, %v1516
    %v1519 = vmul.f32 %v1499, %v1517
    %v1520 = vpack.c.bf16 %v1519, %v1518
    %v1521 = vld [vmem:[%s12] sm:$0xf]
    %v1522 = vld [vmem:[%s12 + $0x4] sm:$0xf]
    %v1523 = vld [vmem:[%s12 + $0x8] sm:$0xf]
    %v1524 = vld [vmem:[%s12 + $0xc] sm:$0xf]
    %v1525 = vld [vmem:[%s12 + $0x10] sm:$0xf]
    %v1526 = vld [vmem:[%s12 + $0x14] sm:$0xf]
    %v1527 = vld [vmem:[%s12 + $0x18] sm:$0xf]
    %v1528 = vld [vmem:[%s12 + $0x1c] sm:$0xf]
    %v1529 = vld [vmem:[%s12 + $0x20] sm:$0xf]
    %v1530 = vld [vmem:[%s12 + $0x24] sm:$0xf]
    %v1531 = vld [vmem:[%s12 + $0x28] sm:$0xf]
    %v1532 = vld [vmem:[%s12 + $0x2c] sm:$0xf]
    %v1533 = vld [vmem:[%s12 + $0x30] sm:$0xf]
    %v1534 = vld [vmem:[%s12 + $0x34] sm:$0xf]
    %v1535 = vld [vmem:[%s12 + $0x38] sm:$0xf]
    %v1536 = vld [vmem:[%s12 + $0x3c] sm:$0xf]
    %v1537 = vld [vmem:[#allocation16] sm:$0x1]
    %v1539 = vlaneseq
    %v1540 = vshrl.u32 %v1539, 7
    %v1541 = vsub.s32 0, %v1540
    %v1542 = vrot.slane %v1537, %v1541
    %v1560 = vunpack.c.l.b16 %v1521
    %v1561 = vunpack.c.l.b16 %v1522
    %v1562 = vunpack.c.l.b16 %v1523
    %v1563 = vunpack.c.l.b16 %v1524
    %v1564 = vunpack.c.l.b16 %v1525
    %v1565 = vunpack.c.l.b16 %v1526
    %v1566 = vunpack.c.l.b16 %v1527
    %v1567 = vunpack.c.l.b16 %v1528
    %v1568 = vunpack.c.l.b16 %v1529
    %v1569 = vunpack.c.l.b16 %v1530
    %v1570 = vunpack.c.l.b16 %v1531
    %v1571 = vunpack.c.l.b16 %v1532
    %v1572 = vunpack.c.l.b16 %v1533
    %v1573 = vunpack.c.l.b16 %v1534
    %v1574 = vunpack.c.l.b16 %v1535
    %v1575 = vunpack.c.l.b16 %v1536
    %v1576 = vpack.c.b16 %v1561, %v1560
    %v1577 = vpack.c.b16 %v1563, %v1562
    %v1578 = vpack.c.b16 %v1565, %v1564
    %v1579 = vpack.c.b16 %v1567, %v1566
    %v1580 = vpack.c.b16 %v1569, %v1568
    %v1581 = vpack.c.b16 %v1571, %v1570
    %v1582 = vpack.c.b16 %v1573, %v1572
    %v1583 = vpack.c.b16 %v1575, %v1574
    %1592 = vmatprep.subr.bf16.mxu0 0
    %1593 = vmatpush1.bf16.msra.mxu0 %v1576
    %1594 = vmatprep.subr.bf16.mxu0 0
    %1595 = vmatpush1.bf16.msra.mxu0 %v1577
    %1596 = vmatprep.subr.bf16.mxu0 0
    %1597 = vmatpush1.bf16.msra.mxu0 %v1578
    %1598 = vmatprep.subr.bf16.mxu0 0
    %1599 = vmatpush1.bf16.msra.mxu0 %v1579
    %1600 = vmatprep.subr.bf16.mxu0 0
    %1601 = vmatpush1.bf16.msra.mxu0 %v1580
    %1602 = vmatprep.subr.bf16.mxu0 0
    %1603 = vmatpush1.bf16.msra.mxu0 %v1581
    %1604 = vmatprep.subr.bf16.mxu0 0
    %1605 = vmatpush1.bf16.msra.mxu0 %v1582
    %1606 = vmatprep.subr.bf16.mxu0 0
    %1607 = vmatpush1.bf16.msra.mxu0 %v1583
    %1608 = vmatprep.subr.bf16.mxu0 0
    %1609 = vmatpush1.bf16.msra.mxu0 0
    %1610 = vmatprep.subr.bf16.mxu0 0
    %1611 = vmatpush1.bf16.msra.mxu0 0
    %1612 = vmatprep.subr.bf16.mxu0 0
    %1613 = vmatpush1.bf16.msra.mxu0 0
    %1614 = vmatprep.subr.bf16.mxu0 0
    %1615 = vmatpush1.bf16.msra.mxu0 0
    %1616 = vmatprep.subr.bf16.mxu0 0
    %1617 = vmatpush1.bf16.msra.mxu0 0
    %1618 = vmatprep.subr.bf16.mxu0 0
    %1619 = vmatpush1.bf16.msra.mxu0 0
    %1620 = vmatprep.subr.bf16.mxu0 0
    %1621 = vmatpush1.bf16.msra.mxu0 0
    %1622 = vmatprep.subr.bf16.mxu0 0
    %1623 = vmatpush1.bf16.msra.mxu0 0
    %1624 = vmatprep.mubr.bf16.mxu0 0
    %1625 = vmatmul.mubr.bf16.gmra.mrb[0].mxu0 %v1520
    %v1626 = vpop.f32.mrb[0].mxu0
    %v1627 = vadd.f32 %v1542, %v1626
    %v1628 = vpop.f32.mrb[0].mxu0
    %v1629 = vpop.f32.mrb[0].mxu0
    %v1630 = vadd.f32 %v1542, %v1629
    %v1631 = vpop.f32.mrb[0].mxu0
    %1632 = vdwg.mxu0
    %v1633 = vadd.f32 %v1432, %v1627
    %v1634 = vadd.f32 %v1433, %v1630
    %v1635 = vld [vmem:[%s14] sm:$0x1]
    %v1636 = vld [vmem:[%s15] sm:$0x1]
    %v1637 = vsel %vm183, %v1633, 0.0
    %1638 = vadd.xlane.f32.xlu0 %v1637
    %v1639 = vpop.xlane.xlu0 %1638
    %v1640 = vsel %vm183, %v1634, 0.0
    %1641 = vadd.xlane.f32.xlu0 %v1640
    %v1642 = vpop.xlane.xlu0 %1641
    %v1643 = vmul.f32 %v1639, %v190
    %v1644 = vmul.f32 %v1642, %v190
    %v1645 = vsub.f32 %v1633, %v1643
    %v1646 = vsub.f32 %v1634, %v1644
    %v1647 = vmul.f32 %v1645, %v1645
    %v1648 = vmul.f32 %v1646, %v1646
    %v1649 = vsel %vm183, %v1647, 0.0
    %1650 = vadd.xlane.f32.xlu0 %v1649
    %v1651 = vpop.xlane.xlu0 %1650
    %v1652 = vsel %vm183, %v1648, 0.0
    %1653 = vadd.xlane.f32.xlu0 %v1652
    %v1654 = vpop.xlane.xlu0 %1653
    %v1655 = vmul.f32 %v1651, %v190
    %v1656 = vmul.f32 %v1654, %v190
    %v1657 = vadd.f32 %v1655, 1e-12
    %v1658 = vadd.f32 %v1656, 1e-12
    %v1659 = vrsqrt.pop %v1657
    %v1660 = vrsqrt.pop %v1658
    %v1661 = vmul.f32 %v1645, %v1659
    %v1662 = vmul.f32 %v1646, %v1660
    %v1664 = vlaneseq
    %v1665 = vshrl.u32 %v1664, 7
    %v1666 = vsub.s32 0, %v1665
    %v1667 = vrot.slane %v1635, %v1666
    %v1669 = vmul.f32 %v1661, %v1667
    %v1670 = vmul.f32 %v1662, %v1667
    %v1672 = vlaneseq
    %v1673 = vshrl.u32 %v1672, 7
    %v1674 = vsub.s32 0, %v1673
    %v1675 = vrot.slane %v1636, %v1674
    %v1677 = vadd.f32 %v1669, %v1675
    %v1678 = vadd.f32 %v1670, %v1675
    %v1679 = vpack.c.bf16 %v1678, %v1677
    %s1680 = scalar_lea.vmem %s4, 48
    %v1681 = vld [vmem:[%s1680] sm:$0xff]
    %v1682 = vld [vmem:[%s1680 + $0x8] sm:$0xf]
    %v1683 = vld [vmem:[%s1680 + $0xc] sm:$0xff]
    %v1684 = vld [vmem:[%s1680 + $0x14] sm:$0xf]
    %v1685 = vld [vmem:[%s1680 + $0x18] sm:$0xff]
    %v1686 = vld [vmem:[%s1680 + $0x20] sm:$0xf]
    %v1687 = vld [vmem:[%s1680 + $0x24] sm:$0xff]
    %v1688 = vld [vmem:[%s1680 + $0x2c] sm:$0xf]
    %s1689 = scalar_lea.vmem [#allocation8], 3
    %v1690 = vld [vmem:[%s1689] sm:$0x7]
    %v1692 = vlaneseq
    %v1693 = vshrl.u32 %v1692, 7
    %v1694 = vsub.s32 0, %v1693
    %v1695 = vrot.slane %v1690, %v1694
    %v1696 = vlaneseq
    %v1697 = vshrl.u32 %v1696, 7
    %v1698 = vsub.s32 1, %v1697
    %v1699 = vrot.slane %v1690, %v1698
    %v1700 = vlaneseq
    %v1701 = vshrl.u32 %v1700, 7
    %v1702 = vsub.s32 2, %v1701
    %v1703 = vrot.slane %v1690, %v1702
    %v1715 = vunpack.c.l.b16 %v1681
    %v1716 = vunpack.c.h.b16 %v1681
    %v1717 = vunpack.c.l.b16 %v1682
    %v1718 = vunpack.c.l.b16 %v1683
    %v1719 = vunpack.c.h.b16 %v1683
    %v1720 = vunpack.c.l.b16 %v1684
    %v1721 = vunpack.c.l.b16 %v1685
    %v1722 = vunpack.c.h.b16 %v1685
    %v1723 = vunpack.c.l.b16 %v1686
    %v1724 = vunpack.c.l.b16 %v1687
    %v1725 = vunpack.c.h.b16 %v1687
    %v1726 = vunpack.c.l.b16 %v1688
    %v1727 = vpack.c.b16 %v1718, %v1715
    %v1728 = vpack.c.b16 %v1719, %v1716
    %v1729 = vpack.c.b16 %v1720, %v1717
    %v1730 = vpack.c.b16 %v1724, %v1721
    %v1731 = vpack.c.b16 %v1725, %v1722
    %v1732 = vpack.c.b16 %v1726, %v1723
    %v1740 = vsel %vm183, %v1679, 0
    %1742 = vmatprep.subr.bf16.mxu0 %v1728
    %1743 = vmatpush1.bf16.msra.mxu0 %v1727
    %1744 = vmatprep.subr.bf16.mxu0 %v1731
    %1745 = vmatpush1.bf16.msra.mxu0 %v1730
    %1746 = vmatprep.subr.bf16.mxu0 0
    %1747 = vmatpush1.bf16.msra.mxu0 0
    %1748 = vmatprep.subr.bf16.mxu0 0
    %1749 = vmatpush1.bf16.msra.mxu0 0
    %1750 = vmatprep.subr.bf16.mxu0 0
    %1751 = vmatpush1.bf16.msra.mxu0 0
    %1752 = vmatprep.subr.bf16.mxu0 0
    %1753 = vmatpush1.bf16.msra.mxu0 0
    %1754 = vmatprep.subr.bf16.mxu0 0
    %1755 = vmatpush1.bf16.msra.mxu0 0
    %1756 = vmatprep.subr.bf16.mxu0 0
    %1757 = vmatpush1.bf16.msra.mxu0 0
    %1758 = vmatprep.subr.bf16.mxu0 0
    %1759 = vmatpush1.bf16.msra.mxu0 0
    %1760 = vmatprep.subr.bf16.mxu0 0
    %1761 = vmatpush1.bf16.msra.mxu0 0
    %1762 = vmatprep.subr.bf16.mxu0 0
    %1763 = vmatpush1.bf16.msra.mxu0 0
    %1764 = vmatprep.subr.bf16.mxu0 0
    %1765 = vmatpush1.bf16.msra.mxu0 0
    %1766 = vmatprep.subr.bf16.mxu0 0
    %1767 = vmatpush1.bf16.msra.mxu0 0
    %1768 = vmatprep.subr.bf16.mxu0 0
    %1769 = vmatpush1.bf16.msra.mxu0 0
    %1770 = vmatprep.subr.bf16.mxu0 0
    %1771 = vmatpush1.bf16.msra.mxu0 0
    %1772 = vmatprep.subr.bf16.mxu0 0
    %1773 = vmatpush1.bf16.msra.mxu0 0
    %1774 = vmatprep.mubr.bf16.mxu0 0
    %1775 = vmatmul.mubr.bf16.gmra.mrb[0].mxu0 %v1740
    %v1776 = vpop.f32.mrb[0].mxu0
    %v1777 = vadd.f32 %v1695, %v1776
    %v1778 = vpop.f32.mrb[0].mxu0
    %v1779 = vadd.f32 %v1699, %v1778
    %v1780 = vpop.f32.mrb[0].mxu0
    %v1781 = vadd.f32 %v1695, %v1780
    %v1782 = vpop.f32.mrb[0].mxu0
    %v1783 = vadd.f32 %v1699, %v1782
    %1784 = vdwg.mxu0
    %1785 = vmatprep.subr.bf16.mxu0 0
    %1786 = vmatpush1.bf16.msra.mxu0 %v1729
    %1787 = vmatprep.subr.bf16.mxu0 0
    %1788 = vmatpush1.bf16.msra.mxu0 %v1732
    %1789 = vmatprep.subr.bf16.mxu0 0
    %1790 = vmatpush1.bf16.msra.mxu0 0
    %1791 = vmatprep.subr.bf16.mxu0 0
    %1792 = vmatpush1.bf16.msra.mxu0 0
    %1793 = vmatprep.subr.bf16.mxu0 0
    %1794 = vmatpush1.bf16.msra.mxu0 0
    %1795 = vmatprep.subr.bf16.mxu0 0
    %1796 = vmatpush1.bf16.msra.mxu0 0
    %1797 = vmatprep.subr.bf16.mxu0 0
    %1798 = vmatpush1.bf16.msra.mxu0 0
    %1799 = vmatprep.subr.bf16.mxu0 0
    %1800 = vmatpush1.bf16.msra.mxu0 0
    %1801 = vmatprep.subr.bf16.mxu0 0
    %1802 = vmatpush1.bf16.msra.mxu0 0
    %1803 = vmatprep.subr.bf16.mxu0 0
    %1804 = vmatpush1.bf16.msra.mxu0 0
    %1805 = vmatprep.subr.bf16.mxu0 0
    %1806 = vmatpush1.bf16.msra.mxu0 0
    %1807 = vmatprep.subr.bf16.mxu0 0
    %1808 = vmatpush1.bf16.msra.mxu0 0
    %1809 = vmatprep.subr.bf16.mxu0 0
    %1810 = vmatpush1.bf16.msra.mxu0 0
    %1811 = vmatprep.subr.bf16.mxu0 0
    %1812 = vmatpush1.bf16.msra.mxu0 0
    %1813 = vmatprep.subr.bf16.mxu0 0
    %1814 = vmatpush1.bf16.msra.mxu0 0
    %1815 = vmatprep.subr.bf16.mxu0 0
    %1816 = vmatpush1.bf16.msra.mxu0 0
    %1817 = vmatprep.mubr.bf16.mxu0 0
    %1818 = vmatmul.mubr.bf16.gmra.mrb[0].mxu0 %v1740
    %v1819 = vpop.f32.mrb[0].mxu0
    %v1820 = vadd.f32 %v1703, %v1819
    %v1821 = vpop.f32.mrb[0].mxu0
    %v1822 = vpop.f32.mrb[0].mxu0
    %v1823 = vadd.f32 %v1703, %v1822
    %v1824 = vpop.f32.mrb[0].mxu0
    %1825 = vdwg.mxu0
    %v1826 = vpack.c.bf16 %v1777, %v1777
    %v1827 = vpack.c.bf16 %v1781, %v1781
    %v1828 = vpack.c.bf16 %v1779, %v1779
    %v1829 = vpack.c.bf16 %v1783, %v1783
    %v1830 = vpack.c.bf16 %v1820, %v1820
    %v1831 = vpack.c.bf16 %v1823, %v1823
    %v1833 = vsel %vm412, %v1826, 0
    %v1836 = vsel %vm412, %v1828, 0
    %1838 = vmatprep.subr.bf16.mxu0 0
    %1839 = vmatpush1.bf16.xpose.msra.mxu0 %v1836
    %1840 = vmatprep.subr.bf16.mxu0 0
    %1841 = vmatpush1.bf16.xpose.msra.mxu0 0
    %1842 = vmatprep.subr.bf16.mxu0 0
    %1843 = vmatpush1.bf16.xpose.msra.mxu0 0
    %1844 = vmatprep.subr.bf16.mxu0 0
    %1845 = vmatpush1.bf16.xpose.msra.mxu0 0
    %1846 = vmatprep.subr.bf16.mxu0 0
    %1847 = vmatpush1.bf16.xpose.msra.mxu0 0
    %1848 = vmatprep.subr.bf16.mxu0 0
    %1849 = vmatpush1.bf16.xpose.msra.mxu0 0
    %1850 = vmatprep.subr.bf16.mxu0 0
    %1851 = vmatpush1.bf16.xpose.msra.mxu0 0
    %1852 = vmatprep.subr.bf16.mxu0 0
    %1853 = vmatpush1.bf16.xpose.msra.mxu0 0
    %1854 = vmatprep.subr.bf16.mxu0 0
    %1855 = vmatpush1.bf16.xpose.msra.mxu0 0
    %1856 = vmatprep.subr.bf16.mxu0 0
    %1857 = vmatpush1.bf16.xpose.msra.mxu0 0
    %1858 = vmatprep.subr.bf16.mxu0 0
    %1859 = vmatpush1.bf16.xpose.msra.mxu0 0
    %1860 = vmatprep.subr.bf16.mxu0 0
    %1861 = vmatpush1.bf16.xpose.msra.mxu0 0
    %1862 = vmatprep.subr.bf16.mxu0 0
    %1863 = vmatpush1.bf16.xpose.msra.mxu0 0
    %1864 = vmatprep.subr.bf16.mxu0 0
    %1865 = vmatpush1.bf16.xpose.msra.mxu0 0
    %1866 = vmatprep.subr.bf16.mxu0 0
    %1867 = vmatpush1.bf16.xpose.msra.mxu0 0
    %1868 = vmatprep.subr.bf16.mxu0 0
    %1869 = vmatpush1.bf16.xpose.msra.mxu0 0
    %1870 = vmatprep.mubr.bf16.mxu0 0
    %1871 = vmatmul.mubr.bf16.gmra.mrb[0].mxu0 %v1833
    %v1872 = vpop.f32.mrb[0].mxu0
    %v1873 = vadd.f32 %v254, %v1872
    %v1874 = vpop.f32.mrb[0].mxu0
    %v1875 = vpop.f32.mrb[0].mxu0
    %v1876 = vpop.f32.mrb[0].mxu0
    %1877 = vdwg.mxu0
    %v1879 = vsel %vm412, %v1827, 0
    %v1882 = vsel %vm412, %v1829, 0
    %1884 = vmatprep.subr.bf16.mxu0 0
    %1885 = vmatpush1.bf16.xpose.msra.mxu0 %v1882
    %1886 = vmatprep.subr.bf16.mxu0 0
    %1887 = vmatpush1.bf16.xpose.msra.mxu0 0
    %1888 = vmatprep.subr.bf16.mxu0 0
    %1889 = vmatpush1.bf16.xpose.msra.mxu0 0
    %1890 = vmatprep.subr.bf16.mxu0 0
    %1891 = vmatpush1.bf16.xpose.msra.mxu0 0
    %1892 = vmatprep.subr.bf16.mxu0 0
    %1893 = vmatpush1.bf16.xpose.msra.mxu0 0
    %1894 = vmatprep.subr.bf16.mxu0 0
    %1895 = vmatpush1.bf16.xpose.msra.mxu0 0
    %1896 = vmatprep.subr.bf16.mxu0 0
    %1897 = vmatpush1.bf16.xpose.msra.mxu0 0
    %1898 = vmatprep.subr.bf16.mxu0 0
    %1899 = vmatpush1.bf16.xpose.msra.mxu0 0
    %1900 = vmatprep.subr.bf16.mxu0 0
    %1901 = vmatpush1.bf16.xpose.msra.mxu0 0
    %1902 = vmatprep.subr.bf16.mxu0 0
    %1903 = vmatpush1.bf16.xpose.msra.mxu0 0
    %1904 = vmatprep.subr.bf16.mxu0 0
    %1905 = vmatpush1.bf16.xpose.msra.mxu0 0
    %1906 = vmatprep.subr.bf16.mxu0 0
    %1907 = vmatpush1.bf16.xpose.msra.mxu0 0
    %1908 = vmatprep.subr.bf16.mxu0 0
    %1909 = vmatpush1.bf16.xpose.msra.mxu0 0
    %1910 = vmatprep.subr.bf16.mxu0 0
    %1911 = vmatpush1.bf16.xpose.msra.mxu0 0
    %1912 = vmatprep.subr.bf16.mxu0 0
    %1913 = vmatpush1.bf16.xpose.msra.mxu0 0
    %1914 = vmatprep.subr.bf16.mxu0 0
    %1915 = vmatpush1.bf16.xpose.msra.mxu0 0
    %1916 = vmatprep.mubr.bf16.mxu0 0
    %1917 = vmatmul.mubr.bf16.gmra.mrb[0].mxu0 %v1879
    %v1918 = vpop.f32.mrb[0].mxu0
    %v1919 = vadd.f32 %v258, %v1918
    %v1920 = vpop.f32.mrb[0].mxu0
    %v1921 = vpop.f32.mrb[0].mxu0
    %v1922 = vpop.f32.mrb[0].mxu0
    %1923 = vdwg.mxu0
    %v1924 = vsel %vm412, %v1873, -inf
    %1925 = vmax.xlane.f32.xlu0 %v1924
    %v1926 = vpop.xlane.xlu0 %1925
    %v1927 = vsel %vm412, %v1919, -inf
    %1928 = vmax.xlane.f32.xlu0 %v1927
    %v1929 = vpop.xlane.xlu0 %1928
    %v1930 = vsub.f32 %v1873, %v1926
    %v1931 = vsub.f32 %v1919, %v1929
    %v1932 = vmul.f32 %v1930, 1.442695
    %v1933 = vpow.pop %v1932
    %v1934 = vmul.f32 %v1931, 1.442695
    %v1935 = vpow.pop %v1934
    %v1936 = vsel %vm412, %v1933, 0.0
    %1937 = vadd.xlane.f32.xlu0 %v1936
    %v1938 = vpop.xlane.xlu0 %1937
    %v1939 = vsel %vm412, %v1935, 0.0
    %1940 = vadd.xlane.f32.xlu0 %v1939
    %v1941 = vpop.xlane.xlu0 %1940
    %v1942 = vrcp.pop %v1938
    %v1943 = vrcp.pop %v1941
    %v1944 = vmul.f32 %v1933, %v1942
    %v1945 = vmul.f32 %v1935, %v1943
    %v1946 = vpack.c.bf16 %v1944, %v1944
    %v1947 = vpack.c.bf16 %v1945, %v1945
    %v1949 = vsel %vm412, %v1946, 0
    %v1952 = vsel %vm532, %v1830, 0
    %1954 = vmatprep.subr.bf16.mxu0 0
    %1955 = vmatpush1.bf16.msra.mxu0 %v1952
    %1956 = vmatprep.subr.bf16.mxu0 0
    %1957 = vmatpush1.bf16.msra.mxu0 0
    %1958 = vmatprep.subr.bf16.mxu0 0
    %1959 = vmatpush1.bf16.msra.mxu0 0
    %1960 = vmatprep.subr.bf16.mxu0 0
    %1961 = vmatpush1.bf16.msra.mxu0 0
    %1962 = vmatprep.subr.bf16.mxu0 0
    %1963 = vmatpush1.bf16.msra.mxu0 0
    %1964 = vmatprep.subr.bf16.mxu0 0
    %1965 = vmatpush1.bf16.msra.mxu0 0
    %1966 = vmatprep.subr.bf16.mxu0 0
    %1967 = vmatpush1.bf16.msra.mxu0 0
    %1968 = vmatprep.subr.bf16.mxu0 0
    %1969 = vmatpush1.bf16.msra.mxu0 0
    %1970 = vmatprep.subr.bf16.mxu0 0
    %1971 = vmatpush1.bf16.msra.mxu0 0
    %1972 = vmatprep.subr.bf16.mxu0 0
    %1973 = vmatpush1.bf16.msra.mxu0 0
    %1974 = vmatprep.subr.bf16.mxu0 0
    %1975 = vmatpush1.bf16.msra.mxu0 0
    %1976 = vmatprep.subr.bf16.mxu0 0
    %1977 = vmatpush1.bf16.msra.mxu0 0
    %1978 = vmatprep.subr.bf16.mxu0 0
    %1979 = vmatpush1.bf16.msra.mxu0 0
    %1980 = vmatprep.subr.bf16.mxu0 0
    %1981 = vmatpush1.bf16.msra.mxu0 0
    %1982 = vmatprep.subr.bf16.mxu0 0
    %1983 = vmatpush1.bf16.msra.mxu0 0
    %1984 = vmatprep.subr.bf16.mxu0 0
    %1985 = vmatpush1.bf16.msra.mxu0 0
    %1986 = vmatprep.mubr.bf16.mxu0 0
    %1987 = vmatmul.mubr.bf16.gmra.mrb[0].mxu0 %v1949
    %v1988 = vpop.f32.mrb[0].mxu0
    %v1989 = vadd.f32 0.0, %v1988
    %v1990 = vpop.f32.mrb[0].mxu0
    %v1991 = vpop.f32.mrb[0].mxu0
    %v1992 = vpop.f32.mrb[0].mxu0
    %1993 = vdwg.mxu0
    %v1995 = vsel %vm412, %v1947, 0
    %v1998 = vsel %vm532, %v1831, 0
    %2000 = vmatprep.subr.bf16.mxu0 0
    %2001 = vmatpush1.bf16.msra.mxu0 %v1998
    %2002 = vmatprep.subr.bf16.mxu0 0
    %2003 = vmatpush1.bf16.msra.mxu0 0
    %2004 = vmatprep.subr.bf16.mxu0 0
    %2005 = vmatpush1.bf16.msra.mxu0 0
    %2006 = vmatprep.subr.bf16.mxu0 0
    %2007 = vmatpush1.bf16.msra.mxu0 0
    %2008 = vmatprep.subr.bf16.mxu0 0
    %2009 = vmatpush1.bf16.msra.mxu0 0
    %2010 = vmatprep.subr.bf16.mxu0 0
    %2011 = vmatpush1.bf16.msra.mxu0 0
    %2012 = vmatprep.subr.bf16.mxu0 0
    %2013 = vmatpush1.bf16.msra.mxu0 0
    %2014 = vmatprep.subr.bf16.mxu0 0
    %2015 = vmatpush1.bf16.msra.mxu0 0
    %2016 = vmatprep.subr.bf16.mxu0 0
    %2017 = vmatpush1.bf16.msra.mxu0 0
    %2018 = vmatprep.subr.bf16.mxu0 0
    %2019 = vmatpush1.bf16.msra.mxu0 0
    %2020 = vmatprep.subr.bf16.mxu0 0
    %2021 = vmatpush1.bf16.msra.mxu0 0
    %2022 = vmatprep.subr.bf16.mxu0 0
    %2023 = vmatpush1.bf16.msra.mxu0 0
    %2024 = vmatprep.subr.bf16.mxu0 0
    %2025 = vmatpush1.bf16.msra.mxu0 0
    %2026 = vmatprep.subr.bf16.mxu0 0
    %2027 = vmatpush1.bf16.msra.mxu0 0
    %2028 = vmatprep.subr.bf16.mxu0 0
    %2029 = vmatpush1.bf16.msra.mxu0 0
    %2030 = vmatprep.subr.bf16.mxu0 0
    %2031 = vmatpush1.bf16.msra.mxu0 0
    %2032 = vmatprep.mubr.bf16.mxu0 0
    %2033 = vmatmul.mubr.bf16.gmra.mrb[0].mxu0 %v1995
    %v2034 = vpop.f32.mrb[0].mxu0
    %v2035 = vadd.f32 0.0, %v2034
    %v2036 = vpop.f32.mrb[0].mxu0
    %v2037 = vpop.f32.mrb[0].mxu0
    %v2038 = vpop.f32.mrb[0].mxu0
    %2039 = vdwg.mxu0
    %2041 = vrot.lane.b32.xlu0 %v1826, 120
    %v2042 = vpop.permute.xlu0 %2041
    %2044 = vrot.lane.b32.xlu0 %v1828, 120
    %v2045 = vpop.permute.xlu0 %2044
    %v2047 = vsel %vm412, %v2042, 0
    %v2050 = vsel %vm412, %v2045, 0
    %2052 = vmatprep.subr.bf16.mxu0 0
    %2053 = vmatpush1.bf16.xpose.msra.mxu0 %v2050
    %2054 = vmatprep.subr.bf16.mxu0 0
    %2055 = vmatpush1.bf16.xpose.msra.mxu0 0
    %2056 = vmatprep.subr.bf16.mxu0 0
    %2057 = vmatpush1.bf16.xpose.msra.mxu0 0
    %2058 = vmatprep.subr.bf16.mxu0 0
    %2059 = vmatpush1.bf16.xpose.msra.mxu0 0
    %2060 = vmatprep.subr.bf16.mxu0 0
    %2061 = vmatpush1.bf16.xpose.msra.mxu0 0
    %2062 = vmatprep.subr.bf16.mxu0 0
    %2063 = vmatpush1.bf16.xpose.msra.mxu0 0
    %2064 = vmatprep.subr.bf16.mxu0 0
    %2065 = vmatpush1.bf16.xpose.msra.mxu0 0
    %2066 = vmatprep.subr.bf16.mxu0 0
    %2067 = vmatpush1.bf16.xpose.msra.mxu0 0
    %2068 = vmatprep.subr.bf16.mxu0 0
    %2069 = vmatpush1.bf16.xpose.msra.mxu0 0
    %2070 = vmatprep.subr.bf16.mxu0 0
    %2071 = vmatpush1.bf16.xpose.msra.mxu0 0
    %2072 = vmatprep.subr.bf16.mxu0 0
    %2073 = vmatpush1.bf16.xpose.msra.mxu0 0
    %2074 = vmatprep.subr.bf16.mxu0 0
    %2075 = vmatpush1.bf16.xpose.msra.mxu0 0
    %2076 = vmatprep.subr.bf16.mxu0 0
    %2077 = vmatpush1.bf16.xpose.msra.mxu0 0
    %2078 = vmatprep.subr.bf16.mxu0 0
    %2079 = vmatpush1.bf16.xpose.msra.mxu0 0
    %2080 = vmatprep.subr.bf16.mxu0 0
    %2081 = vmatpush1.bf16.xpose.msra.mxu0 0
    %2082 = vmatprep.subr.bf16.mxu0 0
    %2083 = vmatpush1.bf16.xpose.msra.mxu0 0
    %2084 = vmatprep.mubr.bf16.mxu0 0
    %2085 = vmatmul.mubr.bf16.gmra.mrb[0].mxu0 %v2047
    %v2086 = vpop.f32.mrb[0].mxu0
    %v2087 = vadd.f32 %v254, %v2086
    %v2088 = vpop.f32.mrb[0].mxu0
    %v2089 = vpop.f32.mrb[0].mxu0
    %v2090 = vpop.f32.mrb[0].mxu0
    %2091 = vdwg.mxu0
    %2093 = vrot.lane.b32.xlu0 %v1827, 120
    %v2094 = vpop.permute.xlu0 %2093
    %2096 = vrot.lane.b32.xlu0 %v1829, 120
    %v2097 = vpop.permute.xlu0 %2096
    %v2099 = vsel %vm412, %v2094, 0
    %v2102 = vsel %vm412, %v2097, 0
    %2104 = vmatprep.subr.bf16.mxu0 0
    %2105 = vmatpush1.bf16.xpose.msra.mxu0 %v2102
    %2106 = vmatprep.subr.bf16.mxu0 0
    %2107 = vmatpush1.bf16.xpose.msra.mxu0 0
    %2108 = vmatprep.subr.bf16.mxu0 0
    %2109 = vmatpush1.bf16.xpose.msra.mxu0 0
    %2110 = vmatprep.subr.bf16.mxu0 0
    %2111 = vmatpush1.bf16.xpose.msra.mxu0 0
    %2112 = vmatprep.subr.bf16.mxu0 0
    %2113 = vmatpush1.bf16.xpose.msra.mxu0 0
    %2114 = vmatprep.subr.bf16.mxu0 0
    %2115 = vmatpush1.bf16.xpose.msra.mxu0 0
    %2116 = vmatprep.subr.bf16.mxu0 0
    %2117 = vmatpush1.bf16.xpose.msra.mxu0 0
    %2118 = vmatprep.subr.bf16.mxu0 0
    %2119 = vmatpush1.bf16.xpose.msra.mxu0 0
    %2120 = vmatprep.subr.bf16.mxu0 0
    %2121 = vmatpush1.bf16.xpose.msra.mxu0 0
    %2122 = vmatprep.subr.bf16.mxu0 0
    %2123 = vmatpush1.bf16.xpose.msra.mxu0 0
    %2124 = vmatprep.subr.bf16.mxu0 0
    %2125 = vmatpush1.bf16.xpose.msra.mxu0 0
    %2126 = vmatprep.subr.bf16.mxu0 0
    %2127 = vmatpush1.bf16.xpose.msra.mxu0 0
    %2128 = vmatprep.subr.bf16.mxu0 0
    %2129 = vmatpush1.bf16.xpose.msra.mxu0 0
    %2130 = vmatprep.subr.bf16.mxu0 0
    %2131 = vmatpush1.bf16.xpose.msra.mxu0 0
    %2132 = vmatprep.subr.bf16.mxu0 0
    %2133 = vmatpush1.bf16.xpose.msra.mxu0 0
    %2134 = vmatprep.subr.bf16.mxu0 0
    %2135 = vmatpush1.bf16.xpose.msra.mxu0 0
    %2136 = vmatprep.mubr.bf16.mxu0 0
    %2137 = vmatmul.mubr.bf16.gmra.mrb[0].mxu0 %v2099
    %v2138 = vpop.f32.mrb[0].mxu0
    %v2139 = vadd.f32 %v258, %v2138
    %v2140 = vpop.f32.mrb[0].mxu0
    %v2141 = vpop.f32.mrb[0].mxu0
    %v2142 = vpop.f32.mrb[0].mxu0
    %2143 = vdwg.mxu0
    %v2144 = vsel %vm412, %v2087, -inf
    %2145 = vmax.xlane.f32.xlu0 %v2144
    %v2146 = vpop.xlane.xlu0 %2145
    %v2147 = vsel %vm412, %v2139, -inf
    %2148 = vmax.xlane.f32.xlu0 %v2147
    %v2149 = vpop.xlane.xlu0 %2148
    %v2150 = vsub.f32 %v2087, %v2146
    %v2151 = vsub.f32 %v2139, %v2149
    %v2152 = vmul.f32 %v2150, 1.442695
    %v2153 = vpow.pop %v2152
    %v2154 = vmul.f32 %v2151, 1.442695
    %v2155 = vpow.pop %v2154
    %v2156 = vsel %vm412, %v2153, 0.0
    %2157 = vadd.xlane.f32.xlu0 %v2156
    %v2158 = vpop.xlane.xlu0 %2157
    %v2159 = vsel %vm412, %v2155, 0.0
    %2160 = vadd.xlane.f32.xlu0 %v2159
    %v2161 = vpop.xlane.xlu0 %2160
    %v2162 = vrcp.pop %v2158
    %v2163 = vrcp.pop %v2161
    %v2164 = vmul.f32 %v2153, %v2162
    %v2165 = vmul.f32 %v2155, %v2163
    %v2166 = vpack.c.bf16 %v2164, %v2164
    %v2167 = vpack.c.bf16 %v2165, %v2165
    %2169 = vrot.lane.b32.xlu0 %v1830, 120
    %v2170 = vpop.permute.xlu0 %2169
    %v2172 = vsel %vm412, %v2166, 0
    %v2175 = vsel %vm532, %v2170, 0
    %2177 = vmatprep.subr.bf16.mxu0 0
    %2178 = vmatpush1.bf16.msra.mxu0 %v2175
    %2179 = vmatprep.subr.bf16.mxu0 0
    %2180 = vmatpush1.bf16.msra.mxu0 0
    %2181 = vmatprep.subr.bf16.mxu0 0
    %2182 = vmatpush1.bf16.msra.mxu0 0
    %2183 = vmatprep.subr.bf16.mxu0 0
    %2184 = vmatpush1.bf16.msra.mxu0 0
    %2185 = vmatprep.subr.bf16.mxu0 0
    %2186 = vmatpush1.bf16.msra.mxu0 0
    %2187 = vmatprep.subr.bf16.mxu0 0
    %2188 = vmatpush1.bf16.msra.mxu0 0
    %2189 = vmatprep.subr.bf16.mxu0 0
    %2190 = vmatpush1.bf16.msra.mxu0 0
    %2191 = vmatprep.subr.bf16.mxu0 0
    %2192 = vmatpush1.bf16.msra.mxu0 0
    %2193 = vmatprep.subr.bf16.mxu0 0
    %2194 = vmatpush1.bf16.msra.mxu0 0
    %2195 = vmatprep.subr.bf16.mxu0 0
    %2196 = vmatpush1.bf16.msra.mxu0 0
    %2197 = vmatprep.subr.bf16.mxu0 0
    %2198 = vmatpush1.bf16.msra.mxu0 0
    %2199 = vmatprep.subr.bf16.mxu0 0
    %2200 = vmatpush1.bf16.msra.mxu0 0
    %2201 = vmatprep.subr.bf16.mxu0 0
    %2202 = vmatpush1.bf16.msra.mxu0 0
    %2203 = vmatprep.subr.bf16.mxu0 0
    %2204 = vmatpush1.bf16.msra.mxu0 0
    %2205 = vmatprep.subr.bf16.mxu0 0
    %2206 = vmatpush1.bf16.msra.mxu0 0
    %2207 = vmatprep.subr.bf16.mxu0 0
    %2208 = vmatpush1.bf16.msra.mxu0 0
    %2209 = vmatprep.mubr.bf16.mxu0 0
    %2210 = vmatmul.mubr.bf16.gmra.mrb[0].mxu0 %v2172
    %v2211 = vpop.f32.mrb[0].mxu0
    %v2212 = vadd.f32 0.0, %v2211
    %v2213 = vpop.f32.mrb[0].mxu0
    %v2214 = vpop.f32.mrb[0].mxu0
    %v2215 = vpop.f32.mrb[0].mxu0
    %2216 = vdwg.mxu0
    %2218 = vrot.lane.b32.xlu0 %v1831, 120
    %v2219 = vpop.permute.xlu0 %2218
    %v2221 = vsel %vm412, %v2167, 0
    %v2224 = vsel %vm532, %v2219, 0
    %2226 = vmatprep.subr.bf16.mxu0 0
    %2227 = vmatpush1.bf16.msra.mxu0 %v2224
    %2228 = vmatprep.subr.bf16.mxu0 0
    %2229 = vmatpush1.bf16.msra.mxu0 0
    %2230 = vmatprep.subr.bf16.mxu0 0
    %2231 = vmatpush1.bf16.msra.mxu0 0
    %2232 = vmatprep.subr.bf16.mxu0 0
    %2233 = vmatpush1.bf16.msra.mxu0 0
    %2234 = vmatprep.subr.bf16.mxu0 0
    %2235 = vmatpush1.bf16.msra.mxu0 0
    %2236 = vmatprep.subr.bf16.mxu0 0
    %2237 = vmatpush1.bf16.msra.mxu0 0
    %2238 = vmatprep.subr.bf16.mxu0 0
    %2239 = vmatpush1.bf16.msra.mxu0 0
    %2240 = vmatprep.subr.bf16.mxu0 0
    %2241 = vmatpush1.bf16.msra.mxu0 0
    %2242 = vmatprep.subr.bf16.mxu0 0
    %2243 = vmatpush1.bf16.msra.mxu0 0
    %2244 = vmatprep.subr.bf16.mxu0 0
    %2245 = vmatpush1.bf16.msra.mxu0 0
    %2246 = vmatprep.subr.bf16.mxu0 0
    %2247 = vmatpush1.bf16.msra.mxu0 0
    %2248 = vmatprep.subr.bf16.mxu0 0
    %2249 = vmatpush1.bf16.msra.mxu0 0
    %2250 = vmatprep.subr.bf16.mxu0 0
    %2251 = vmatpush1.bf16.msra.mxu0 0
    %2252 = vmatprep.subr.bf16.mxu0 0
    %2253 = vmatpush1.bf16.msra.mxu0 0
    %2254 = vmatprep.subr.bf16.mxu0 0
    %2255 = vmatpush1.bf16.msra.mxu0 0
    %2256 = vmatprep.subr.bf16.mxu0 0
    %2257 = vmatpush1.bf16.msra.mxu0 0
    %2258 = vmatprep.mubr.bf16.mxu0 0
    %2259 = vmatmul.mubr.bf16.gmra.mrb[0].mxu0 %v2221
    %v2260 = vpop.f32.mrb[0].mxu0
    %v2261 = vadd.f32 0.0, %v2260
    %v2262 = vpop.f32.mrb[0].mxu0
    %v2263 = vpop.f32.mrb[0].mxu0
    %v2264 = vpop.f32.mrb[0].mxu0
    %2265 = vdwg.mxu0
    %2266 = vrot.lane.b32.xlu0 %v1826, 112
    %v2267 = vpop.permute.xlu0 %2266
    %2268 = vrot.lane.b32.xlu0 %v1828, 112
    %v2269 = vpop.permute.xlu0 %2268
    %v2271 = vsel %vm412, %v2267, 0
    %v2274 = vsel %vm412, %v2269, 0
    %2276 = vmatprep.subr.bf16.mxu0 0
    %2277 = vmatpush1.bf16.xpose.msra.mxu0 %v2274
    %2278 = vmatprep.subr.bf16.mxu0 0
    %2279 = vmatpush1.bf16.xpose.msra.mxu0 0
    %2280 = vmatprep.subr.bf16.mxu0 0
    %2281 = vmatpush1.bf16.xpose.msra.mxu0 0
    %2282 = vmatprep.subr.bf16.mxu0 0
    %2283 = vmatpush1.bf16.xpose.msra.mxu0 0
    %2284 = vmatprep.subr.bf16.mxu0 0
    %2285 = vmatpush1.bf16.xpose.msra.mxu0 0
    %2286 = vmatprep.subr.bf16.mxu0 0
    %2287 = vmatpush1.bf16.xpose.msra.mxu0 0
    %2288 = vmatprep.subr.bf16.mxu0 0
    %2289 = vmatpush1.bf16.xpose.msra.mxu0 0
    %2290 = vmatprep.subr.bf16.mxu0 0
    %2291 = vmatpush1.bf16.xpose.msra.mxu0 0
    %2292 = vmatprep.subr.bf16.mxu0 0
    %2293 = vmatpush1.bf16.xpose.msra.mxu0 0
    %2294 = vmatprep.subr.bf16.mxu0 0
    %2295 = vmatpush1.bf16.xpose.msra.mxu0 0
    %2296 = vmatprep.subr.bf16.mxu0 0
    %2297 = vmatpush1.bf16.xpose.msra.mxu0 0
    %2298 = vmatprep.subr.bf16.mxu0 0
    %2299 = vmatpush1.bf16.xpose.msra.mxu0 0
    %2300 = vmatprep.subr.bf16.mxu0 0
    %2301 = vmatpush1.bf16.xpose.msra.mxu0 0
    %2302 = vmatprep.subr.bf16.mxu0 0
    %2303 = vmatpush1.bf16.xpose.msra.mxu0 0
    %2304 = vmatprep.subr.bf16.mxu0 0
    %2305 = vmatpush1.bf16.xpose.msra.mxu0 0
    %2306 = vmatprep.subr.bf16.mxu0 0
    %2307 = vmatpush1.bf16.xpose.msra.mxu0 0
    %2308 = vmatprep.mubr.bf16.mxu0 0
    %2309 = vmatmul.mubr.bf16.gmra.mrb[0].mxu0 %v2271
    %v2310 = vpop.f32.mrb[0].mxu0
    %v2311 = vadd.f32 %v254, %v2310
    %v2312 = vpop.f32.mrb[0].mxu0
    %v2313 = vpop.f32.mrb[0].mxu0
    %v2314 = vpop.f32.mrb[0].mxu0
    %2315 = vdwg.mxu0
    %2316 = vrot.lane.b32.xlu0 %v1827, 112
    %v2317 = vpop.permute.xlu0 %2316
    %2318 = vrot.lane.b32.xlu0 %v1829, 112
    %v2319 = vpop.permute.xlu0 %2318
    %v2321 = vsel %vm412, %v2317, 0
    %v2324 = vsel %vm412, %v2319, 0
    %2326 = vmatprep.subr.bf16.mxu0 0
    %2327 = vmatpush1.bf16.xpose.msra.mxu0 %v2324
    %2328 = vmatprep.subr.bf16.mxu0 0
    %2329 = vmatpush1.bf16.xpose.msra.mxu0 0
    %2330 = vmatprep.subr.bf16.mxu0 0
    %2331 = vmatpush1.bf16.xpose.msra.mxu0 0
    %2332 = vmatprep.subr.bf16.mxu0 0
    %2333 = vmatpush1.bf16.xpose.msra.mxu0 0
    %2334 = vmatprep.subr.bf16.mxu0 0
    %2335 = vmatpush1.bf16.xpose.msra.mxu0 0
    %2336 = vmatprep.subr.bf16.mxu0 0
    %2337 = vmatpush1.bf16.xpose.msra.mxu0 0
    %2338 = vmatprep.subr.bf16.mxu0 0
    %2339 = vmatpush1.bf16.xpose.msra.mxu0 0
    %2340 = vmatprep.subr.bf16.mxu0 0
    %2341 = vmatpush1.bf16.xpose.msra.mxu0 0
    %2342 = vmatprep.subr.bf16.mxu0 0
    %2343 = vmatpush1.bf16.xpose.msra.mxu0 0
    %2344 = vmatprep.subr.bf16.mxu0 0
    %2345 = vmatpush1.bf16.xpose.msra.mxu0 0
    %2346 = vmatprep.subr.bf16.mxu0 0
    %2347 = vmatpush1.bf16.xpose.msra.mxu0 0
    %2348 = vmatprep.subr.bf16.mxu0 0
    %2349 = vmatpush1.bf16.xpose.msra.mxu0 0
    %2350 = vmatprep.subr.bf16.mxu0 0
    %2351 = vmatpush1.bf16.xpose.msra.mxu0 0
    %2352 = vmatprep.subr.bf16.mxu0 0
    %2353 = vmatpush1.bf16.xpose.msra.mxu0 0
    %2354 = vmatprep.subr.bf16.mxu0 0
    %2355 = vmatpush1.bf16.xpose.msra.mxu0 0
    %2356 = vmatprep.subr.bf16.mxu0 0
    %2357 = vmatpush1.bf16.xpose.msra.mxu0 0
    %2358 = vmatprep.mubr.bf16.mxu0 0
    %2359 = vmatmul.mubr.bf16.gmra.mrb[0].mxu0 %v2321
    %v2360 = vpop.f32.mrb[0].mxu0
    %v2361 = vadd.f32 %v258, %v2360
    %v2362 = vpop.f32.mrb[0].mxu0
    %v2363 = vpop.f32.mrb[0].mxu0
    %v2364 = vpop.f32.mrb[0].mxu0
    %2365 = vdwg.mxu0
    %v2366 = vsel %vm412, %v2311, -inf
    %2367 = vmax.xlane.f32.xlu0 %v2366
    %v2368 = vpop.xlane.xlu0 %2367
    %v2369 = vsel %vm412, %v2361, -inf
    %2370 = vmax.xlane.f32.xlu0 %v2369
    %v2371 = vpop.xlane.xlu0 %2370
    %v2372 = vsub.f32 %v2311, %v2368
    %v2373 = vsub.f32 %v2361, %v2371
    %v2374 = vmul.f32 %v2372, 1.442695
    %v2375 = vpow.pop %v2374
    %v2376 = vmul.f32 %v2373, 1.442695
    %v2377 = vpow.pop %v2376
    %v2378 = vsel %vm412, %v2375, 0.0
    %2379 = vadd.xlane.f32.xlu0 %v2378
    %v2380 = vpop.xlane.xlu0 %2379
    %v2381 = vsel %vm412, %v2377, 0.0
    %2382 = vadd.xlane.f32.xlu0 %v2381
    %v2383 = vpop.xlane.xlu0 %2382
    %v2384 = vrcp.pop %v2380
    %v2385 = vrcp.pop %v2383
    %v2386 = vmul.f32 %v2375, %v2384
    %v2387 = vmul.f32 %v2377, %v2385
    %v2388 = vpack.c.bf16 %v2386, %v2386
    %v2389 = vpack.c.bf16 %v2387, %v2387
    %2390 = vrot.lane.b32.xlu0 %v1830, 112
    %v2391 = vpop.permute.xlu0 %2390
    %v2393 = vsel %vm412, %v2388, 0
    %v2396 = vsel %vm532, %v2391, 0
    %2398 = vmatprep.subr.bf16.mxu0 0
    %2399 = vmatpush1.bf16.msra.mxu0 %v2396
    %2400 = vmatprep.subr.bf16.mxu0 0
    %2401 = vmatpush1.bf16.msra.mxu0 0
    %2402 = vmatprep.subr.bf16.mxu0 0
    %2403 = vmatpush1.bf16.msra.mxu0 0
    %2404 = vmatprep.subr.bf16.mxu0 0
    %2405 = vmatpush1.bf16.msra.mxu0 0
    %2406 = vmatprep.subr.bf16.mxu0 0
    %2407 = vmatpush1.bf16.msra.mxu0 0
    %2408 = vmatprep.subr.bf16.mxu0 0
    %2409 = vmatpush1.bf16.msra.mxu0 0
    %2410 = vmatprep.subr.bf16.mxu0 0
    %2411 = vmatpush1.bf16.msra.mxu0 0
    %2412 = vmatprep.subr.bf16.mxu0 0
    %2413 = vmatpush1.bf16.msra.mxu0 0
    %2414 = vmatprep.subr.bf16.mxu0 0
    %2415 = vmatpush1.bf16.msra.mxu0 0
    %2416 = vmatprep.subr.bf16.mxu0 0
    %2417 = vmatpush1.bf16.msra.mxu0 0
    %2418 = vmatprep.subr.bf16.mxu0 0
    %2419 = vmatpush1.bf16.msra.mxu0 0
    %2420 = vmatprep.subr.bf16.mxu0 0
    %2421 = vmatpush1.bf16.msra.mxu0 0
    %2422 = vmatprep.subr.bf16.mxu0 0
    %2423 = vmatpush1.bf16.msra.mxu0 0
    %2424 = vmatprep.subr.bf16.mxu0 0
    %2425 = vmatpush1.bf16.msra.mxu0 0
    %2426 = vmatprep.subr.bf16.mxu0 0
    %2427 = vmatpush1.bf16.msra.mxu0 0
    %2428 = vmatprep.subr.bf16.mxu0 0
    %2429 = vmatpush1.bf16.msra.mxu0 0
    %2430 = vmatprep.mubr.bf16.mxu0 0
    %2431 = vmatmul.mubr.bf16.gmra.mrb[0].mxu0 %v2393
    %v2432 = vpop.f32.mrb[0].mxu0
    %v2433 = vadd.f32 0.0, %v2432
    %v2434 = vpop.f32.mrb[0].mxu0
    %v2435 = vpop.f32.mrb[0].mxu0
    %v2436 = vpop.f32.mrb[0].mxu0
    %2437 = vdwg.mxu0
    %2438 = vrot.lane.b32.xlu0 %v1831, 112
    %v2439 = vpop.permute.xlu0 %2438
    %v2441 = vsel %vm412, %v2389, 0
    %v2444 = vsel %vm532, %v2439, 0
    %2446 = vmatprep.subr.bf16.mxu0 0
    %2447 = vmatpush1.bf16.msra.mxu0 %v2444
    %2448 = vmatprep.subr.bf16.mxu0 0
    %2449 = vmatpush1.bf16.msra.mxu0 0
    %2450 = vmatprep.subr.bf16.mxu0 0
    %2451 = vmatpush1.bf16.msra.mxu0 0
    %2452 = vmatprep.subr.bf16.mxu0 0
    %2453 = vmatpush1.bf16.msra.mxu0 0
    %2454 = vmatprep.subr.bf16.mxu0 0
    %2455 = vmatpush1.bf16.msra.mxu0 0
    %2456 = vmatprep.subr.bf16.mxu0 0
    %2457 = vmatpush1.bf16.msra.mxu0 0
    %2458 = vmatprep.subr.bf16.mxu0 0
    %2459 = vmatpush1.bf16.msra.mxu0 0
    %2460 = vmatprep.subr.bf16.mxu0 0
    %2461 = vmatpush1.bf16.msra.mxu0 0
    %2462 = vmatprep.subr.bf16.mxu0 0
    %2463 = vmatpush1.bf16.msra.mxu0 0
    %2464 = vmatprep.subr.bf16.mxu0 0
    %2465 = vmatpush1.bf16.msra.mxu0 0
    %2466 = vmatprep.subr.bf16.mxu0 0
    %2467 = vmatpush1.bf16.msra.mxu0 0
    %2468 = vmatprep.subr.bf16.mxu0 0
    %2469 = vmatpush1.bf16.msra.mxu0 0
    %2470 = vmatprep.subr.bf16.mxu0 0
    %2471 = vmatpush1.bf16.msra.mxu0 0
    %2472 = vmatprep.subr.bf16.mxu0 0
    %2473 = vmatpush1.bf16.msra.mxu0 0
    %2474 = vmatprep.subr.bf16.mxu0 0
    %2475 = vmatpush1.bf16.msra.mxu0 0
    %2476 = vmatprep.subr.bf16.mxu0 0
    %2477 = vmatpush1.bf16.msra.mxu0 0
    %2478 = vmatprep.mubr.bf16.mxu0 0
    %2479 = vmatmul.mubr.bf16.gmra.mrb[0].mxu0 %v2441
    %v2480 = vpop.f32.mrb[0].mxu0
    %v2481 = vadd.f32 0.0, %v2480
    %v2482 = vpop.f32.mrb[0].mxu0
    %v2483 = vpop.f32.mrb[0].mxu0
    %v2484 = vpop.f32.mrb[0].mxu0
    %2485 = vdwg.mxu0
    %2486 = vrot.lane.b32.xlu0 %v1826, 104
    %v2487 = vpop.permute.xlu0 %2486
    %2488 = vrot.lane.b32.xlu0 %v1828, 104
    %v2489 = vpop.permute.xlu0 %2488
    %v2491 = vsel %vm412, %v2487, 0
    %v2494 = vsel %vm412, %v2489, 0
    %2496 = vmatprep.subr.bf16.mxu0 0
    %2497 = vmatpush1.bf16.xpose.msra.mxu0 %v2494
    %2498 = vmatprep.subr.bf16.mxu0 0
    %2499 = vmatpush1.bf16.xpose.msra.mxu0 0
    %2500 = vmatprep.subr.bf16.mxu0 0
    %2501 = vmatpush1.bf16.xpose.msra.mxu0 0
    %2502 = vmatprep.subr.bf16.mxu0 0
    %2503 = vmatpush1.bf16.xpose.msra.mxu0 0
    %2504 = vmatprep.subr.bf16.mxu0 0
    %2505 = vmatpush1.bf16.xpose.msra.mxu0 0
    %2506 = vmatprep.subr.bf16.mxu0 0
    %2507 = vmatpush1.bf16.xpose.msra.mxu0 0
    %2508 = vmatprep.subr.bf16.mxu0 0
    %2509 = vmatpush1.bf16.xpose.msra.mxu0 0
    %2510 = vmatprep.subr.bf16.mxu0 0
    %2511 = vmatpush1.bf16.xpose.msra.mxu0 0
    %2512 = vmatprep.subr.bf16.mxu0 0
    %2513 = vmatpush1.bf16.xpose.msra.mxu0 0
    %2514 = vmatprep.subr.bf16.mxu0 0
    %2515 = vmatpush1.bf16.xpose.msra.mxu0 0
    %2516 = vmatprep.subr.bf16.mxu0 0
    %2517 = vmatpush1.bf16.xpose.msra.mxu0 0
    %2518 = vmatprep.subr.bf16.mxu0 0
    %2519 = vmatpush1.bf16.xpose.msra.mxu0 0
    %2520 = vmatprep.subr.bf16.mxu0 0
    %2521 = vmatpush1.bf16.xpose.msra.mxu0 0
    %2522 = vmatprep.subr.bf16.mxu0 0
    %2523 = vmatpush1.bf16.xpose.msra.mxu0 0
    %2524 = vmatprep.subr.bf16.mxu0 0
    %2525 = vmatpush1.bf16.xpose.msra.mxu0 0
    %2526 = vmatprep.subr.bf16.mxu0 0
    %2527 = vmatpush1.bf16.xpose.msra.mxu0 0
    %2528 = vmatprep.mubr.bf16.mxu0 0
    %2529 = vmatmul.mubr.bf16.gmra.mrb[0].mxu0 %v2491
    %v2530 = vpop.f32.mrb[0].mxu0
    %v2531 = vadd.f32 %v254, %v2530
    %v2532 = vpop.f32.mrb[0].mxu0
    %v2533 = vpop.f32.mrb[0].mxu0
    %v2534 = vpop.f32.mrb[0].mxu0
    %2535 = vdwg.mxu0
    %2536 = vrot.lane.b32.xlu0 %v1827, 104
    %v2537 = vpop.permute.xlu0 %2536
    %2538 = vrot.lane.b32.xlu0 %v1829, 104
    %v2539 = vpop.permute.xlu0 %2538
    %v2541 = vsel %vm412, %v2537, 0
    %v2544 = vsel %vm412, %v2539, 0
    %2546 = vmatprep.subr.bf16.mxu0 0
    %2547 = vmatpush1.bf16.xpose.msra.mxu0 %v2544
    %2548 = vmatprep.subr.bf16.mxu0 0
    %2549 = vmatpush1.bf16.xpose.msra.mxu0 0
    %2550 = vmatprep.subr.bf16.mxu0 0
    %2551 = vmatpush1.bf16.xpose.msra.mxu0 0
    %2552 = vmatprep.subr.bf16.mxu0 0
    %2553 = vmatpush1.bf16.xpose.msra.mxu0 0
    %2554 = vmatprep.subr.bf16.mxu0 0
    %2555 = vmatpush1.bf16.xpose.msra.mxu0 0
    %2556 = vmatprep.subr.bf16.mxu0 0
    %2557 = vmatpush1.bf16.xpose.msra.mxu0 0
    %2558 = vmatprep.subr.bf16.mxu0 0
    %2559 = vmatpush1.bf16.xpose.msra.mxu0 0
    %2560 = vmatprep.subr.bf16.mxu0 0
    %2561 = vmatpush1.bf16.xpose.msra.mxu0 0
    %2562 = vmatprep.subr.bf16.mxu0 0
    %2563 = vmatpush1.bf16.xpose.msra.mxu0 0
    %2564 = vmatprep.subr.bf16.mxu0 0
    %2565 = vmatpush1.bf16.xpose.msra.mxu0 0
    %2566 = vmatprep.subr.bf16.mxu0 0
    %2567 = vmatpush1.bf16.xpose.msra.mxu0 0
    %2568 = vmatprep.subr.bf16.mxu0 0
    %2569 = vmatpush1.bf16.xpose.msra.mxu0 0
    %2570 = vmatprep.subr.bf16.mxu0 0
    %2571 = vmatpush1.bf16.xpose.msra.mxu0 0
    %2572 = vmatprep.subr.bf16.mxu0 0
    %2573 = vmatpush1.bf16.xpose.msra.mxu0 0
    %2574 = vmatprep.subr.bf16.mxu0 0
    %2575 = vmatpush1.bf16.xpose.msra.mxu0 0
    %2576 = vmatprep.subr.bf16.mxu0 0
    %2577 = vmatpush1.bf16.xpose.msra.mxu0 0
    %2578 = vmatprep.mubr.bf16.mxu0 0
    %2579 = vmatmul.mubr.bf16.gmra.mrb[0].mxu0 %v2541
    %v2580 = vpop.f32.mrb[0].mxu0
    %v2581 = vadd.f32 %v258, %v2580
    %v2582 = vpop.f32.mrb[0].mxu0
    %v2583 = vpop.f32.mrb[0].mxu0
    %v2584 = vpop.f32.mrb[0].mxu0
    %2585 = vdwg.mxu0
    %v2586 = vsel %vm412, %v2531, -inf
    %2587 = vmax.xlane.f32.xlu0 %v2586
    %v2588 = vpop.xlane.xlu0 %2587
    %v2589 = vsel %vm412, %v2581, -inf
    %2590 = vmax.xlane.f32.xlu0 %v2589
    %v2591 = vpop.xlane.xlu0 %2590
    %v2592 = vsub.f32 %v2531, %v2588
    %v2593 = vsub.f32 %v2581, %v2591
    %v2594 = vmul.f32 %v2592, 1.442695
    %v2595 = vpow.pop %v2594
    %v2596 = vmul.f32 %v2593, 1.442695
    %v2597 = vpow.pop %v2596
    %v2598 = vsel %vm412, %v2595, 0.0
    %2599 = vadd.xlane.f32.xlu0 %v2598
    %v2600 = vpop.xlane.xlu0 %2599
    %v2601 = vsel %vm412, %v2597, 0.0
    %2602 = vadd.xlane.f32.xlu0 %v2601
    %v2603 = vpop.xlane.xlu0 %2602
    %v2604 = vrcp.pop %v2600
    %v2605 = vrcp.pop %v2603
    %v2606 = vmul.f32 %v2595, %v2604
    %v2607 = vmul.f32 %v2597, %v2605
    %v2608 = vpack.c.bf16 %v2606, %v2606
    %v2609 = vpack.c.bf16 %v2607, %v2607
    %2610 = vrot.lane.b32.xlu0 %v1830, 104
    %v2611 = vpop.permute.xlu0 %2610
    %v2613 = vsel %vm412, %v2608, 0
    %v2616 = vsel %vm532, %v2611, 0
    %2618 = vmatprep.subr.bf16.mxu0 0
    %2619 = vmatpush1.bf16.msra.mxu0 %v2616
    %2620 = vmatprep.subr.bf16.mxu0 0
    %2621 = vmatpush1.bf16.msra.mxu0 0
    %2622 = vmatprep.subr.bf16.mxu0 0
    %2623 = vmatpush1.bf16.msra.mxu0 0
    %2624 = vmatprep.subr.bf16.mxu0 0
    %2625 = vmatpush1.bf16.msra.mxu0 0
    %2626 = vmatprep.subr.bf16.mxu0 0
    %2627 = vmatpush1.bf16.msra.mxu0 0
    %2628 = vmatprep.subr.bf16.mxu0 0
    %2629 = vmatpush1.bf16.msra.mxu0 0
    %2630 = vmatprep.subr.bf16.mxu0 0
    %2631 = vmatpush1.bf16.msra.mxu0 0
    %2632 = vmatprep.subr.bf16.mxu0 0
    %2633 = vmatpush1.bf16.msra.mxu0 0
    %2634 = vmatprep.subr.bf16.mxu0 0
    %2635 = vmatpush1.bf16.msra.mxu0 0
    %2636 = vmatprep.subr.bf16.mxu0 0
    %2637 = vmatpush1.bf16.msra.mxu0 0
    %2638 = vmatprep.subr.bf16.mxu0 0
    %2639 = vmatpush1.bf16.msra.mxu0 0
    %2640 = vmatprep.subr.bf16.mxu0 0
    %2641 = vmatpush1.bf16.msra.mxu0 0
    %2642 = vmatprep.subr.bf16.mxu0 0
    %2643 = vmatpush1.bf16.msra.mxu0 0
    %2644 = vmatprep.subr.bf16.mxu0 0
    %2645 = vmatpush1.bf16.msra.mxu0 0
    %2646 = vmatprep.subr.bf16.mxu0 0
    %2647 = vmatpush1.bf16.msra.mxu0 0
    %2648 = vmatprep.subr.bf16.mxu0 0
    %2649 = vmatpush1.bf16.msra.mxu0 0
    %2650 = vmatprep.mubr.bf16.mxu0 0
    %2651 = vmatmul.mubr.bf16.gmra.mrb[0].mxu0 %v2613
    %v2652 = vpop.f32.mrb[0].mxu0
    %v2653 = vadd.f32 0.0, %v2652
    %v2654 = vpop.f32.mrb[0].mxu0
    %v2655 = vpop.f32.mrb[0].mxu0
    %v2656 = vpop.f32.mrb[0].mxu0
    %2657 = vdwg.mxu0
    %2658 = vrot.lane.b32.xlu0 %v1831, 104
    %v2659 = vpop.permute.xlu0 %2658
    %v2661 = vsel %vm412, %v2609, 0
    %v2664 = vsel %vm532, %v2659, 0
    %2666 = vmatprep.subr.bf16.mxu0 0
    %2667 = vmatpush1.bf16.msra.mxu0 %v2664
    %2668 = vmatprep.subr.bf16.mxu0 0
    %2669 = vmatpush1.bf16.msra.mxu0 0
    %2670 = vmatprep.subr.bf16.mxu0 0
    %2671 = vmatpush1.bf16.msra.mxu0 0
    %2672 = vmatprep.subr.bf16.mxu0 0
    %2673 = vmatpush1.bf16.msra.mxu0 0
    %2674 = vmatprep.subr.bf16.mxu0 0
    %2675 = vmatpush1.bf16.msra.mxu0 0
    %2676 = vmatprep.subr.bf16.mxu0 0
    %2677 = vmatpush1.bf16.msra.mxu0 0
    %2678 = vmatprep.subr.bf16.mxu0 0
    %2679 = vmatpush1.bf16.msra.mxu0 0
    %2680 = vmatprep.subr.bf16.mxu0 0
    %2681 = vmatpush1.bf16.msra.mxu0 0
    %2682 = vmatprep.subr.bf16.mxu0 0
    %2683 = vmatpush1.bf16.msra.mxu0 0
    %2684 = vmatprep.subr.bf16.mxu0 0
    %2685 = vmatpush1.bf16.msra.mxu0 0
    %2686 = vmatprep.subr.bf16.mxu0 0
    %2687 = vmatpush1.bf16.msra.mxu0 0
    %2688 = vmatprep.subr.bf16.mxu0 0
    %2689 = vmatpush1.bf16.msra.mxu0 0
    %2690 = vmatprep.subr.bf16.mxu0 0
    %2691 = vmatpush1.bf16.msra.mxu0 0
    %2692 = vmatprep.subr.bf16.mxu0 0
    %2693 = vmatpush1.bf16.msra.mxu0 0
    %2694 = vmatprep.subr.bf16.mxu0 0
    %2695 = vmatpush1.bf16.msra.mxu0 0
    %2696 = vmatprep.subr.bf16.mxu0 0
    %2697 = vmatpush1.bf16.msra.mxu0 0
    %2698 = vmatprep.mubr.bf16.mxu0 0
    %2699 = vmatmul.mubr.bf16.gmra.mrb[0].mxu0 %v2661
    %v2700 = vpop.f32.mrb[0].mxu0
    %v2701 = vadd.f32 0.0, %v2700
    %v2702 = vpop.f32.mrb[0].mxu0
    %v2703 = vpop.f32.mrb[0].mxu0
    %v2704 = vpop.f32.mrb[0].mxu0
    %2705 = vdwg.mxu0
    %2708 = vrot.lane.b32.xlu0 %v2212, 8
    %v2709 = vpop.permute.xlu0 %2708
    %2710 = vrot.lane.b32.xlu0 %v2261, 8
    %v2711 = vpop.permute.xlu0 %2710
    %2716 = vrot.lane.b32.xlu0 %v2433, 16
    %v2717 = vpop.permute.xlu0 %2716
    %2718 = vrot.lane.b32.xlu0 %v2481, 16
    %v2719 = vpop.permute.xlu0 %2718
    %2724 = vrot.lane.b32.xlu0 %v2653, 24
    %v2725 = vpop.permute.xlu0 %2724
    %2726 = vrot.lane.b32.xlu0 %v2701, 24
    %v2727 = vpop.permute.xlu0 %2726
    %v2730 = vsel %vm412, %v1989, %v2709
    %v2731 = vsel %vm412, %v2035, %v2711
    %v2732 = vsel %vm1314, %v2730, %v2717
    %v2733 = vsel %vm1314, %v2731, %v2719
    %v2734 = vsel %vm1317, %v2732, %v2725
    %v2735 = vsel %vm1317, %v2733, %v2727
    %v2736 = vpack.c.bf16 %v2735, %v2734
    %s2737 = scalar_lea.vmem %s6, 16
    %v2738 = vld [vmem:[%s2737] sm:$0xf]
    %v2739 = vld [vmem:[%s2737 + $0x4] sm:$0xf]
    %v2740 = vld [vmem:[%s2737 + $0x8] sm:$0xf]
    %v2741 = vld [vmem:[%s2737 + $0xc] sm:$0xf]
    %s2742 = scalar_lea.vmem [#allocation10], 1
    %v2743 = vld [vmem:[%s2742] sm:$0x1]
    %v2745 = vlaneseq
    %v2746 = vshrl.u32 %v2745, 7
    %v2747 = vsub.s32 0, %v2746
    %v2748 = vrot.slane %v2743, %v2747
    %v2754 = vunpack.c.l.b16 %v2738
    %v2755 = vunpack.c.l.b16 %v2739
    %v2756 = vunpack.c.l.b16 %v2740
    %v2757 = vunpack.c.l.b16 %v2741
    %v2758 = vpack.c.b16 %v2755, %v2754
    %v2759 = vpack.c.b16 %v2757, %v2756
    %v2763 = vsel %vm183, %v2736, 0
    %2765 = vmatprep.subr.bf16.mxu0 0
    %2766 = vmatpush1.bf16.msra.mxu0 %v2758
    %2767 = vmatprep.subr.bf16.mxu0 0
    %2768 = vmatpush1.bf16.msra.mxu0 %v2759
    %2769 = vmatprep.subr.bf16.mxu0 0
    %2770 = vmatpush1.bf16.msra.mxu0 0
    %2771 = vmatprep.subr.bf16.mxu0 0
    %2772 = vmatpush1.bf16.msra.mxu0 0
    %2773 = vmatprep.subr.bf16.mxu0 0
    %2774 = vmatpush1.bf16.msra.mxu0 0
    %2775 = vmatprep.subr.bf16.mxu0 0
    %2776 = vmatpush1.bf16.msra.mxu0 0
    %2777 = vmatprep.subr.bf16.mxu0 0
    %2778 = vmatpush1.bf16.msra.mxu0 0
    %2779 = vmatprep.subr.bf16.mxu0 0
    %2780 = vmatpush1.bf16.msra.mxu0 0
    %2781 = vmatprep.subr.bf16.mxu0 0
    %2782 = vmatpush1.bf16.msra.mxu0 0
    %2783 = vmatprep.subr.bf16.mxu0 0
    %2784 = vmatpush1.bf16.msra.mxu0 0
    %2785 = vmatprep.subr.bf16.mxu0 0
    %2786 = vmatpush1.bf16.msra.mxu0 0
    %2787 = vmatprep.subr.bf16.mxu0 0
    %2788 = vmatpush1.bf16.msra.mxu0 0
    %2789 = vmatprep.subr.bf16.mxu0 0
    %2790 = vmatpush1.bf16.msra.mxu0 0
    %2791 = vmatprep.subr.bf16.mxu0 0
    %2792 = vmatpush1.bf16.msra.mxu0 0
    %2793 = vmatprep.subr.bf16.mxu0 0
    %2794 = vmatpush1.bf16.msra.mxu0 0
    %2795 = vmatprep.subr.bf16.mxu0 0
    %2796 = vmatpush1.bf16.msra.mxu0 0
    %2797 = vmatprep.mubr.bf16.mxu0 0
    %2798 = vmatmul.mubr.bf16.gmra.mrb[0].mxu0 %v2763
    %v2799 = vpop.f32.mrb[0].mxu0
    %v2800 = vadd.f32 %v2748, %v2799
    %v2801 = vpop.f32.mrb[0].mxu0
    %v2802 = vpop.f32.mrb[0].mxu0
    %v2803 = vadd.f32 %v2748, %v2802
    %v2804 = vpop.f32.mrb[0].mxu0
    %2805 = vdwg.mxu0
    %v2806 = vadd.f32 %v1677, %v2800
    %v2807 = vadd.f32 %v1678, %v2803
    %s2808 = scalar_lea.vmem [#allocation11], 1
    %v2809 = vld [vmem:[%s2808] sm:$0x1]
    %s2810 = scalar_lea.vmem [#allocation13], 1
    %v2811 = vld [vmem:[%s2810] sm:$0x1]
    %v2812 = vsel %vm183, %v2806, 0.0
    %2813 = vadd.xlane.f32.xlu0 %v2812
    %v2814 = vpop.xlane.xlu0 %2813
    %v2815 = vsel %vm183, %v2807, 0.0
    %2816 = vadd.xlane.f32.xlu0 %v2815
    %v2817 = vpop.xlane.xlu0 %2816
    %v2818 = vmul.f32 %v2814, %v190
    %v2819 = vmul.f32 %v2817, %v190
    %v2820 = vsub.f32 %v2806, %v2818
    %v2821 = vsub.f32 %v2807, %v2819
    %v2822 = vmul.f32 %v2820, %v2820
    %v2823 = vmul.f32 %v2821, %v2821
    %v2824 = vsel %vm183, %v2822, 0.0
    %2825 = vadd.xlane.f32.xlu0 %v2824
    %v2826 = vpop.xlane.xlu0 %2825
    %v2827 = vsel %vm183, %v2823, 0.0
    %2828 = vadd.xlane.f32.xlu0 %v2827
    %v2829 = vpop.xlane.xlu0 %2828
    %v2830 = vmul.f32 %v2826, %v190
    %v2831 = vmul.f32 %v2829, %v190
    %v2832 = vadd.f32 %v2830, 1e-12
    %v2833 = vadd.f32 %v2831, 1e-12
    %v2834 = vrsqrt.pop %v2832
    %v2835 = vrsqrt.pop %v2833
    %v2836 = vmul.f32 %v2820, %v2834
    %v2837 = vmul.f32 %v2821, %v2835
    %v2839 = vlaneseq
    %v2840 = vshrl.u32 %v2839, 7
    %v2841 = vsub.s32 0, %v2840
    %v2842 = vrot.slane %v2809, %v2841
    %v2844 = vmul.f32 %v2836, %v2842
    %v2845 = vmul.f32 %v2837, %v2842
    %v2847 = vlaneseq
    %v2848 = vshrl.u32 %v2847, 7
    %v2849 = vsub.s32 0, %v2848
    %v2850 = vrot.slane %v2811, %v2849
    %v2852 = vadd.f32 %v2844, %v2850
    %v2853 = vadd.f32 %v2845, %v2850
    %v2854 = vpack.c.bf16 %v2853, %v2852
    %s2855 = scalar_lea.vmem %s10, 16
    %v2856 = vld [vmem:[%s2855] sm:$0xf]
    %v2857 = vld [vmem:[%s2855 + $0x4] sm:$0xf]
    %v2858 = vld [vmem:[%s2855 + $0x8] sm:$0xf]
    %v2859 = vld [vmem:[%s2855 + $0xc] sm:$0xf]
    %s2860 = scalar_lea.vmem [#allocation14], 1
    %v2861 = vld [vmem:[%s2860] sm:$0x1]
    %v2863 = vlaneseq
    %v2864 = vshrl.u32 %v2863, 7
    %v2865 = vsub.s32 0, %v2864
    %v2866 = vrot.slane %v2861, %v2865
    %v2872 = vunpack.c.l.b16 %v2856
    %v2873 = vunpack.c.l.b16 %v2857
    %v2874 = vunpack.c.l.b16 %v2858
    %v2875 = vunpack.c.l.b16 %v2859
    %v2876 = vpack.c.b16 %v2873, %v2872
    %v2877 = vpack.c.b16 %v2875, %v2874
    %v2881 = vsel %vm183, %v2854, 0
    %2883 = vmatprep.subr.bf16.mxu0 0
    %2884 = vmatpush1.bf16.msra.mxu0 %v2876
    %2885 = vmatprep.subr.bf16.mxu0 0
    %2886 = vmatpush1.bf16.msra.mxu0 %v2877
    %2887 = vmatprep.subr.bf16.mxu0 0
    %2888 = vmatpush1.bf16.msra.mxu0 0
    %2889 = vmatprep.subr.bf16.mxu0 0
    %2890 = vmatpush1.bf16.msra.mxu0 0
    %2891 = vmatprep.subr.bf16.mxu0 0
    %2892 = vmatpush1.bf16.msra.mxu0 0
    %2893 = vmatprep.subr.bf16.mxu0 0
    %2894 = vmatpush1.bf16.msra.mxu0 0
    %2895 = vmatprep.subr.bf16.mxu0 0
    %2896 = vmatpush1.bf16.msra.mxu0 0
    %2897 = vmatprep.subr.bf16.mxu0 0
    %2898 = vmatpush1.bf16.msra.mxu0 0
    %2899 = vmatprep.subr.bf16.mxu0 0
    %2900 = vmatpush1.bf16.msra.mxu0 0
    %2901 = vmatprep.subr.bf16.mxu0 0
    %2902 = vmatpush1.bf16.msra.mxu0 0
    %2903 = vmatprep.subr.bf16.mxu0 0
    %2904 = vmatpush1.bf16.msra.mxu0 0
    %2905 = vmatprep.subr.bf16.mxu0 0
    %2906 = vmatpush1.bf16.msra.mxu0 0
    %2907 = vmatprep.subr.bf16.mxu0 0
    %2908 = vmatpush1.bf16.msra.mxu0 0
    %2909 = vmatprep.subr.bf16.mxu0 0
    %2910 = vmatpush1.bf16.msra.mxu0 0
    %2911 = vmatprep.subr.bf16.mxu0 0
    %2912 = vmatpush1.bf16.msra.mxu0 0
    %2913 = vmatprep.subr.bf16.mxu0 0
    %2914 = vmatpush1.bf16.msra.mxu0 0
    %2915 = vmatprep.mubr.bf16.mxu0 0
    %2916 = vmatmul.mubr.bf16.gmra.mrb[0].mxu0 %v2881
    %v2917 = vpop.f32.mrb[0].mxu0
    %v2918 = vadd.f32 %v2866, %v2917
    %v2919 = vpop.f32.mrb[0].mxu0
    %v2920 = vpop.f32.mrb[0].mxu0
    %v2921 = vadd.f32 %v2866, %v2920
    %v2922 = vpop.f32.mrb[0].mxu0
    %2923 = vdwg.mxu0
    %v2924 = vmul.f32 %v2918, %v2918
    %v2925 = vmul.f32 %v2921, %v2921
    %v2926 = vmul.f32 %v2918, %v2924
    %v2927 = vmul.f32 %v2921, %v2925
    %v2928 = vmul.f32 %v2926, 0.044715
    %v2929 = vmul.f32 %v2927, 0.044715
    %v2930 = vadd.f32 %v2918, %v2928
    %v2931 = vadd.f32 %v2921, %v2929
    %v2932 = vmul.f32 %v2930, 0.7978846
    %v2933 = vmul.f32 %v2931, 0.7978846
    %v2934 = vtanh.pop %v2932
    %v2935 = vtanh.pop %v2933
    %v2936 = vadd.f32 %v2934, 1.0
    %v2937 = vadd.f32 %v2935, 1.0
    %v2938 = vmul.f32 %v2936, 0.5
    %v2939 = vmul.f32 %v2937, 0.5
    %v2940 = vmul.f32 %v2918, %v2938
    %v2941 = vmul.f32 %v2921, %v2939
    %v2942 = vpack.c.bf16 %v2941, %v2940
    %s2943 = scalar_lea.vmem %s12, 64
    %v2944 = vld [vmem:[%s2943] sm:$0xf]
    %v2945 = vld [vmem:[%s2943 + $0x4] sm:$0xf]
    %v2946 = vld [vmem:[%s2943 + $0x8] sm:$0xf]
    %v2947 = vld [vmem:[%s2943 + $0xc] sm:$0xf]
    %v2948 = vld [vmem:[%s2943 + $0x10] sm:$0xf]
    %v2949 = vld [vmem:[%s2943 + $0x14] sm:$0xf]
    %v2950 = vld [vmem:[%s2943 + $0x18] sm:$0xf]
    %v2951 = vld [vmem:[%s2943 + $0x1c] sm:$0xf]
    %v2952 = vld [vmem:[%s2943 + $0x20] sm:$0xf]
    %v2953 = vld [vmem:[%s2943 + $0x24] sm:$0xf]
    %v2954 = vld [vmem:[%s2943 + $0x28] sm:$0xf]
    %v2955 = vld [vmem:[%s2943 + $0x2c] sm:$0xf]
    %v2956 = vld [vmem:[%s2943 + $0x30] sm:$0xf]
    %v2957 = vld [vmem:[%s2943 + $0x34] sm:$0xf]
    %v2958 = vld [vmem:[%s2943 + $0x38] sm:$0xf]
    %v2959 = vld [vmem:[%s2943 + $0x3c] sm:$0xf]
    %s2960 = scalar_lea.vmem [#allocation16], 1
    %v2961 = vld [vmem:[%s2960] sm:$0x1]
    %v2963 = vlaneseq
    %v2964 = vshrl.u32 %v2963, 7
    %v2965 = vsub.s32 0, %v2964
    %v2966 = vrot.slane %v2961, %v2965
    %v2984 = vunpack.c.l.b16 %v2944
    %v2985 = vunpack.c.l.b16 %v2945
    %v2986 = vunpack.c.l.b16 %v2946
    %v2987 = vunpack.c.l.b16 %v2947
    %v2988 = vunpack.c.l.b16 %v2948
    %v2989 = vunpack.c.l.b16 %v2949
    %v2990 = vunpack.c.l.b16 %v2950
    %v2991 = vunpack.c.l.b16 %v2951
    %v2992 = vunpack.c.l.b16 %v2952
    %v2993 = vunpack.c.l.b16 %v2953
    %v2994 = vunpack.c.l.b16 %v2954
    %v2995 = vunpack.c.l.b16 %v2955
    %v2996 = vunpack.c.l.b16 %v2956
    %v2997 = vunpack.c.l.b16 %v2957
    %v2998 = vunpack.c.l.b16 %v2958
    %v2999 = vunpack.c.l.b16 %v2959
    %v3000 = vpack.c.b16 %v2985, %v2984
    %v3001 = vpack.c.b16 %v2987, %v2986
    %v3002 = vpack.c.b16 %v2989, %v2988
    %v3003 = vpack.c.b16 %v2991, %v2990
    %v3004 = vpack.c.b16 %v2993, %v2992
    %v3005 = vpack.c.b16 %v2995, %v2994
    %v3006 = vpack.c.b16 %v2997, %v2996
    %v3007 = vpack.c.b16 %v2999, %v2998
    %3016 = vmatprep.subr.bf16.mxu0 0
    %3017 = vmatpush1.bf16.msra.mxu0 %v3000
    %3018 = vmatprep.subr.bf16.mxu0 0
    %3019 = vmatpush1.bf16.msra.mxu0 %v3001
    %3020 = vmatprep.subr.bf16.mxu0 0
    %3021 = vmatpush1.bf16.msra.mxu0 %v3002
    %3022 = vmatprep.subr.bf16.mxu0 0
    %3023 = vmatpush1.bf16.msra.mxu0 %v3003
    %3024 = vmatprep.subr.bf16.mxu0 0
    %3025 = vmatpush1.bf16.msra.mxu0 %v3004
    %3026 = vmatprep.subr.bf16.mxu0 0
    %3027 = vmatpush1.bf16.msra.mxu0 %v3005
    %3028 = vmatprep.subr.bf16.mxu0 0
    %3029 = vmatpush1.bf16.msra.mxu0 %v3006
    %3030 = vmatprep.subr.bf16.mxu0 0
    %3031 = vmatpush1.bf16.msra.mxu0 %v3007
    %3032 = vmatprep.subr.bf16.mxu0 0
    %3033 = vmatpush1.bf16.msra.mxu0 0
    %3034 = vmatprep.subr.bf16.mxu0 0
    %3035 = vmatpush1.bf16.msra.mxu0 0
    %3036 = vmatprep.subr.bf16.mxu0 0
    %3037 = vmatpush1.bf16.msra.mxu0 0
    %3038 = vmatprep.subr.bf16.mxu0 0
    %3039 = vmatpush1.bf16.msra.mxu0 0
    %3040 = vmatprep.subr.bf16.mxu0 0
    %3041 = vmatpush1.bf16.msra.mxu0 0
    %3042 = vmatprep.subr.bf16.mxu0 0
    %3043 = vmatpush1.bf16.msra.mxu0 0
    %3044 = vmatprep.subr.bf16.mxu0 0
    %3045 = vmatpush1.bf16.msra.mxu0 0
    %3046 = vmatprep.subr.bf16.mxu0 0
    %3047 = vmatpush1.bf16.msra.mxu0 0
    %3048 = vmatprep.mubr.bf16.mxu0 0
    %3049 = vmatmul.mubr.bf16.gmra.mrb[0].mxu0 %v2942
    %v3050 = vpop.f32.mrb[0].mxu0
    %v3051 = vadd.f32 %v2966, %v3050
    %v3052 = vpop.f32.mrb[0].mxu0
    %v3053 = vpop.f32.mrb[0].mxu0
    %v3054 = vadd.f32 %v2966, %v3053
    %v3055 = vpop.f32.mrb[0].mxu0
    %3056 = vdwg.mxu0
    %v3057 = vadd.f32 %v2852, %v3051
    %v3058 = vadd.f32 %v2853, %v3054
    %s3059 = scalar_lea.vmem %s14, 1
    %v3060 = vld [vmem:[%s3059] sm:$0x1]
    %s3061 = scalar_lea.vmem %s15, 1
    %v3062 = vld [vmem:[%s3061] sm:$0x1]
    %v3063 = vsel %vm183, %v3057, 0.0
    %3064 = vadd.xlane.f32.xlu0 %v3063
    %v3065 = vpop.xlane.xlu0 %3064
    %v3066 = vsel %vm183, %v3058, 0.0
    %3067 = vadd.xlane.f32.xlu0 %v3066
    %v3068 = vpop.xlane.xlu0 %3067
    %v3069 = vmul.f32 %v3065, %v190
    %v3070 = vmul.f32 %v3068, %v190
    %v3071 = vsub.f32 %v3057, %v3069
    %v3072 = vsub.f32 %v3058, %v3070
    %v3073 = vmul.f32 %v3071, %v3071
    %v3074 = vmul.f32 %v3072, %v3072
    %v3075 = vsel %vm183, %v3073, 0.0
    %3076 = vadd.xlane.f32.xlu0 %v3075
    %v3077 = vpop.xlane.xlu0 %3076
    %v3078 = vsel %vm183, %v3074, 0.0
    %3079 = vadd.xlane.f32.xlu0 %v3078
    %v3080 = vpop.xlane.xlu0 %3079
    %v3081 = vmul.f32 %v3077, %v190
    %v3082 = vmul.f32 %v3080, %v190
    %v3083 = vadd.f32 %v3081, 1e-12
    %v3084 = vadd.f32 %v3082, 1e-12
    %v3085 = vrsqrt.pop %v3083
    %v3086 = vrsqrt.pop %v3084
    %v3087 = vmul.f32 %v3071, %v3085
    %v3088 = vmul.f32 %v3072, %v3086
    %v3090 = vlaneseq
    %v3091 = vshrl.u32 %v3090, 7
    %v3092 = vsub.s32 0, %v3091
    %v3093 = vrot.slane %v3060, %v3092
    %v3095 = vmul.f32 %v3087, %v3093
    %v3096 = vmul.f32 %v3088, %v3093
    %v3098 = vlaneseq
    %v3099 = vshrl.u32 %v3098, 7
    %v3100 = vsub.s32 0, %v3099
    %v3101 = vrot.slane %v3062, %v3100
    %v3103 = vadd.f32 %v3095, %v3101
    %v3104 = vadd.f32 %v3096, %v3101
    %v3105 = vpack.c.bf16 %v3104, %v3103
    %v3106 = vld [vmem:[%s16] sm:$0xf]
    %v3107 = vld [vmem:[%s16 + $0x4] sm:$0xf]
    %v3108 = vld [vmem:[%s16 + $0x8] sm:$0xf]
    %v3109 = vld [vmem:[%s16 + $0xc] sm:$0xf]
    %v3110 = vld [vmem:[%s17] sm:$0x1]
    %v3112 = vlaneseq
    %v3113 = vshrl.u32 %v3112, 7
    %v3114 = vsub.s32 0, %v3113
    %v3115 = vrot.slane %v3110, %v3114
    %v3121 = vunpack.c.l.b16 %v3106
    %v3122 = vunpack.c.l.b16 %v3107
    %v3123 = vunpack.c.l.b16 %v3108
    %v3124 = vunpack.c.l.b16 %v3109
    %v3125 = vpack.c.b16 %v3122, %v3121
    %v3126 = vpack.c.b16 %v3124, %v3123
    %v3130 = vsel %vm183, %v3105, 0
    %3132 = vmatprep.subr.bf16.mxu0 0
    %3133 = vmatpush1.bf16.msra.mxu0 %v3125
    %3134 = vmatprep.subr.bf16.mxu0 0
    %3135 = vmatpush1.bf16.msra.mxu0 %v3126
    %3136 = vmatprep.subr.bf16.mxu0 0
    %3137 = vmatpush1.bf16.msra.mxu0 0
    %3138 = vmatprep.subr.bf16.mxu0 0
    %3139 = vmatpush1.bf16.msra.mxu0 0
    %3140 = vmatprep.subr.bf16.mxu0 0
    %3141 = vmatpush1.bf16.msra.mxu0 0
    %3142 = vmatprep.subr.bf16.mxu0 0
    %3143 = vmatpush1.bf16.msra.mxu0 0
    %3144 = vmatprep.subr.bf16.mxu0 0
    %3145 = vmatpush1.bf16.msra.mxu0 0
    %3146 = vmatprep.subr.bf16.mxu0 0
    %3147 = vmatpush1.bf16.msra.mxu0 0
    %3148 = vmatprep.subr.bf16.mxu0 0
    %3149 = vmatpush1.bf16.msra.mxu0 0
    %3150 = vmatprep.subr.bf16.mxu0 0
    %3151 = vmatpush1.bf16.msra.mxu0 0
    %3152 = vmatprep.subr.bf16.mxu0 0
    %3153 = vmatpush1.bf16.msra.mxu0 0
    %3154 = vmatprep.subr.bf16.mxu0 0
    %3155 = vmatpush1.bf16.msra.mxu0 0
    %3156 = vmatprep.subr.bf16.mxu0 0
    %3157 = vmatpush1.bf16.msra.mxu0 0
    %3158 = vmatprep.subr.bf16.mxu0 0
    %3159 = vmatpush1.bf16.msra.mxu0 0
    %3160 = vmatprep.subr.bf16.mxu0 0
    %3161 = vmatpush1.bf16.msra.mxu0 0
    %3162 = vmatprep.subr.bf16.mxu0 0
    %3163 = vmatpush1.bf16.msra.mxu0 0
    %3164 = vmatprep.mubr.bf16.mxu0 0
    %3165 = vmatmul.mubr.bf16.gmra.mrb[0].mxu0 %v3130
    %v3166 = vpop.f32.mrb[0].mxu0
    %v3167 = vadd.f32 %v3115, %v3166
    %v3168 = vpop.f32.mrb[0].mxu0
    %v3169 = vpop.f32.mrb[0].mxu0
    %v3170 = vadd.f32 %v3115, %v3169
    %v3171 = vpop.f32.mrb[0].mxu0
    %3172 = vdwg.mxu0
    %3173 = vst [vmem:[#allocation17] sm:$0xff] %v3167
    %3174 = vst [vmem:[#allocation17 + $0x8] sm:$0xff] %v3170
    // Predicated region
    $region110: #{tpu_custom_call.1} parent=1 // pred_check
      _
    $region111: #{tpu_custom_call.1} parent=1 // pred_check_branch
      %3176 = sbr.rel (0) target = $region113
    $region112: #{tpu_custom_call.1} parent=1 // pred_region
      %s3178 = ssub.s32 256, 256
      %3179 = vsyncadd [#allocation4], %s3178
      %s3180 = sshll.u32 [#allocation17], 4
      %s3181 = int_to_ptr.vmem [resolvable:$true] %s3180
      %3186 = dma.vmem_to_hbm [thread:$0]  %s3181, 256, %s18, [#allocation4], 128, 128, 8
    $region113: #{tpu_custom_call.1} parent=1 // pred_fallthru
      _
    // Predicated region
    $region114: #{tpu_custom_call.1} parent=1 // pred_check
      _
    $region115: #{tpu_custom_call.1} parent=1 // pred_check_branch
      %3188 = sbr.rel (0) target = $region117
    $region116: #{tpu_custom_call.1} parent=1 // pred_region
      %3189 = dma.done [#allocation4], 256
    $region117: #{tpu_custom_call.1} parent=1 // pred_fallthru
      _
    %3190 = vsyncpa [#allocation3], 1
    %3191 = vsyncpa [#allocation6], 1
    %3192 = vsyncpa [#allocation9], 1
    %3193 = vsyncpa [#allocation12], 1
    %3194 = vsyncpa [#allocation15], 1
    %3195 = vsyncpa [#allocation4], 1

</llo_original>
